<compile_context>
chip_gen: v7x
topology: tpu7x:2x2x1
jax: 0.10.0
libtpu: 0.0.40
codegen_flags: <defaults>
</compile_context>

<pallas_src>
import functools
import jax
import jax.numpy as jnp
from jax.experimental import pallas as pl
from jax.experimental.pallas import tpu as pltpu

PAD_ID = 0


# ----------------------------------------------------------------------------
# Phase 1: input projection (both directions), gates fused along 4H.
# ----------------------------------------------------------------------------
def _proj_kernel(x_ref, wih_ref, b_ref, xg_ref):
    # x: (R, Din) bf16, wih: (Din, 4H) bf16, b: (1, 4H) f32 -> xg: (R, 4H) bf16
    acc = jnp.dot(x_ref[...], wih_ref[...], preferred_element_type=jnp.float32)
    xg_ref[...] = (acc + b_ref[...]).astype(xg_ref.dtype)


# ----------------------------------------------------------------------------
# Phase 2: fused bidirectional recurrence, time-chunked.
# ----------------------------------------------------------------------------
def _bilstm_kernel(xg_ref, m_ref, whh_ref, y_ref, ht_ref, h_scr, c_scr):
    d = pl.program_id(0)              # 0 = forward, 1 = backward
    c = pl.program_id(1)              # time-chunk (index_map already reverses
    n_chunks = pl.num_programs(1)     # chunk order for the backward direction)

    @pl.when(c == 0)
    def _():
        h_scr[...] = jnp.zeros_like(h_scr)
        c_scr[...] = jnp.zeros_like(c_scr)

    whh = whh_ref[...]                # (H, 4H) bf16, hoisted out of the loop
    tc, _, four_h = xg_ref.shape
    hdim = four_h // 4

    def step(i, carry):
        # forward: row = i ; backward: row = tc - 1 - i   (branch-free select)
        row = i + d * (tc - 1 - 2 * i)
        xg = xg_ref[row].astype(jnp.float32)                       # (B, 4H)
        h_prev = h_scr[...]
        c_prev = c_scr[...]
        gates = xg + jnp.dot(h_prev.astype(whh.dtype), whh,
                             preferred_element_type=jnp.float32)   # (B, 4H)
        # gate order i, f, g, o packed along the lane axis
        i_g = jax.nn.sigmoid(gates[:, 0 * hdim:1 * hdim])
        f_g = jax.nn.sigmoid(gates[:, 1 * hdim:2 * hdim])
        g_g = jnp.tanh(gates[:, 2 * hdim:3 * hdim])
        o_g = jax.nn.sigmoid(gates[:, 3 * hdim:4 * hdim])
        c_new = f_g * c_prev + i_g * g_g
        h_new = o_g * jnp.tanh(c_new)
        keep = m_ref[row] > 0.0                                    # (B, 1)
        h_scr[...] = jnp.where(keep, h_new, h_prev)                # freeze at pad
        c_scr[...] = jnp.where(keep, c_new, c_prev)
        y_ref[row] = jnp.where(keep, h_new, 0.0).astype(y_ref.dtype)
        return carry

    jax.lax.fori_loop(0, tc, step, 0, unroll=(tc <= 16))

    @pl.when(c == n_chunks - 1)
    def _():
        ht_ref[...] = h_scr[...].astype(ht_ref.dtype)


# ----------------------------------------------------------------------------
# One bidirectional layer = one projection call + one recurrence call.
# ----------------------------------------------------------------------------
def _lstm_layer_bidir(x_tbf, valid_tb1, wih, whh, bias, *, time_chunk=256):
    """x_tbf: (T, B, Din) f32; valid_tb1: (T, B, 1) f32 (1.0 where t < seq_len)
    wih: (2, Din, 4H), whh: (2, H, 4H), bias: (2, 1, 4H)  [dir-major, gates ifgo]
    returns y: (2, T, B, H) f32, ht: (2, B, H) f32."""
    T, B, Din = x_tbf.shape
    H = whh.shape[1]
    tc = min(time_chunk, T)
    nc = pl.cdiv(T, tc)
    T_pad = nc * tc
    if T_pad != T:
        x_tbf = jnp.pad(x_tbf, ((0, T_pad - T), (0, 0), (0, 0)))
        valid_tb1 = jnp.pad(valid_tb1, ((0, T_pad - T), (0, 0), (0, 0)))

    # bf16 weights/activations at the pallas_call boundary, f32 state inside.
    x2 = x_tbf.reshape(T_pad * B, Din).astype(jnp.bfloat16)
    wih_bf = wih.astype(jnp.bfloat16)
    whh_bf = whh.astype(jnp.bfloat16)

    # ---- phase 1: X @ W_ih + b, both directions, fully parallel ----
    # (for very long sequences, add a row-chunk grid axis; one block is fine here)
    xg2 = pl.pallas_call(
        _proj_kernel,
        out_shape=jax.ShapeDtypeStruct((2, T_pad * B, 4 * H), jnp.bfloat16),
        grid=(2,),
        in_specs=[
            pl.BlockSpec((T_pad * B, Din), lambda d: (0, 0)),
            pl.BlockSpec((None, Din, 4 * H), lambda d: (d, 0, 0)),
            pl.BlockSpec((None, 1, 4 * H), lambda d: (d, 0, 0)),
        ],
        out_specs=pl.BlockSpec((None, T_pad * B, 4 * H), lambda d: (d, 0, 0)),
        compiler_params=pltpu.CompilerParams(
            dimension_semantics=("parallel",)),
    )(x2, wih_bf, bias)
    xg = xg2.reshape(2, T_pad, B, 4 * H)

    # ---- phase 2: serial recurrence over time chunks ----
    def time_idx(d, c):
        # forward (d=0): chunk c ; backward (d=1): chunk nc-1-c
        return c * (1 - d) + (nc - 1 - c) * d

    # NOTE: at large H, budget VMEM explicitly (W_hh + xg/y chunks + state) and
    # set pltpu.CompilerParams(vmem_limit_bytes=...) (v7x has 64 MiB, not 128).
    y, ht = pl.pallas_call(
        _bilstm_kernel,
        out_shape=(jax.ShapeDtypeStruct((2, T_pad, B, H), jnp.float32),
                   jax.ShapeDtypeStruct((2, B, H), jnp.float32)),
        grid=(2, nc),
        in_specs=[
            pl.BlockSpec((None, tc, B, 4 * H),
                         lambda d, c: (d, time_idx(d, c), 0, 0)),
            pl.BlockSpec((tc, B, 1),
                         lambda d, c: (time_idx(d, c), 0, 0)),
            pl.BlockSpec((None, H, 4 * H), lambda d, c: (d, 0, 0)),
        ],
        out_specs=(
            pl.BlockSpec((None, tc, B, H),
                         lambda d, c: (d, time_idx(d, c), 0, 0)),
            pl.BlockSpec((None, B, H), lambda d, c: (d, 0, 0)),
        ),
        scratch_shapes=[pltpu.VMEM((B, H), jnp.float32),
                        pltpu.VMEM((B, H), jnp.float32)],
        compiler_params=pltpu.CompilerParams(
            dimension_semantics=("parallel", "arbitrary")),
    )(xg, valid_tb1, whh_bf)

    return y[:, :T], ht


# ----------------------------------------------------------------------------
# Multi-layer bidirectional LSTM (glue in plain JAX)
# ----------------------------------------------------------------------------
def my_lstm_forward(rnn_inputs_btf, seq_lens, params, num_layers, hidden_dim):
    """rnn_inputs_btf: (B, T, input_size), batch_first like the PyTorch module.
    Returns (rnn_outputs (B, T, 2H), ht (num_layers*2, B, H))."""
    B, T, _ = rnn_inputs_btf.shape
    x_tbf = jnp.transpose(rnn_inputs_btf, (1, 0, 2))                   # (T, B, F)
    t_idx = jnp.arange(T, dtype=jnp.int32)[:, None]                    # (T, 1)
    valid = (t_idx < seq_lens[None, :]).astype(jnp.float32)[..., None]  # (T, B, 1)

    layer_in = x_tbf
    hts = []
    for l in range(num_layers):
        wih, whh, bias = params[l]
        y, ht = _lstm_layer_bidir(layer_in, valid, wih, whh, bias)
        layer_in = jnp.concatenate([y[0], y[1]], axis=-1)              # (T, B, 2H)
        hts.append(ht)
        # TODO(synk): inter-layer dropout (module default dropout=0) not implemented.
    rnn_outputs = jnp.transpose(layer_in, (1, 0, 2))                   # (B, T, 2H)
    ht_all = jnp.concatenate(hts, axis=0)                              # (2L, B, H)
    return rnn_outputs, ht_all


def init_params(key, input_size, hidden_dim, num_layers):
    """Per layer: wih (2, in_dim, 4H), whh (2, H, 4H), bias (2, 1, 4H).
    Leading axis = direction (0 fwd, 1 bwd); gates i,f,g,o packed along 4H.
    bias = b_ih + b_hh (PyTorch's two-bias parameterization)."""
    k = 1.0 / (hidden_dim ** 0.5)
    H = hidden_dim
    params = []
    for l in range(num_layers):
        in_dim = input_size if l == 0 else 2 * H
        key, k1, k2, k3, k4 = jax.random.split(key, 5)
        wih = jax.random.uniform(k1, (2, in_dim, 4 * H), jnp.float32, -k, k)
        whh = jax.random.uniform(k2, (2, H, 4 * H), jnp.float32, -k, k)
        b_ih = jax.random.uniform(k3, (2, 1, 4 * H), jnp.float32, -k, k)
        b_hh = jax.random.uniform(k4, (2, 1, 4 * H), jnp.float32, -k, k)
        params.append((wih, whh, b_ih + b_hh))
    return params


def _reference_forward(rnn_inputs_btf, seq_lens, params):
    """Pure-JAX (non-Pallas) reference using the same bf16 rounding, for checking."""
    B, T, _ = rnn_inputs_btf.shape
    x = jnp.transpose(rnn_inputs_btf, (1, 0, 2))
    valid = (jnp.arange(T)[:, None] < seq_lens[None, :])               # (T, B) bool
    layer_in = x
    hts = []
    for wih, whh, bias in params:
        H = whh.shape[1]
        outs = []
        for d in range(2):
            w_ih = wih[d].astype(jnp.bfloat16)
            w_hh = whh[d].astype(jnp.bfloat16)
            xg = (jnp.dot(layer_in.reshape(T * B, -1).astype(jnp.bfloat16), w_ih,
                          preferred_element_type=jnp.float32)
                  + bias[d]).astype(jnp.bfloat16).reshape(T, B, 4 * H)
            h = jnp.zeros((B, H), jnp.float32)
            c = jnp.zeros((B, H), jnp.float32)
            ys = [None] * T
            order = range(T) if d == 0 else range(T - 1, -1, -1)
            for t in order:
                gates = xg[t].astype(jnp.float32) + jnp.dot(
                    h.astype(jnp.bfloat16), w_hh, preferred_element_type=jnp.float32)
                i_g = jax.nn.sigmoid(gates[:, :H])
                f_g = jax.nn.sigmoid(gates[:, H:2 * H])
                g_g = jnp.tanh(gates[:, 2 * H:3 * H])
                o_g = jax.nn.sigmoid(gates[:, 3 * H:])
                c_new = f_g * c + i_g * g_g
                h_new = o_g * jnp.tanh(c_new)
                keep = valid[t][:, None]
                h = jnp.where(keep, h_new, h)
                c = jnp.where(keep, c_new, c)
                ys[t] = jnp.where(keep, h_new, 0.0)
            outs.append(jnp.stack(ys, 0))
            hts.append(h)
        layer_in = jnp.concatenate(outs, -1)
    return jnp.transpose(layer_in, (1, 0, 2)), jnp.stack(hts, 0)


if __name__ == "__main__":
    B, T = 2, 8
    input_size, hidden_dim, num_layers = 16, 32, 2

    key = jax.random.PRNGKey(0)
    key, kx = jax.random.split(key)
    rnn_inputs = jax.random.normal(kx, (B, T, input_size), jnp.float32)

    # masks: (B, T).  seq_lens[b] = #positions equal to PAD_ID (as in MyLSTM).
    # Lengths descending (pack_padded_sequence enforce_sorted=True default).
    lengths = [8, 5]
    masks = jnp.stack([
        jnp.where(jnp.arange(T) < L, PAD_ID, 1).astype(jnp.int32)
        for L in lengths
    ], axis=0)
    seq_lens = jnp.sum((masks == PAD_ID).astype(jnp.int32), axis=1)    # (B,)

    params = init_params(key, input_size, hidden_dim, num_layers)

    fwd = jax.jit(functools.partial(my_lstm_forward, num_layers=num_layers,
                                    hidden_dim=hidden_dim))
    rnn_outputs, ht = fwd(rnn_inputs, seq_lens, params)
    jax.block_until_ready((rnn_outputs, ht))

    # pad_packed_sequence trims to the longest length in the batch.
    max_len = int(max(lengths))
    rnn_outputs = rnn_outputs[:, :max_len]

    assert rnn_outputs.shape == (B, max_len, 2 * hidden_dim)
    assert ht.shape == (num_layers * 2, B, hidden_dim)

    # Numeric check against a pure-JAX reference with the same bf16 rounding.
    ref_out, ref_ht = _reference_forward(rnn_inputs, seq_lens, params)
    err_out = float(jnp.max(jnp.abs(rnn_outputs - ref_out[:, :max_len])))
    err_ht = float(jnp.max(jnp.abs(ht - ref_ht)))
    assert err_out < 1e-2 and err_ht < 1e-2, (err_out, err_ht)

    print("KERNEL_OK")
</pallas_src>

<mosaic_0001>
module attributes {stable_mosaic.version = 11 : i64} {
  func.func @_proj_kernel(%arg0: i32, %arg1: memref<16x16xbf16, #tpu.memory_space<vmem>>, %arg2: memref<1x16x128xbf16, #tpu.memory_space<vmem>>, %arg3: memref<1x1x128xf32, #tpu.memory_space<vmem>>, %arg4: memref<1x16x128xbf16, #tpu.memory_space<vmem>>) attributes {dimension_semantics = [#tpu.dimension_semantics<parallel>], iteration_bounds = array<i64: 2>, scalar_prefetch = 0 : i64, scratch_operands = 0 : i64, tpu.core_type = #tpu.core_type<tc>, window_params = [{pipeline_mode = #tpu.pipeline_mode<synchronous>, transform_indices = @transform_0, window_bounds = array<i64: 16, 16>}, {transform_indices = @transform_1, window_bounds = array<i64: 1, 16, 128>}, {transform_indices = @transform_2, window_bounds = array<i64: 1, 1, 128>}, {transform_indices = @transform_3, window_bounds = array<i64: 1, 16, 128>}]} {
    %c0 = arith.constant 0 : index
    %c0_0 = arith.constant 0 : index
    %0 = vector.load %arg1[%c0, %c0_0] : memref<16x16xbf16, #tpu.memory_space<vmem>>, vector<16x16xbf16>
    %c0_1 = arith.constant 0 : index
    %c0_2 = arith.constant 0 : index
    %c0_3 = arith.constant 0 : index
    %1 = vector.load %arg2[%c0_1, %c0_2, %c0_3] : memref<1x16x128xbf16, #tpu.memory_space<vmem>>, vector<1x16x128xbf16>
    %2 = vector.shape_cast %1 : vector<1x16x128xbf16> to vector<16x128xbf16>
    %cst = arith.constant dense<0.000000e+00> : vector<16x128xf32>
    %3 = tpu.matmul %0, %2, %cst {dimension_numbers = #tpu.dot_dimension_numbers<[1], [0], [0], [1], [0, 0, 1, 1], [], []>} : vector<16x16xbf16>, vector<16x128xbf16>, vector<16x128xf32> -> vector<16x128xf32>
    %c0_4 = arith.constant 0 : index
    %c0_5 = arith.constant 0 : index
    %c0_6 = arith.constant 0 : index
    %4 = vector.load %arg3[%c0_4, %c0_5, %c0_6] : memref<1x1x128xf32, #tpu.memory_space<vmem>>, vector<1x1x128xf32>
    %5 = vector.shape_cast %4 : vector<1x1x128xf32> to vector<1x128xf32>
    %6 = vector.broadcast %5 : vector<1x128xf32> to vector<16x128xf32>
    %7 = arith.addf %3, %6 : vector<16x128xf32>
    %8 = arith.truncf %7 : vector<16x128xf32> to vector<16x128xbf16>
    %c0_7 = arith.constant 0 : index
    %c0_8 = arith.constant 0 : index
    %c0_9 = arith.constant 0 : index
    %9 = vector.load %arg4[%c0_7, %c0_8, %c0_9] : memref<1x16x128xbf16, #tpu.memory_space<vmem>>, vector<1x16x128xbf16>
    %10 = vector.shape_cast %9 : vector<1x16x128xbf16> to vector<16x128xbf16>
    %11 = vector.shape_cast %8 : vector<16x128xbf16> to vector<1x16x128xbf16>
    tpu.vector_store %arg4[%c0_7, %c0_8, %c0_9], %11 {strides = array<i32>} : memref<1x16x128xbf16, #tpu.memory_space<vmem>>, vector<1x16x128xbf16>,
    return
  }
  func.func @transform_0(%arg0: i32) -> (i32, i32) {
    %c0_i32 = arith.constant 0 : i32
    %c0_i32_0 = arith.constant 0 : i32
    %c0_i32_1 = arith.constant 0 : i32
    return %c0_i32, %c0_i32_0 : i32, i32
  }
  func.func @transform_1(%arg0: i32) -> (i32, i32, i32) {
    %c0_i32 = arith.constant 0 : i32
    %c0_i32_0 = arith.constant 0 : i32
    %c0_i32_1 = arith.constant 0 : i32
    return %arg0, %c0_i32, %c0_i32_0 : i32, i32, i32
  }
  func.func @transform_2(%arg0: i32) -> (i32, i32, i32) {
    %c0_i32 = arith.constant 0 : i32
    %c0_i32_0 = arith.constant 0 : i32
    %c0_i32_1 = arith.constant 0 : i32
    return %arg0, %c0_i32, %c0_i32_0 : i32, i32, i32
  }
  func.func @transform_3(%arg0: i32) -> (i32, i32, i32) {
    %c0_i32 = arith.constant 0 : i32
    %c0_i32_0 = arith.constant 0 : i32
    %c0_i32_1 = arith.constant 0 : i32
    return %arg0, %c0_i32, %c0_i32_0 : i32, i32, i32
  }
}

module attributes {stable_mosaic.version = 11 : i64} {
  func.func @_bilstm_kernel(%arg0: i32, %arg1: i32, %arg2: memref<1x8x2x128xbf16, #tpu.memory_space<vmem>>, %arg3: memref<8x2x1xf32, #tpu.memory_space<vmem>>, %arg4: memref<1x32x128xbf16, #tpu.memory_space<vmem>>, %arg5: memref<1x8x2x32xf32, #tpu.memory_space<vmem>>, %arg6: memref<1x2x32xf32, #tpu.memory_space<vmem>>, %arg7: memref<2x32xf32, #tpu.memory_space<vmem>>, %arg8: memref<2x32xf32, #tpu.memory_space<vmem>>) attributes {dimension_semantics = [#tpu.dimension_semantics<parallel>, #tpu.dimension_semantics<arbitrary>], iteration_bounds = array<i64: 2, 1>, scalar_prefetch = 0 : i64, scratch_operands = 2 : i64, tpu.core_type = #tpu.core_type<tc>, window_params = [{transform_indices = @transform_0, window_bounds = array<i64: 1, 8, 2, 128>}, {transform_indices = @transform_1, window_bounds = array<i64: 8, 2, 1>}, {transform_indices = @transform_2, window_bounds = array<i64: 1, 32, 128>}, {transform_indices = @transform_3, window_bounds = array<i64: 1, 8, 2, 32>}, {transform_indices = @transform_4, window_bounds = array<i64: 1, 2, 32>}]} {
    %c0_i32 = arith.constant 0 : i32
    %0 = arith.cmpi eq, %arg1, %c0_i32 : i32
    %1 = arith.extui %0 : i1 to i32
    %c0_i32_0 = arith.constant 0 : i32
    %2 = arith.cmpi ne, %1, %c0_i32_0 : i32
    scf.if %2 {
      %cst_197 = arith.constant 0.000000e+00 : f32
      %480 = vector.broadcast %cst_197 : f32 to vector<2x32xf32>
      %c0_198 = arith.constant 0 : index
      %c0_199 = arith.constant 0 : index
      %481 = vector.load %arg7[%c0_198, %c0_199] : memref<2x32xf32, #tpu.memory_space<vmem>>, vector<2x32xf32>
      tpu.vector_store %arg7[%c0_198, %c0_199], %480 {strides = array<i32>} : memref<2x32xf32, #tpu.memory_space<vmem>>, vector<2x32xf32>,
      %cst_200 = arith.constant 0.000000e+00 : f32
      %482 = vector.broadcast %cst_200 : f32 to vector<2x32xf32>
      %c0_201 = arith.constant 0 : index
      %c0_202 = arith.constant 0 : index
      %483 = vector.load %arg8[%c0_201, %c0_202] : memref<2x32xf32, #tpu.memory_space<vmem>>, vector<2x32xf32>
      tpu.vector_store %arg8[%c0_201, %c0_202], %482 {strides = array<i32>} : memref<2x32xf32, #tpu.memory_space<vmem>>, vector<2x32xf32>,
    } else {
    }
    %c0 = arith.constant 0 : index
    %c0_1 = arith.constant 0 : index
    %c0_2 = arith.constant 0 : index
    %3 = vector.load %arg4[%c0, %c0_1, %c0_2] : memref<1x32x128xbf16, #tpu.memory_space<vmem>>, vector<1x32x128xbf16>
    %4 = vector.shape_cast %3 : vector<1x32x128xbf16> to vector<32x128xbf16>
    %c0_i32_3 = arith.constant 0 : i32
    %c2_i32 = arith.constant 2 : i32
    %5 = arith.muli %c2_i32, %c0_i32_3 : i32
    %c7_i32 = arith.constant 7 : i32
    %6 = arith.subi %c7_i32, %5 : i32
    %7 = arith.muli %arg0, %6 : i32
    %8 = arith.addi %c0_i32_3, %7 : i32
    %c0_4 = arith.constant 0 : index
    %9 = arith.index_cast %8 : i32 to index
    %c0_5 = arith.constant 0 : index
    %c0_6 = arith.constant 0 : index
    %10 = vector.load %arg2[%c0_4, %9, %c0_5, %c0_6] : memref<1x8x2x128xbf16, #tpu.memory_space<vmem>>, vector<1x1x2x128xbf16>
    %11 = vector.shape_cast %10 : vector<1x1x2x128xbf16> to vector<2x128xbf16>
    %12 = arith.extf %11 : vector<2x128xbf16> to vector<2x128xf32>
    %c0_7 = arith.constant 0 : index
    %c0_8 = arith.constant 0 : index
    %13 = vector.load %arg7[%c0_7, %c0_8] : memref<2x32xf32, #tpu.memory_space<vmem>>, vector<2x32xf32>
    %c0_9 = arith.constant 0 : index
    %c0_10 = arith.constant 0 : index
    %14 = vector.load %arg8[%c0_9, %c0_10] : memref<2x32xf32, #tpu.memory_space<vmem>>, vector<2x32xf32>
    %15 = arith.truncf %13 : vector<2x32xf32> to vector<2x32xbf16>
    %cst = arith.constant dense<0.000000e+00> : vector<2x128xf32>
    %16 = tpu.matmul %15, %4, %cst {dimension_numbers = #tpu.dot_dimension_numbers<[1], [0], [0], [1], [0, 0, 1, 1], [], []>} : vector<2x32xbf16>, vector<32x128xbf16>, vector<2x128xf32> -> vector<2x128xf32>
    %17 = arith.addf %12, %16 : vector<2x128xf32>
    %18 = vector.extract_strided_slice %17 {offsets = [0, 0], sizes = [2, 32], strides = [1, 1]} : vector<2x128xf32> to vector<2x32xf32>
    %19 = arith.negf %18 : vector<2x32xf32>
    %20 = math.exp %19 : vector<2x32xf32>
    %cst_11 = arith.constant 1.000000e+00 : f32
    %21 = vector.broadcast %cst_11 : f32 to vector<2x32xf32>
    %22 = arith.addf %21, %20 : vector<2x32xf32>
    %23 = arith.divf %21, %22 : vector<2x32xf32>
    %24 = vector.extract_strided_slice %17 {offsets = [0, 32], sizes = [2, 32], strides = [1, 1]} : vector<2x128xf32> to vector<2x32xf32>
    %25 = arith.negf %24 : vector<2x32xf32>
    %26 = math.exp %25 : vector<2x32xf32>
    %cst_12 = arith.constant 1.000000e+00 : f32
    %27 = vector.broadcast %cst_12 : f32 to vector<2x32xf32>
    %28 = arith.addf %27, %26 : vector<2x32xf32>
    %29 = arith.divf %27, %28 : vector<2x32xf32>
    %30 = vector.extract_strided_slice %17 {offsets = [0, 64], sizes = [2, 32], strides = [1, 1]} : vector<2x128xf32> to vector<2x32xf32>
    %31 = math.tanh %30 : vector<2x32xf32>
    %32 = vector.extract_strided_slice %17 {offsets = [0, 96], sizes = [2, 32], strides = [1, 1]} : vector<2x128xf32> to vector<2x32xf32>
    %33 = arith.negf %32 : vector<2x32xf32>
    %34 = math.exp %33 : vector<2x32xf32>
    %cst_13 = arith.constant 1.000000e+00 : f32
    %35 = vector.broadcast %cst_13 : f32 to vector<2x32xf32>
    %36 = arith.addf %35, %34 : vector<2x32xf32>
    %37 = arith.divf %35, %36 : vector<2x32xf32>
    %38 = arith.mulf %29, %14 : vector<2x32xf32>
    %39 = arith.mulf %23, %31 : vector<2x32xf32>
    %40 = arith.addf %38, %39 : vector<2x32xf32>
    %41 = math.tanh %40 : vector<2x32xf32>
    %42 = arith.mulf %37, %41 : vector<2x32xf32>
    %43 = arith.index_cast %8 : i32 to index
    %c0_14 = arith.constant 0 : index
    %c0_15 = arith.constant 0 : index
    %44 = vector.load %arg3[%43, %c0_14, %c0_15] : memref<8x2x1xf32, #tpu.memory_space<vmem>>, vector<1x2x1xf32>
    %45 = vector.shape_cast %44 : vector<1x2x1xf32> to vector<2x1xf32>
    %cst_16 = arith.constant 0.000000e+00 : f32
    %46 = vector.broadcast %cst_16 : f32 to vector<2x1xf32>
    %47 = arith.cmpf ogt, %45, %46 : vector<2x1xf32>
    %48 = vector.shape_cast %47 : vector<2x1xi1> to vector<2x1xi1>
    %49 = vector.broadcast %48 : vector<2x1xi1> to vector<2x32xi1>
    %50 = arith.select %49, %42, %13 : vector<2x32xi1>, vector<2x32xf32>
    %c0_17 = arith.constant 0 : index
    %c0_18 = arith.constant 0 : index
    %51 = vector.load %arg7[%c0_17, %c0_18] : memref<2x32xf32, #tpu.memory_space<vmem>>, vector<2x32xf32>
    tpu.vector_store %arg7[%c0_17, %c0_18], %50 {strides = array<i32>} : memref<2x32xf32, #tpu.memory_space<vmem>>, vector<2x32xf32>,
    %52 = vector.shape_cast %47 : vector<2x1xi1> to vector<2x1xi1>
    %53 = vector.broadcast %52 : vector<2x1xi1> to vector<2x32xi1>
    %54 = arith.select %53, %40, %14 : vector<2x32xi1>, vector<2x32xf32>
    %c0_19 = arith.constant 0 : index
    %c0_20 = arith.constant 0 : index
    %55 = vector.load %arg8[%c0_19, %c0_20] : memref<2x32xf32, #tpu.memory_space<vmem>>, vector<2x32xf32>
    tpu.vector_store %arg8[%c0_19, %c0_20], %54 {strides = array<i32>} : memref<2x32xf32, #tpu.memory_space<vmem>>, vector<2x32xf32>,
    %cst_21 = arith.constant 0.000000e+00 : f32
    %56 = vector.shape_cast %47 : vector<2x1xi1> to vector<2x1xi1>
    %57 = vector.broadcast %56 : vector<2x1xi1> to vector<2x32xi1>
    %58 = vector.broadcast %cst_21 : f32 to vector<2x32xf32>
    %59 = arith.select %57, %42, %58 : vector<2x32xi1>, vector<2x32xf32>
    %c0_22 = arith.constant 0 : index
    %60 = arith.index_cast %8 : i32 to index
    %c0_23 = arith.constant 0 : index
    %c0_24 = arith.constant 0 : index
    %61 = vector.load %arg5[%c0_22, %60, %c0_23, %c0_24] : memref<1x8x2x32xf32, #tpu.memory_space<vmem>>, vector<1x1x2x32xf32>
    %62 = vector.shape_cast %61 : vector<1x1x2x32xf32> to vector<2x32xf32>
    %63 = vector.shape_cast %59 : vector<2x32xf32> to vector<1x1x2x32xf32>
    tpu.vector_store %arg5[%c0_22, %60, %c0_23, %c0_24], %63 {strides = array<i32>} : memref<1x8x2x32xf32, #tpu.memory_space<vmem>>, vector<1x1x2x32xf32>,
    %c1_i32 = arith.constant 1 : i32
    %c2_i32_25 = arith.constant 2 : i32
    %64 = arith.muli %c2_i32_25, %c1_i32 : i32
    %c7_i32_26 = arith.constant 7 : i32
    %65 = arith.subi %c7_i32_26, %64 : i32
    %66 = arith.muli %arg0, %65 : i32
    %67 = arith.addi %c1_i32, %66 : i32
    %c0_27 = arith.constant 0 : index
    %68 = arith.index_cast %67 : i32 to index
    %c0_28 = arith.constant 0 : index
    %c0_29 = arith.constant 0 : index
    %69 = vector.load %arg2[%c0_27, %68, %c0_28, %c0_29] : memref<1x8x2x128xbf16, #tpu.memory_space<vmem>>, vector<1x1x2x128xbf16>
    %70 = vector.shape_cast %69 : vector<1x1x2x128xbf16> to vector<2x128xbf16>
    %71 = arith.extf %70 : vector<2x128xbf16> to vector<2x128xf32>
    %c0_30 = arith.constant 0 : index
    %c0_31 = arith.constant 0 : index
    %72 = vector.load %arg7[%c0_30, %c0_31] : memref<2x32xf32, #tpu.memory_space<vmem>>, vector<2x32xf32>
    %c0_32 = arith.constant 0 : index
    %c0_33 = arith.constant 0 : index
    %73 = vector.load %arg8[%c0_32, %c0_33] : memref<2x32xf32, #tpu.memory_space<vmem>>, vector<2x32xf32>
    %74 = arith.truncf %72 : vector<2x32xf32> to vector<2x32xbf16>
    %cst_34 = arith.constant dense<0.000000e+00> : vector<2x128xf32>
    %75 = tpu.matmul %74, %4, %cst_34 {dimension_numbers = #tpu.dot_dimension_numbers<[1], [0], [0], [1], [0, 0, 1, 1], [], []>} : vector<2x32xbf16>, vector<32x128xbf16>, vector<2x128xf32> -> vector<2x128xf32>
    %76 = arith.addf %71, %75 : vector<2x128xf32>
    %77 = vector.extract_strided_slice %76 {offsets = [0, 0], sizes = [2, 32], strides = [1, 1]} : vector<2x128xf32> to vector<2x32xf32>
    %78 = arith.negf %77 : vector<2x32xf32>
    %79 = math.exp %78 : vector<2x32xf32>
    %cst_35 = arith.constant 1.000000e+00 : f32
    %80 = vector.broadcast %cst_35 : f32 to vector<2x32xf32>
    %81 = arith.addf %80, %79 : vector<2x32xf32>
    %82 = arith.divf %80, %81 : vector<2x32xf32>
    %83 = vector.extract_strided_slice %76 {offsets = [0, 32], sizes = [2, 32], strides = [1, 1]} : vector<2x128xf32> to vector<2x32xf32>
    %84 = arith.negf %83 : vector<2x32xf32>
    %85 = math.exp %84 : vector<2x32xf32>
    %cst_36 = arith.constant 1.000000e+00 : f32
    %86 = vector.broadcast %cst_36 : f32 to vector<2x32xf32>
    %87 = arith.addf %86, %85 : vector<2x32xf32>
    %88 = arith.divf %86, %87 : vector<2x32xf32>
    %89 = vector.extract_strided_slice %76 {offsets = [0, 64], sizes = [2, 32], strides = [1, 1]} : vector<2x128xf32> to vector<2x32xf32>
    %90 = math.tanh %89 : vector<2x32xf32>
    %91 = vector.extract_strided_slice %76 {offsets = [0, 96], sizes = [2, 32], strides = [1, 1]} : vector<2x128xf32> to vector<2x32xf32>
    %92 = arith.negf %91 : vector<2x32xf32>
    %93 = math.exp %92 : vector<2x32xf32>
    %cst_37 = arith.constant 1.000000e+00 : f32
    %94 = vector.broadcast %cst_37 : f32 to vector<2x32xf32>
    %95 = arith.addf %94, %93 : vector<2x32xf32>
    %96 = arith.divf %94, %95 : vector<2x32xf32>
    %97 = arith.mulf %88, %73 : vector<2x32xf32>
    %98 = arith.mulf %82, %90 : vector<2x32xf32>
    %99 = arith.addf %97, %98 : vector<2x32xf32>
    %100 = math.tanh %99 : vector<2x32xf32>
    %101 = arith.mulf %96, %100 : vector<2x32xf32>
    %102 = arith.index_cast %67 : i32 to index
    %c0_38 = arith.constant 0 : index
    %c0_39 = arith.constant 0 : index
    %103 = vector.load %arg3[%102, %c0_38, %c0_39] : memref<8x2x1xf32, #tpu.memory_space<vmem>>, vector<1x2x1xf32>
    %104 = vector.shape_cast %103 : vector<1x2x1xf32> to vector<2x1xf32>
    %cst_40 = arith.constant 0.000000e+00 : f32
    %105 = vector.broadcast %cst_40 : f32 to vector<2x1xf32>
    %106 = arith.cmpf ogt, %104, %105 : vector<2x1xf32>
    %107 = vector.shape_cast %106 : vector<2x1xi1> to vector<2x1xi1>
    %108 = vector.broadcast %107 : vector<2x1xi1> to vector<2x32xi1>
    %109 = arith.select %108, %101, %72 : vector<2x32xi1>, vector<2x32xf32>
    %c0_41 = arith.constant 0 : index
    %c0_42 = arith.constant 0 : index
    %110 = vector.load %arg7[%c0_41, %c0_42] : memref<2x32xf32, #tpu.memory_space<vmem>>, vector<2x32xf32>
    tpu.vector_store %arg7[%c0_41, %c0_42], %109 {strides = array<i32>} : memref<2x32xf32, #tpu.memory_space<vmem>>, vector<2x32xf32>,
    %111 = vector.shape_cast %106 : vector<2x1xi1> to vector<2x1xi1>
    %112 = vector.broadcast %111 : vector<2x1xi1> to vector<2x32xi1>
    %113 = arith.select %112, %99, %73 : vector<2x32xi1>, vector<2x32xf32>
    %c0_43 = arith.constant 0 : index
    %c0_44 = arith.constant 0 : index
    %114 = vector.load %arg8[%c0_43, %c0_44] : memref<2x32xf32, #tpu.memory_space<vmem>>, vector<2x32xf32>
    tpu.vector_store %arg8[%c0_43, %c0_44], %113 {strides = array<i32>} : memref<2x32xf32, #tpu.memory_space<vmem>>, vector<2x32xf32>,
    %cst_45 = arith.constant 0.000000e+00 : f32
    %115 = vector.shape_cast %106 : vector<2x1xi1> to vector<2x1xi1>
    %116 = vector.broadcast %115 : vector<2x1xi1> to vector<2x32xi1>
    %117 = vector.broadcast %cst_45 : f32 to vector<2x32xf32>
    %118 = arith.select %116, %101, %117 : vector<2x32xi1>, vector<2x32xf32>
    %c0_46 = arith.constant 0 : index
    %119 = arith.index_cast %67 : i32 to index
    %c0_47 = arith.constant 0 : index
    %c0_48 = arith.constant 0 : index
    %120 = vector.load %arg5[%c0_46, %119, %c0_47, %c0_48] : memref<1x8x2x32xf32, #tpu.memory_space<vmem>>, vector<1x1x2x32xf32>
    %121 = vector.shape_cast %120 : vector<1x1x2x32xf32> to vector<2x32xf32>
    %122 = vector.shape_cast %118 : vector<2x32xf32> to vector<1x1x2x32xf32>
    tpu.vector_store %arg5[%c0_46, %119, %c0_47, %c0_48], %122 {strides = array<i32>} : memref<1x8x2x32xf32, #tpu.memory_space<vmem>>, vector<1x1x2x32xf32>,
    %c2_i32_49 = arith.constant 2 : i32
    %c2_i32_50 = arith.constant 2 : i32
    %123 = arith.muli %c2_i32_50, %c2_i32_49 : i32
    %c7_i32_51 = arith.constant 7 : i32
    %124 = arith.subi %c7_i32_51, %123 : i32
    %125 = arith.muli %arg0, %124 : i32
    %126 = arith.addi %c2_i32_49, %125 : i32
    %c0_52 = arith.constant 0 : index
    %127 = arith.index_cast %126 : i32 to index
    %c0_53 = arith.constant 0 : index
    %c0_54 = arith.constant 0 : index
    %128 = vector.load %arg2[%c0_52, %127, %c0_53, %c0_54] : memref<1x8x2x128xbf16, #tpu.memory_space<vmem>>, vector<1x1x2x128xbf16>
    %129 = vector.shape_cast %128 : vector<1x1x2x128xbf16> to vector<2x128xbf16>
    %130 = arith.extf %129 : vector<2x128xbf16> to vector<2x128xf32>
    %c0_55 = arith.constant 0 : index
    %c0_56 = arith.constant 0 : index
    %131 = vector.load %arg7[%c0_55, %c0_56] : memref<2x32xf32, #tpu.memory_space<vmem>>, vector<2x32xf32>
    %c0_57 = arith.constant 0 : index
    %c0_58 = arith.constant 0 : index
    %132 = vector.load %arg8[%c0_57, %c0_58] : memref<2x32xf32, #tpu.memory_space<vmem>>, vector<2x32xf32>
    %133 = arith.truncf %131 : vector<2x32xf32> to vector<2x32xbf16>
    %cst_59 = arith.constant dense<0.000000e+00> : vector<2x128xf32>
    %134 = tpu.matmul %133, %4, %cst_59 {dimension_numbers = #tpu.dot_dimension_numbers<[1], [0], [0], [1], [0, 0, 1, 1], [], []>} : vector<2x32xbf16>, vector<32x128xbf16>, vector<2x128xf32> -> vector<2x128xf32>
    %135 = arith.addf %130, %134 : vector<2x128xf32>
    %136 = vector.extract_strided_slice %135 {offsets = [0, 0], sizes = [2, 32], strides = [1, 1]} : vector<2x128xf32> to vector<2x32xf32>
    %137 = arith.negf %136 : vector<2x32xf32>
    %138 = math.exp %137 : vector<2x32xf32>
    %cst_60 = arith.constant 1.000000e+00 : f32
    %139 = vector.broadcast %cst_60 : f32 to vector<2x32xf32>
    %140 = arith.addf %139, %138 : vector<2x32xf32>
    %141 = arith.divf %139, %140 : vector<2x32xf32>
    %142 = vector.extract_strided_slice %135 {offsets = [0, 32], sizes = [2, 32], strides = [1, 1]} : vector<2x128xf32> to vector<2x32xf32>
    %143 = arith.negf %142 : vector<2x32xf32>
    %144 = math.exp %143 : vector<2x32xf32>
    %cst_61 = arith.constant 1.000000e+00 : f32
    %145 = vector.broadcast %cst_61 : f32 to vector<2x32xf32>
    %146 = arith.addf %145, %144 : vector<2x32xf32>
    %147 = arith.divf %145, %146 : vector<2x32xf32>
    %148 = vector.extract_strided_slice %135 {offsets = [0, 64], sizes = [2, 32], strides = [1, 1]} : vector<2x128xf32> to vector<2x32xf32>
    %149 = math.tanh %148 : vector<2x32xf32>
    %150 = vector.extract_strided_slice %135 {offsets = [0, 96], sizes = [2, 32], strides = [1, 1]} : vector<2x128xf32> to vector<2x32xf32>
    %151 = arith.negf %150 : vector<2x32xf32>
    %152 = math.exp %151 : vector<2x32xf32>
    %cst_62 = arith.constant 1.000000e+00 : f32
    %153 = vector.broadcast %cst_62 : f32 to vector<2x32xf32>
    %154 = arith.addf %153, %152 : vector<2x32xf32>
    %155 = arith.divf %153, %154 : vector<2x32xf32>
    %156 = arith.mulf %147, %132 : vector<2x32xf32>
    %157 = arith.mulf %141, %149 : vector<2x32xf32>
    %158 = arith.addf %156, %157 : vector<2x32xf32>
    %159 = math.tanh %158 : vector<2x32xf32>
    %160 = arith.mulf %155, %159 : vector<2x32xf32>
    %161 = arith.index_cast %126 : i32 to index
    %c0_63 = arith.constant 0 : index
    %c0_64 = arith.constant 0 : index
    %162 = vector.load %arg3[%161, %c0_63, %c0_64] : memref<8x2x1xf32, #tpu.memory_space<vmem>>, vector<1x2x1xf32>
    %163 = vector.shape_cast %162 : vector<1x2x1xf32> to vector<2x1xf32>
    %cst_65 = arith.constant 0.000000e+00 : f32
    %164 = vector.broadcast %cst_65 : f32 to vector<2x1xf32>
    %165 = arith.cmpf ogt, %163, %164 : vector<2x1xf32>
    %166 = vector.shape_cast %165 : vector<2x1xi1> to vector<2x1xi1>
    %167 = vector.broadcast %166 : vector<2x1xi1> to vector<2x32xi1>
    %168 = arith.select %167, %160, %131 : vector<2x32xi1>, vector<2x32xf32>
    %c0_66 = arith.constant 0 : index
    %c0_67 = arith.constant 0 : index
    %169 = vector.load %arg7[%c0_66, %c0_67] : memref<2x32xf32, #tpu.memory_space<vmem>>, vector<2x32xf32>
    tpu.vector_store %arg7[%c0_66, %c0_67], %168 {strides = array<i32>} : memref<2x32xf32, #tpu.memory_space<vmem>>, vector<2x32xf32>,
    %170 = vector.shape_cast %165 : vector<2x1xi1> to vector<2x1xi1>
    %171 = vector.broadcast %170 : vector<2x1xi1> to vector<2x32xi1>
    %172 = arith.select %171, %158, %132 : vector<2x32xi1>, vector<2x32xf32>
    %c0_68 = arith.constant 0 : index
    %c0_69 = arith.constant 0 : index
    %173 = vector.load %arg8[%c0_68, %c0_69] : memref<2x32xf32, #tpu.memory_space<vmem>>, vector<2x32xf32>
    tpu.vector_store %arg8[%c0_68, %c0_69], %172 {strides = array<i32>} : memref<2x32xf32, #tpu.memory_space<vmem>>, vector<2x32xf32>,
    %cst_70 = arith.constant 0.000000e+00 : f32
    %174 = vector.shape_cast %165 : vector<2x1xi1> to vector<2x1xi1>
    %175 = vector.broadcast %174 : vector<2x1xi1> to vector<2x32xi1>
    %176 = vector.broadcast %cst_70 : f32 to vector<2x32xf32>
    %177 = arith.select %175, %160, %176 : vector<2x32xi1>, vector<2x32xf32>
    %c0_71 = arith.constant 0 : index
    %178 = arith.index_cast %126 : i32 to index
    %c0_72 = arith.constant 0 : index
    %c0_73 = arith.constant 0 : index
    %179 = vector.load %arg5[%c0_71, %178, %c0_72, %c0_73] : memref<1x8x2x32xf32, #tpu.memory_space<vmem>>, vector<1x1x2x32xf32>
    %180 = vector.shape_cast %179 : vector<1x1x2x32xf32> to vector<2x32xf32>
    %181 = vector.shape_cast %177 : vector<2x32xf32> to vector<1x1x2x32xf32>
    tpu.vector_store %arg5[%c0_71, %178, %c0_72, %c0_73], %181 {strides = array<i32>} : memref<1x8x2x32xf32, #tpu.memory_space<vmem>>, vector<1x1x2x32xf32>,
    %c3_i32 = arith.constant 3 : i32
    %c2_i32_74 = arith.constant 2 : i32
    %182 = arith.muli %c2_i32_74, %c3_i32 : i32
    %c7_i32_75 = arith.constant 7 : i32
    %183 = arith.subi %c7_i32_75, %182 : i32
    %184 = arith.muli %arg0, %183 : i32
    %185 = arith.addi %c3_i32, %184 : i32
    %c0_76 = arith.constant 0 : index
    %186 = arith.index_cast %185 : i32 to index
    %c0_77 = arith.constant 0 : index
    %c0_78 = arith.constant 0 : index
    %187 = vector.load %arg2[%c0_76, %186, %c0_77, %c0_78] : memref<1x8x2x128xbf16, #tpu.memory_space<vmem>>, vector<1x1x2x128xbf16>
    %188 = vector.shape_cast %187 : vector<1x1x2x128xbf16> to vector<2x128xbf16>
    %189 = arith.extf %188 : vector<2x128xbf16> to vector<2x128xf32>
    %c0_79 = arith.constant 0 : index
    %c0_80 = arith.constant 0 : index
    %190 = vector.load %arg7[%c0_79, %c0_80] : memref<2x32xf32, #tpu.memory_space<vmem>>, vector<2x32xf32>
    %c0_81 = arith.constant 0 : index
    %c0_82 = arith.constant 0 : index
    %191 = vector.load %arg8[%c0_81, %c0_82] : memref<2x32xf32, #tpu.memory_space<vmem>>, vector<2x32xf32>
    %192 = arith.truncf %190 : vector<2x32xf32> to vector<2x32xbf16>
    %cst_83 = arith.constant dense<0.000000e+00> : vector<2x128xf32>
    %193 = tpu.matmul %192, %4, %cst_83 {dimension_numbers = #tpu.dot_dimension_numbers<[1], [0], [0], [1], [0, 0, 1, 1], [], []>} : vector<2x32xbf16>, vector<32x128xbf16>, vector<2x128xf32> -> vector<2x128xf32>
    %194 = arith.addf %189, %193 : vector<2x128xf32>
    %195 = vector.extract_strided_slice %194 {offsets = [0, 0], sizes = [2, 32], strides = [1, 1]} : vector<2x128xf32> to vector<2x32xf32>
    %196 = arith.negf %195 : vector<2x32xf32>
    %197 = math.exp %196 : vector<2x32xf32>
    %cst_84 = arith.constant 1.000000e+00 : f32
    %198 = vector.broadcast %cst_84 : f32 to vector<2x32xf32>
    %199 = arith.addf %198, %197 : vector<2x32xf32>
    %200 = arith.divf %198, %199 : vector<2x32xf32>
    %201 = vector.extract_strided_slice %194 {offsets = [0, 32], sizes = [2, 32], strides = [1, 1]} : vector<2x128xf32> to vector<2x32xf32>
    %202 = arith.negf %201 : vector<2x32xf32>
    %203 = math.exp %202 : vector<2x32xf32>
    %cst_85 = arith.constant 1.000000e+00 : f32
    %204 = vector.broadcast %cst_85 : f32 to vector<2x32xf32>
    %205 = arith.addf %204, %203 : vector<2x32xf32>
    %206 = arith.divf %204, %205 : vector<2x32xf32>
    %207 = vector.extract_strided_slice %194 {offsets = [0, 64], sizes = [2, 32], strides = [1, 1]} : vector<2x128xf32> to vector<2x32xf32>
    %208 = math.tanh %207 : vector<2x32xf32>
    %209 = vector.extract_strided_slice %194 {offsets = [0, 96], sizes = [2, 32], strides = [1, 1]} : vector<2x128xf32> to vector<2x32xf32>
    %210 = arith.negf %209 : vector<2x32xf32>
    %211 = math.exp %210 : vector<2x32xf32>
    %cst_86 = arith.constant 1.000000e+00 : f32
    %212 = vector.broadcast %cst_86 : f32 to vector<2x32xf32>
    %213 = arith.addf %212, %211 : vector<2x32xf32>
    %214 = arith.divf %212, %213 : vector<2x32xf32>
    %215 = arith.mulf %206, %191 : vector<2x32xf32>
    %216 = arith.mulf %200, %208 : vector<2x32xf32>
    %217 = arith.addf %215, %216 : vector<2x32xf32>
    %218 = math.tanh %217 : vector<2x32xf32>
    %219 = arith.mulf %214, %218 : vector<2x32xf32>
    %220 = arith.index_cast %185 : i32 to index
    %c0_87 = arith.constant 0 : index
    %c0_88 = arith.constant 0 : index
    %221 = vector.load %arg3[%220, %c0_87, %c0_88] : memref<8x2x1xf32, #tpu.memory_space<vmem>>, vector<1x2x1xf32>
    %222 = vector.shape_cast %221 : vector<1x2x1xf32> to vector<2x1xf32>
    %cst_89 = arith.constant 0.000000e+00 : f32
    %223 = vector.broadcast %cst_89 : f32 to vector<2x1xf32>
    %224 = arith.cmpf ogt, %222, %223 : vector<2x1xf32>
    %225 = vector.shape_cast %224 : vector<2x1xi1> to vector<2x1xi1>
    %226 = vector.broadcast %225 : vector<2x1xi1> to vector<2x32xi1>
    %227 = arith.select %226, %219, %190 : vector<2x32xi1>, vector<2x32xf32>
    %c0_90 = arith.constant 0 : index
    %c0_91 = arith.constant 0 : index
    %228 = vector.load %arg7[%c0_90, %c0_91] : memref<2x32xf32, #tpu.memory_space<vmem>>, vector<2x32xf32>
    tpu.vector_store %arg7[%c0_90, %c0_91], %227 {strides = array<i32>} : memref<2x32xf32, #tpu.memory_space<vmem>>, vector<2x32xf32>,
    %229 = vector.shape_cast %224 : vector<2x1xi1> to vector<2x1xi1>
    %230 = vector.broadcast %229 : vector<2x1xi1> to vector<2x32xi1>
    %231 = arith.select %230, %217, %191 : vector<2x32xi1>, vector<2x32xf32>
    %c0_92 = arith.constant 0 : index
    %c0_93 = arith.constant 0 : index
    %232 = vector.load %arg8[%c0_92, %c0_93] : memref<2x32xf32, #tpu.memory_space<vmem>>, vector<2x32xf32>
    tpu.vector_store %arg8[%c0_92, %c0_93], %231 {strides = array<i32>} : memref<2x32xf32, #tpu.memory_space<vmem>>, vector<2x32xf32>,
    %cst_94 = arith.constant 0.000000e+00 : f32
    %233 = vector.shape_cast %224 : vector<2x1xi1> to vector<2x1xi1>
    %234 = vector.broadcast %233 : vector<2x1xi1> to vector<2x32xi1>
    %235 = vector.broadcast %cst_94 : f32 to vector<2x32xf32>
    %236 = arith.select %234, %219, %235 : vector<2x32xi1>, vector<2x32xf32>
    %c0_95 = arith.constant 0 : index
    %237 = arith.index_cast %185 : i32 to index
    %c0_96 = arith.constant 0 : index
    %c0_97 = arith.constant 0 : index
    %238 = vector.load %arg5[%c0_95, %237, %c0_96, %c0_97] : memref<1x8x2x32xf32, #tpu.memory_space<vmem>>, vector<1x1x2x32xf32>
    %239 = vector.shape_cast %238 : vector<1x1x2x32xf32> to vector<2x32xf32>
    %240 = vector.shape_cast %236 : vector<2x32xf32> to vector<1x1x2x32xf32>
    tpu.vector_store %arg5[%c0_95, %237, %c0_96, %c0_97], %240 {strides = array<i32>} : memref<1x8x2x32xf32, #tpu.memory_space<vmem>>, vector<1x1x2x32xf32>,
    %c4_i32 = arith.constant 4 : i32
    %c2_i32_98 = arith.constant 2 : i32
    %241 = arith.muli %c2_i32_98, %c4_i32 : i32
    %c7_i32_99 = arith.constant 7 : i32
    %242 = arith.subi %c7_i32_99, %241 : i32
    %243 = arith.muli %arg0, %242 : i32
    %244 = arith.addi %c4_i32, %243 : i32
    %c0_100 = arith.constant 0 : index
    %245 = arith.index_cast %244 : i32 to index
    %c0_101 = arith.constant 0 : index
    %c0_102 = arith.constant 0 : index
    %246 = vector.load %arg2[%c0_100, %245, %c0_101, %c0_102] : memref<1x8x2x128xbf16, #tpu.memory_space<vmem>>, vector<1x1x2x128xbf16>
    %247 = vector.shape_cast %246 : vector<1x1x2x128xbf16> to vector<2x128xbf16>
    %248 = arith.extf %247 : vector<2x128xbf16> to vector<2x128xf32>
    %c0_103 = arith.constant 0 : index
    %c0_104 = arith.constant 0 : index
    %249 = vector.load %arg7[%c0_103, %c0_104] : memref<2x32xf32, #tpu.memory_space<vmem>>, vector<2x32xf32>
    %c0_105 = arith.constant 0 : index
    %c0_106 = arith.constant 0 : index
    %250 = vector.load %arg8[%c0_105, %c0_106] : memref<2x32xf32, #tpu.memory_space<vmem>>, vector<2x32xf32>
    %251 = arith.truncf %249 : vector<2x32xf32> to vector<2x32xbf16>
    %cst_107 = arith.constant dense<0.000000e+00> : vector<2x128xf32>
    %252 = tpu.matmul %251, %4, %cst_107 {dimension_numbers = #tpu.dot_dimension_numbers<[1], [0], [0], [1], [0, 0, 1, 1], [], []>} : vector<2x32xbf16>, vector<32x128xbf16>, vector<2x128xf32> -> vector<2x128xf32>
    %253 = arith.addf %248, %252 : vector<2x128xf32>
    %254 = vector.extract_strided_slice %253 {offsets = [0, 0], sizes = [2, 32], strides = [1, 1]} : vector<2x128xf32> to vector<2x32xf32>
    %255 = arith.negf %254 : vector<2x32xf32>
    %256 = math.exp %255 : vector<2x32xf32>
    %cst_108 = arith.constant 1.000000e+00 : f32
    %257 = vector.broadcast %cst_108 : f32 to vector<2x32xf32>
    %258 = arith.addf %257, %256 : vector<2x32xf32>
    %259 = arith.divf %257, %258 : vector<2x32xf32>
    %260 = vector.extract_strided_slice %253 {offsets = [0, 32], sizes = [2, 32], strides = [1, 1]} : vector<2x128xf32> to vector<2x32xf32>
    %261 = arith.negf %260 : vector<2x32xf32>
    %262 = math.exp %261 : vector<2x32xf32>
    %cst_109 = arith.constant 1.000000e+00 : f32
    %263 = vector.broadcast %cst_109 : f32 to vector<2x32xf32>
    %264 = arith.addf %263, %262 : vector<2x32xf32>
    %265 = arith.divf %263, %264 : vector<2x32xf32>
    %266 = vector.extract_strided_slice %253 {offsets = [0, 64], sizes = [2, 32], strides = [1, 1]} : vector<2x128xf32> to vector<2x32xf32>
    %267 = math.tanh %266 : vector<2x32xf32>
    %268 = vector.extract_strided_slice %253 {offsets = [0, 96], sizes = [2, 32], strides = [1, 1]} : vector<2x128xf32> to vector<2x32xf32>
    %269 = arith.negf %268 : vector<2x32xf32>
    %270 = math.exp %269 : vector<2x32xf32>
    %cst_110 = arith.constant 1.000000e+00 : f32
    %271 = vector.broadcast %cst_110 : f32 to vector<2x32xf32>
    %272 = arith.addf %271, %270 : vector<2x32xf32>
    %273 = arith.divf %271, %272 : vector<2x32xf32>
    %274 = arith.mulf %265, %250 : vector<2x32xf32>
    %275 = arith.mulf %259, %267 : vector<2x32xf32>
    %276 = arith.addf %274, %275 : vector<2x32xf32>
    %277 = math.tanh %276 : vector<2x32xf32>
    %278 = arith.mulf %273, %277 : vector<2x32xf32>
    %279 = arith.index_cast %244 : i32 to index
    %c0_111 = arith.constant 0 : index
    %c0_112 = arith.constant 0 : index
    %280 = vector.load %arg3[%279, %c0_111, %c0_112] : memref<8x2x1xf32, #tpu.memory_space<vmem>>, vector<1x2x1xf32>
    %281 = vector.shape_cast %280 : vector<1x2x1xf32> to vector<2x1xf32>
    %cst_113 = arith.constant 0.000000e+00 : f32
    %282 = vector.broadcast %cst_113 : f32 to vector<2x1xf32>
    %283 = arith.cmpf ogt, %281, %282 : vector<2x1xf32>
    %284 = vector.shape_cast %283 : vector<2x1xi1> to vector<2x1xi1>
    %285 = vector.broadcast %284 : vector<2x1xi1> to vector<2x32xi1>
    %286 = arith.select %285, %278, %249 : vector<2x32xi1>, vector<2x32xf32>
    %c0_114 = arith.constant 0 : index
    %c0_115 = arith.constant 0 : index
    %287 = vector.load %arg7[%c0_114, %c0_115] : memref<2x32xf32, #tpu.memory_space<vmem>>, vector<2x32xf32>
    tpu.vector_store %arg7[%c0_114, %c0_115], %286 {strides = array<i32>} : memref<2x32xf32, #tpu.memory_space<vmem>>, vector<2x32xf32>,
    %288 = vector.shape_cast %283 : vector<2x1xi1> to vector<2x1xi1>
    %289 = vector.broadcast %288 : vector<2x1xi1> to vector<2x32xi1>
    %290 = arith.select %289, %276, %250 : vector<2x32xi1>, vector<2x32xf32>
    %c0_116 = arith.constant 0 : index
    %c0_117 = arith.constant 0 : index
    %291 = vector.load %arg8[%c0_116, %c0_117] : memref<2x32xf32, #tpu.memory_space<vmem>>, vector<2x32xf32>
    tpu.vector_store %arg8[%c0_116, %c0_117], %290 {strides = array<i32>} : memref<2x32xf32, #tpu.memory_space<vmem>>, vector<2x32xf32>,
    %cst_118 = arith.constant 0.000000e+00 : f32
    %292 = vector.shape_cast %283 : vector<2x1xi1> to vector<2x1xi1>
    %293 = vector.broadcast %292 : vector<2x1xi1> to vector<2x32xi1>
    %294 = vector.broadcast %cst_118 : f32 to vector<2x32xf32>
    %295 = arith.select %293, %278, %294 : vector<2x32xi1>, vector<2x32xf32>
    %c0_119 = arith.constant 0 : index
    %296 = arith.index_cast %244 : i32 to index
    %c0_120 = arith.constant 0 : index
    %c0_121 = arith.constant 0 : index
    %297 = vector.load %arg5[%c0_119, %296, %c0_120, %c0_121] : memref<1x8x2x32xf32, #tpu.memory_space<vmem>>, vector<1x1x2x32xf32>
    %298 = vector.shape_cast %297 : vector<1x1x2x32xf32> to vector<2x32xf32>
    %299 = vector.shape_cast %295 : vector<2x32xf32> to vector<1x1x2x32xf32>
    tpu.vector_store %arg5[%c0_119, %296, %c0_120, %c0_121], %299 {strides = array<i32>} : memref<1x8x2x32xf32, #tpu.memory_space<vmem>>, vector<1x1x2x32xf32>,
    %c5_i32 = arith.constant 5 : i32
    %c2_i32_122 = arith.constant 2 : i32
    %300 = arith.muli %c2_i32_122, %c5_i32 : i32
    %c7_i32_123 = arith.constant 7 : i32
    %301 = arith.subi %c7_i32_123, %300 : i32
    %302 = arith.muli %arg0, %301 : i32
    %303 = arith.addi %c5_i32, %302 : i32
    %c0_124 = arith.constant 0 : index
    %304 = arith.index_cast %303 : i32 to index
    %c0_125 = arith.constant 0 : index
    %c0_126 = arith.constant 0 : index
    %305 = vector.load %arg2[%c0_124, %304, %c0_125, %c0_126] : memref<1x8x2x128xbf16, #tpu.memory_space<vmem>>, vector<1x1x2x128xbf16>
    %306 = vector.shape_cast %305 : vector<1x1x2x128xbf16> to vector<2x128xbf16>
    %307 = arith.extf %306 : vector<2x128xbf16> to vector<2x128xf32>
    %c0_127 = arith.constant 0 : index
    %c0_128 = arith.constant 0 : index
    %308 = vector.load %arg7[%c0_127, %c0_128] : memref<2x32xf32, #tpu.memory_space<vmem>>, vector<2x32xf32>
    %c0_129 = arith.constant 0 : index
    %c0_130 = arith.constant 0 : index
    %309 = vector.load %arg8[%c0_129, %c0_130] : memref<2x32xf32, #tpu.memory_space<vmem>>, vector<2x32xf32>
    %310 = arith.truncf %308 : vector<2x32xf32> to vector<2x32xbf16>
    %cst_131 = arith.constant dense<0.000000e+00> : vector<2x128xf32>
    %311 = tpu.matmul %310, %4, %cst_131 {dimension_numbers = #tpu.dot_dimension_numbers<[1], [0], [0], [1], [0, 0, 1, 1], [], []>} : vector<2x32xbf16>, vector<32x128xbf16>, vector<2x128xf32> -> vector<2x128xf32>
    %312 = arith.addf %307, %311 : vector<2x128xf32>
    %313 = vector.extract_strided_slice %312 {offsets = [0, 0], sizes = [2, 32], strides = [1, 1]} : vector<2x128xf32> to vector<2x32xf32>
    %314 = arith.negf %313 : vector<2x32xf32>
    %315 = math.exp %314 : vector<2x32xf32>
    %cst_132 = arith.constant 1.000000e+00 : f32
    %316 = vector.broadcast %cst_132 : f32 to vector<2x32xf32>
    %317 = arith.addf %316, %315 : vector<2x32xf32>
    %318 = arith.divf %316, %317 : vector<2x32xf32>
    %319 = vector.extract_strided_slice %312 {offsets = [0, 32], sizes = [2, 32], strides = [1, 1]} : vector<2x128xf32> to vector<2x32xf32>
    %320 = arith.negf %319 : vector<2x32xf32>
    %321 = math.exp %320 : vector<2x32xf32>
    %cst_133 = arith.constant 1.000000e+00 : f32
    %322 = vector.broadcast %cst_133 : f32 to vector<2x32xf32>
    %323 = arith.addf %322, %321 : vector<2x32xf32>
    %324 = arith.divf %322, %323 : vector<2x32xf32>
    %325 = vector.extract_strided_slice %312 {offsets = [0, 64], sizes = [2, 32], strides = [1, 1]} : vector<2x128xf32> to vector<2x32xf32>
    %326 = math.tanh %325 : vector<2x32xf32>
    %327 = vector.extract_strided_slice %312 {offsets = [0, 96], sizes = [2, 32], strides = [1, 1]} : vector<2x128xf32> to vector<2x32xf32>
    %328 = arith.negf %327 : vector<2x32xf32>
    %329 = math.exp %328 : vector<2x32xf32>
    %cst_134 = arith.constant 1.000000e+00 : f32
    %330 = vector.broadcast %cst_134 : f32 to vector<2x32xf32>
    %331 = arith.addf %330, %329 : vector<2x32xf32>
    %332 = arith.divf %330, %331 : vector<2x32xf32>
    %333 = arith.mulf %324, %309 : vector<2x32xf32>
    %334 = arith.mulf %318, %326 : vector<2x32xf32>
    %335 = arith.addf %333, %334 : vector<2x32xf32>
    %336 = math.tanh %335 : vector<2x32xf32>
    %337 = arith.mulf %332, %336 : vector<2x32xf32>
    %338 = arith.index_cast %303 : i32 to index
    %c0_135 = arith.constant 0 : index
    %c0_136 = arith.constant 0 : index
    %339 = vector.load %arg3[%338, %c0_135, %c0_136] : memref<8x2x1xf32, #tpu.memory_space<vmem>>, vector<1x2x1xf32>
    %340 = vector.shape_cast %339 : vector<1x2x1xf32> to vector<2x1xf32>
    %cst_137 = arith.constant 0.000000e+00 : f32
    %341 = vector.broadcast %cst_137 : f32 to vector<2x1xf32>
    %342 = arith.cmpf ogt, %340, %341 : vector<2x1xf32>
    %343 = vector.shape_cast %342 : vector<2x1xi1> to vector<2x1xi1>
    %344 = vector.broadcast %343 : vector<2x1xi1> to vector<2x32xi1>
    %345 = arith.select %344, %337, %308 : vector<2x32xi1>, vector<2x32xf32>
    %c0_138 = arith.constant 0 : index
    %c0_139 = arith.constant 0 : index
    %346 = vector.load %arg7[%c0_138, %c0_139] : memref<2x32xf32, #tpu.memory_space<vmem>>, vector<2x32xf32>
    tpu.vector_store %arg7[%c0_138, %c0_139], %345 {strides = array<i32>} : memref<2x32xf32, #tpu.memory_space<vmem>>, vector<2x32xf32>,
    %347 = vector.shape_cast %342 : vector<2x1xi1> to vector<2x1xi1>
    %348 = vector.broadcast %347 : vector<2x1xi1> to vector<2x32xi1>
    %349 = arith.select %348, %335, %309 : vector<2x32xi1>, vector<2x32xf32>
    %c0_140 = arith.constant 0 : index
    %c0_141 = arith.constant 0 : index
    %350 = vector.load %arg8[%c0_140, %c0_141] : memref<2x32xf32, #tpu.memory_space<vmem>>, vector<2x32xf32>
    tpu.vector_store %arg8[%c0_140, %c0_141], %349 {strides = array<i32>} : memref<2x32xf32, #tpu.memory_space<vmem>>, vector<2x32xf32>,
    %cst_142 = arith.constant 0.000000e+00 : f32
    %351 = vector.shape_cast %342 : vector<2x1xi1> to vector<2x1xi1>
    %352 = vector.broadcast %351 : vector<2x1xi1> to vector<2x32xi1>
    %353 = vector.broadcast %cst_142 : f32 to vector<2x32xf32>
    %354 = arith.select %352, %337, %353 : vector<2x32xi1>, vector<2x32xf32>
    %c0_143 = arith.constant 0 : index
    %355 = arith.index_cast %303 : i32 to index
    %c0_144 = arith.constant 0 : index
    %c0_145 = arith.constant 0 : index
    %356 = vector.load %arg5[%c0_143, %355, %c0_144, %c0_145] : memref<1x8x2x32xf32, #tpu.memory_space<vmem>>, vector<1x1x2x32xf32>
    %357 = vector.shape_cast %356 : vector<1x1x2x32xf32> to vector<2x32xf32>
    %358 = vector.shape_cast %354 : vector<2x32xf32> to vector<1x1x2x32xf32>
    tpu.vector_store %arg5[%c0_143, %355, %c0_144, %c0_145], %358 {strides = array<i32>} : memref<1x8x2x32xf32, #tpu.memory_space<vmem>>, vector<1x1x2x32xf32>,
    %c6_i32 = arith.constant 6 : i32
    %c2_i32_146 = arith.constant 2 : i32
    %359 = arith.muli %c2_i32_146, %c6_i32 : i32
    %c7_i32_147 = arith.constant 7 : i32
    %360 = arith.subi %c7_i32_147, %359 : i32
    %361 = arith.muli %arg0, %360 : i32
    %362 = arith.addi %c6_i32, %361 : i32
    %c0_148 = arith.constant 0 : index
    %363 = arith.index_cast %362 : i32 to index
    %c0_149 = arith.constant 0 : index
    %c0_150 = arith.constant 0 : index
    %364 = vector.load %arg2[%c0_148, %363, %c0_149, %c0_150] : memref<1x8x2x128xbf16, #tpu.memory_space<vmem>>, vector<1x1x2x128xbf16>
    %365 = vector.shape_cast %364 : vector<1x1x2x128xbf16> to vector<2x128xbf16>
    %366 = arith.extf %365 : vector<2x128xbf16> to vector<2x128xf32>
    %c0_151 = arith.constant 0 : index
    %c0_152 = arith.constant 0 : index
    %367 = vector.load %arg7[%c0_151, %c0_152] : memref<2x32xf32, #tpu.memory_space<vmem>>, vector<2x32xf32>
    %c0_153 = arith.constant 0 : index
    %c0_154 = arith.constant 0 : index
    %368 = vector.load %arg8[%c0_153, %c0_154] : memref<2x32xf32, #tpu.memory_space<vmem>>, vector<2x32xf32>
    %369 = arith.truncf %367 : vector<2x32xf32> to vector<2x32xbf16>
    %cst_155 = arith.constant dense<0.000000e+00> : vector<2x128xf32>
    %370 = tpu.matmul %369, %4, %cst_155 {dimension_numbers = #tpu.dot_dimension_numbers<[1], [0], [0], [1], [0, 0, 1, 1], [], []>} : vector<2x32xbf16>, vector<32x128xbf16>, vector<2x128xf32> -> vector<2x128xf32>
    %371 = arith.addf %366, %370 : vector<2x128xf32>
    %372 = vector.extract_strided_slice %371 {offsets = [0, 0], sizes = [2, 32], strides = [1, 1]} : vector<2x128xf32> to vector<2x32xf32>
    %373 = arith.negf %372 : vector<2x32xf32>
    %374 = math.exp %373 : vector<2x32xf32>
    %cst_156 = arith.constant 1.000000e+00 : f32
    %375 = vector.broadcast %cst_156 : f32 to vector<2x32xf32>
    %376 = arith.addf %375, %374 : vector<2x32xf32>
    %377 = arith.divf %375, %376 : vector<2x32xf32>
    %378 = vector.extract_strided_slice %371 {offsets = [0, 32], sizes = [2, 32], strides = [1, 1]} : vector<2x128xf32> to vector<2x32xf32>
    %379 = arith.negf %378 : vector<2x32xf32>
    %380 = math.exp %379 : vector<2x32xf32>
    %cst_157 = arith.constant 1.000000e+00 : f32
    %381 = vector.broadcast %cst_157 : f32 to vector<2x32xf32>
    %382 = arith.addf %381, %380 : vector<2x32xf32>
    %383 = arith.divf %381, %382 : vector<2x32xf32>
    %384 = vector.extract_strided_slice %371 {offsets = [0, 64], sizes = [2, 32], strides = [1, 1]} : vector<2x128xf32> to vector<2x32xf32>
    %385 = math.tanh %384 : vector<2x32xf32>
    %386 = vector.extract_strided_slice %371 {offsets = [0, 96], sizes = [2, 32], strides = [1, 1]} : vector<2x128xf32> to vector<2x32xf32>
    %387 = arith.negf %386 : vector<2x32xf32>
    %388 = math.exp %387 : vector<2x32xf32>
    %cst_158 = arith.constant 1.000000e+00 : f32
    %389 = vector.broadcast %cst_158 : f32 to vector<2x32xf32>
    %390 = arith.addf %389, %388 : vector<2x32xf32>
    %391 = arith.divf %389, %390 : vector<2x32xf32>
    %392 = arith.mulf %383, %368 : vector<2x32xf32>
    %393 = arith.mulf %377, %385 : vector<2x32xf32>
    %394 = arith.addf %392, %393 : vector<2x32xf32>
    %395 = math.tanh %394 : vector<2x32xf32>
    %396 = arith.mulf %391, %395 : vector<2x32xf32>
    %397 = arith.index_cast %362 : i32 to index
    %c0_159 = arith.constant 0 : index
    %c0_160 = arith.constant 0 : index
    %398 = vector.load %arg3[%397, %c0_159, %c0_160] : memref<8x2x1xf32, #tpu.memory_space<vmem>>, vector<1x2x1xf32>
    %399 = vector.shape_cast %398 : vector<1x2x1xf32> to vector<2x1xf32>
    %cst_161 = arith.constant 0.000000e+00 : f32
    %400 = vector.broadcast %cst_161 : f32 to vector<2x1xf32>
    %401 = arith.cmpf ogt, %399, %400 : vector<2x1xf32>
    %402 = vector.shape_cast %401 : vector<2x1xi1> to vector<2x1xi1>
    %403 = vector.broadcast %402 : vector<2x1xi1> to vector<2x32xi1>
    %404 = arith.select %403, %396, %367 : vector<2x32xi1>, vector<2x32xf32>
    %c0_162 = arith.constant 0 : index
    %c0_163 = arith.constant 0 : index
    %405 = vector.load %arg7[%c0_162, %c0_163] : memref<2x32xf32, #tpu.memory_space<vmem>>, vector<2x32xf32>
    tpu.vector_store %arg7[%c0_162, %c0_163], %404 {strides = array<i32>} : memref<2x32xf32, #tpu.memory_space<vmem>>, vector<2x32xf32>,
    %406 = vector.shape_cast %401 : vector<2x1xi1> to vector<2x1xi1>
    %407 = vector.broadcast %406 : vector<2x1xi1> to vector<2x32xi1>
    %408 = arith.select %407, %394, %368 : vector<2x32xi1>, vector<2x32xf32>
    %c0_164 = arith.constant 0 : index
    %c0_165 = arith.constant 0 : index
    %409 = vector.load %arg8[%c0_164, %c0_165] : memref<2x32xf32, #tpu.memory_space<vmem>>, vector<2x32xf32>
    tpu.vector_store %arg8[%c0_164, %c0_165], %408 {strides = array<i32>} : memref<2x32xf32, #tpu.memory_space<vmem>>, vector<2x32xf32>,
    %cst_166 = arith.constant 0.000000e+00 : f32
    %410 = vector.shape_cast %401 : vector<2x1xi1> to vector<2x1xi1>
    %411 = vector.broadcast %410 : vector<2x1xi1> to vector<2x32xi1>
    %412 = vector.broadcast %cst_166 : f32 to vector<2x32xf32>
    %413 = arith.select %411, %396, %412 : vector<2x32xi1>, vector<2x32xf32>
    %c0_167 = arith.constant 0 : index
    %414 = arith.index_cast %362 : i32 to index
    %c0_168 = arith.constant 0 : index
    %c0_169 = arith.constant 0 : index
    %415 = vector.load %arg5[%c0_167, %414, %c0_168, %c0_169] : memref<1x8x2x32xf32, #tpu.memory_space<vmem>>, vector<1x1x2x32xf32>
    %416 = vector.shape_cast %415 : vector<1x1x2x32xf32> to vector<2x32xf32>
    %417 = vector.shape_cast %413 : vector<2x32xf32> to vector<1x1x2x32xf32>
    tpu.vector_store %arg5[%c0_167, %414, %c0_168, %c0_169], %417 {strides = array<i32>} : memref<1x8x2x32xf32, #tpu.memory_space<vmem>>, vector<1x1x2x32xf32>,
    %c7_i32_170 = arith.constant 7 : i32
    %c2_i32_171 = arith.constant 2 : i32
    %418 = arith.muli %c2_i32_171, %c7_i32_170 : i32
    %c7_i32_172 = arith.constant 7 : i32
    %419 = arith.subi %c7_i32_172, %418 : i32
    %420 = arith.muli %arg0, %419 : i32
    %421 = arith.addi %c7_i32_170, %420 : i32
    %c0_173 = arith.constant 0 : index
    %422 = arith.index_cast %421 : i32 to index
    %c0_174 = arith.constant 0 : index
    %c0_175 = arith.constant 0 : index
    %423 = vector.load %arg2[%c0_173, %422, %c0_174, %c0_175] : memref<1x8x2x128xbf16, #tpu.memory_space<vmem>>, vector<1x1x2x128xbf16>
    %424 = vector.shape_cast %423 : vector<1x1x2x128xbf16> to vector<2x128xbf16>
    %425 = arith.extf %424 : vector<2x128xbf16> to vector<2x128xf32>
    %c0_176 = arith.constant 0 : index
    %c0_177 = arith.constant 0 : index
    %426 = vector.load %arg7[%c0_176, %c0_177] : memref<2x32xf32, #tpu.memory_space<vmem>>, vector<2x32xf32>
    %c0_178 = arith.constant 0 : index
    %c0_179 = arith.constant 0 : index
    %427 = vector.load %arg8[%c0_178, %c0_179] : memref<2x32xf32, #tpu.memory_space<vmem>>, vector<2x32xf32>
    %428 = arith.truncf %426 : vector<2x32xf32> to vector<2x32xbf16>
    %cst_180 = arith.constant dense<0.000000e+00> : vector<2x128xf32>
    %429 = tpu.matmul %428, %4, %cst_180 {dimension_numbers = #tpu.dot_dimension_numbers<[1], [0], [0], [1], [0, 0, 1, 1], [], []>} : vector<2x32xbf16>, vector<32x128xbf16>, vector<2x128xf32> -> vector<2x128xf32>
    %430 = arith.addf %425, %429 : vector<2x128xf32>
    %431 = vector.extract_strided_slice %430 {offsets = [0, 0], sizes = [2, 32], strides = [1, 1]} : vector<2x128xf32> to vector<2x32xf32>
    %432 = arith.negf %431 : vector<2x32xf32>
    %433 = math.exp %432 : vector<2x32xf32>
    %cst_181 = arith.constant 1.000000e+00 : f32
    %434 = vector.broadcast %cst_181 : f32 to vector<2x32xf32>
    %435 = arith.addf %434, %433 : vector<2x32xf32>
    %436 = arith.divf %434, %435 : vector<2x32xf32>
    %437 = vector.extract_strided_slice %430 {offsets = [0, 32], sizes = [2, 32], strides = [1, 1]} : vector<2x128xf32> to vector<2x32xf32>
    %438 = arith.negf %437 : vector<2x32xf32>
    %439 = math.exp %438 : vector<2x32xf32>
    %cst_182 = arith.constant 1.000000e+00 : f32
    %440 = vector.broadcast %cst_182 : f32 to vector<2x32xf32>
    %441 = arith.addf %440, %439 : vector<2x32xf32>
    %442 = arith.divf %440, %441 : vector<2x32xf32>
    %443 = vector.extract_strided_slice %430 {offsets = [0, 64], sizes = [2, 32], strides = [1, 1]} : vector<2x128xf32> to vector<2x32xf32>
    %444 = math.tanh %443 : vector<2x32xf32>
    %445 = vector.extract_strided_slice %430 {offsets = [0, 96], sizes = [2, 32], strides = [1, 1]} : vector<2x128xf32> to vector<2x32xf32>
    %446 = arith.negf %445 : vector<2x32xf32>
    %447 = math.exp %446 : vector<2x32xf32>
    %cst_183 = arith.constant 1.000000e+00 : f32
    %448 = vector.broadcast %cst_183 : f32 to vector<2x32xf32>
    %449 = arith.addf %448, %447 : vector<2x32xf32>
    %450 = arith.divf %448, %449 : vector<2x32xf32>
    %451 = arith.mulf %442, %427 : vector<2x32xf32>
    %452 = arith.mulf %436, %444 : vector<2x32xf32>
    %453 = arith.addf %451, %452 : vector<2x32xf32>
    %454 = math.tanh %453 : vector<2x32xf32>
    %455 = arith.mulf %450, %454 : vector<2x32xf32>
    %456 = arith.index_cast %421 : i32 to index
    %c0_184 = arith.constant 0 : index
    %c0_185 = arith.constant 0 : index
    %457 = vector.load %arg3[%456, %c0_184, %c0_185] : memref<8x2x1xf32, #tpu.memory_space<vmem>>, vector<1x2x1xf32>
    %458 = vector.shape_cast %457 : vector<1x2x1xf32> to vector<2x1xf32>
    %cst_186 = arith.constant 0.000000e+00 : f32
    %459 = vector.broadcast %cst_186 : f32 to vector<2x1xf32>
    %460 = arith.cmpf ogt, %458, %459 : vector<2x1xf32>
    %461 = vector.shape_cast %460 : vector<2x1xi1> to vector<2x1xi1>
    %462 = vector.broadcast %461 : vector<2x1xi1> to vector<2x32xi1>
    %463 = arith.select %462, %455, %426 : vector<2x32xi1>, vector<2x32xf32>
    %c0_187 = arith.constant 0 : index
    %c0_188 = arith.constant 0 : index
    %464 = vector.load %arg7[%c0_187, %c0_188] : memref<2x32xf32, #tpu.memory_space<vmem>>, vector<2x32xf32>
    tpu.vector_store %arg7[%c0_187, %c0_188], %463 {strides = array<i32>} : memref<2x32xf32, #tpu.memory_space<vmem>>, vector<2x32xf32>,
    %465 = vector.shape_cast %460 : vector<2x1xi1> to vector<2x1xi1>
    %466 = vector.broadcast %465 : vector<2x1xi1> to vector<2x32xi1>
    %467 = arith.select %466, %453, %427 : vector<2x32xi1>, vector<2x32xf32>
    %c0_189 = arith.constant 0 : index
    %c0_190 = arith.constant 0 : index
    %468 = vector.load %arg8[%c0_189, %c0_190] : memref<2x32xf32, #tpu.memory_space<vmem>>, vector<2x32xf32>
    tpu.vector_store %arg8[%c0_189, %c0_190], %467 {strides = array<i32>} : memref<2x32xf32, #tpu.memory_space<vmem>>, vector<2x32xf32>,
    %cst_191 = arith.constant 0.000000e+00 : f32
    %469 = vector.shape_cast %460 : vector<2x1xi1> to vector<2x1xi1>
    %470 = vector.broadcast %469 : vector<2x1xi1> to vector<2x32xi1>
    %471 = vector.broadcast %cst_191 : f32 to vector<2x32xf32>
    %472 = arith.select %470, %455, %471 : vector<2x32xi1>, vector<2x32xf32>
    %c0_192 = arith.constant 0 : index
    %473 = arith.index_cast %421 : i32 to index
    %c0_193 = arith.constant 0 : index
    %c0_194 = arith.constant 0 : index
    %474 = vector.load %arg5[%c0_192, %473, %c0_193, %c0_194] : memref<1x8x2x32xf32, #tpu.memory_space<vmem>>, vector<1x1x2x32xf32>
    %475 = vector.shape_cast %474 : vector<1x1x2x32xf32> to vector<2x32xf32>
    %476 = vector.shape_cast %472 : vector<2x32xf32> to vector<1x1x2x32xf32>
    tpu.vector_store %arg5[%c0_192, %473, %c0_193, %c0_194], %476 {strides = array<i32>} : memref<1x8x2x32xf32, #tpu.memory_space<vmem>>, vector<1x1x2x32xf32>,
    %c8_i32 = arith.constant 8 : i32
    %c0_i32_195 = arith.constant 0 : i32
    %477 = arith.cmpi eq, %arg1, %c0_i32_195 : i32
    %478 = arith.extui %477 : i1 to i32
    %c0_i32_196 = arith.constant 0 : i32
    %479 = arith.cmpi ne, %478, %c0_i32_196 : i32
    scf.if %479 {
      %c0_197 = arith.constant 0 : index
      %c0_198 = arith.constant 0 : index
      %480 = vector.load %arg7[%c0_197, %c0_198] : memref<2x32xf32, #tpu.memory_space<vmem>>, vector<2x32xf32>
      %c0_199 = arith.constant 0 : index
      %c0_200 = arith.constant 0 : index
      %c0_201 = arith.constant 0 : index
      %481 = vector.load %arg6[%c0_199, %c0_200, %c0_201] : memref<1x2x32xf32, #tpu.memory_space<vmem>>, vector<1x2x32xf32>
      %482 = vector.shape_cast %481 : vector<1x2x32xf32> to vector<2x32xf32>
      %483 = vector.shape_cast %480 : vector<2x32xf32> to vector<1x2x32xf32>
      tpu.vector_store %arg6[%c0_199, %c0_200, %c0_201], %483 {strides = array<i32>} : memref<1x2x32xf32, #tpu.memory_space<vmem>>, vector<1x2x32xf32>,
    } else {
    }
    return
  }
  func.func @transform_0(%arg0: i32, %arg1: i32) -> (i32, i32, i32, i32) {
    %c1_i32 = arith.constant 1 : i32
    %0 = arith.subi %c1_i32, %arg0 : i32
    %1 = arith.muli %arg1, %0 : i32
    %c0_i32 = arith.constant 0 : i32
    %2 = arith.subi %c0_i32, %arg1 : i32
    %3 = arith.muli %2, %arg0 : i32
    %4 = arith.addi %1, %3 : i32
    %c0_i32_0 = arith.constant 0 : i32
    %c0_i32_1 = arith.constant 0 : i32
    %c0_i32_2 = arith.constant 0 : i32
    return %arg0, %4, %c0_i32_0, %c0_i32_1 : i32, i32, i32, i32
  }
  func.func @transform_1(%arg0: i32, %arg1: i32) -> (i32, i32, i32) {
    %c1_i32 = arith.constant 1 : i32
    %0 = arith.subi %c1_i32, %arg0 : i32
    %1 = arith.muli %arg1, %0 : i32
    %c0_i32 = arith.constant 0 : i32
    %2 = arith.subi %c0_i32, %arg1 : i32
    %3 = arith.muli %2, %arg0 : i32
    %4 = arith.addi %1, %3 : i32
    %c0_i32_0 = arith.constant 0 : i32
    %c0_i32_1 = arith.constant 0 : i32
    %c0_i32_2 = arith.constant 0 : i32
    return %4, %c0_i32_0, %c0_i32_1 : i32, i32, i32
  }
  func.func @transform_2(%arg0: i32, %arg1: i32) -> (i32, i32, i32) {
    %c0_i32 = arith.constant 0 : i32
    %c0_i32_0 = arith.constant 0 : i32
    %c0_i32_1 = arith.constant 0 : i32
    return %arg0, %c0_i32, %c0_i32_0 : i32, i32, i32
  }
  func.func @transform_3(%arg0: i32, %arg1: i32) -> (i32, i32, i32, i32) {
    %c1_i32 = arith.constant 1 : i32
    %0 = arith.subi %c1_i32, %arg0 : i32
    %1 = arith.muli %arg1, %0 : i32
    %c0_i32 = arith.constant 0 : i32
    %2 = arith.subi %c0_i32, %arg1 : i32
    %3 = arith.muli %2, %arg0 : i32
    %4 = arith.addi %1, %3 : i32
    %c0_i32_0 = arith.constant 0 : i32
    %c0_i32_1 = arith.constant 0 : i32
    %c0_i32_2 = arith.constant 0 : i32
    return %arg0, %4, %c0_i32_0, %c0_i32_1 : i32, i32, i32, i32
  }
  func.func @transform_4(%arg0: i32, %arg1: i32) -> (i32, i32, i32) {
    %c0_i32 = arith.constant 0 : i32
    %c0_i32_0 = arith.constant 0 : i32
    %c0_i32_1 = arith.constant 0 : i32
    return %arg0, %c0_i32, %c0_i32_0 : i32, i32, i32
  }
}

module attributes {stable_mosaic.version = 11 : i64} {
  func.func @_proj_kernel(%arg0: i32, %arg1: memref<16x64xbf16, #tpu.memory_space<vmem>>, %arg2: memref<1x64x128xbf16, #tpu.memory_space<vmem>>, %arg3: memref<1x1x128xf32, #tpu.memory_space<vmem>>, %arg4: memref<1x16x128xbf16, #tpu.memory_space<vmem>>) attributes {dimension_semantics = [#tpu.dimension_semantics<parallel>], iteration_bounds = array<i64: 2>, scalar_prefetch = 0 : i64, scratch_operands = 0 : i64, tpu.core_type = #tpu.core_type<tc>, window_params = [{pipeline_mode = #tpu.pipeline_mode<synchronous>, transform_indices = @transform_0, window_bounds = array<i64: 16, 64>}, {transform_indices = @transform_1, window_bounds = array<i64: 1, 64, 128>}, {transform_indices = @transform_2, window_bounds = array<i64: 1, 1, 128>}, {transform_indices = @transform_3, window_bounds = array<i64: 1, 16, 128>}]} {
    %c0 = arith.constant 0 : index
    %c0_0 = arith.constant 0 : index
    %0 = vector.load %arg1[%c0, %c0_0] : memref<16x64xbf16, #tpu.memory_space<vmem>>, vector<16x64xbf16>
    %c0_1 = arith.constant 0 : index
    %c0_2 = arith.constant 0 : index
    %c0_3 = arith.constant 0 : index
    %1 = vector.load %arg2[%c0_1, %c0_2, %c0_3] : memref<1x64x128xbf16, #tpu.memory_space<vmem>>, vector<1x64x128xbf16>
    %2 = vector.shape_cast %1 : vector<1x64x128xbf16> to vector<64x128xbf16>
    %cst = arith.constant dense<0.000000e+00> : vector<16x128xf32>
    %3 = tpu.matmul %0, %2, %cst {dimension_numbers = #tpu.dot_dimension_numbers<[1], [0], [0], [1], [0, 0, 1, 1], [], []>} : vector<16x64xbf16>, vector<64x128xbf16>, vector<16x128xf32> -> vector<16x128xf32>
    %c0_4 = arith.constant 0 : index
    %c0_5 = arith.constant 0 : index
    %c0_6 = arith.constant 0 : index
    %4 = vector.load %arg3[%c0_4, %c0_5, %c0_6] : memref<1x1x128xf32, #tpu.memory_space<vmem>>, vector<1x1x128xf32>
    %5 = vector.shape_cast %4 : vector<1x1x128xf32> to vector<1x128xf32>
    %6 = vector.broadcast %5 : vector<1x128xf32> to vector<16x128xf32>
    %7 = arith.addf %3, %6 : vector<16x128xf32>
    %8 = arith.truncf %7 : vector<16x128xf32> to vector<16x128xbf16>
    %c0_7 = arith.constant 0 : index
    %c0_8 = arith.constant 0 : index
    %c0_9 = arith.constant 0 : index
    %9 = vector.load %arg4[%c0_7, %c0_8, %c0_9] : memref<1x16x128xbf16, #tpu.memory_space<vmem>>, vector<1x16x128xbf16>
    %10 = vector.shape_cast %9 : vector<1x16x128xbf16> to vector<16x128xbf16>
    %11 = vector.shape_cast %8 : vector<16x128xbf16> to vector<1x16x128xbf16>
    tpu.vector_store %arg4[%c0_7, %c0_8, %c0_9], %11 {strides = array<i32>} : memref<1x16x128xbf16, #tpu.memory_space<vmem>>, vector<1x16x128xbf16>,
    return
  }
  func.func @transform_0(%arg0: i32) -> (i32, i32) {
    %c0_i32 = arith.constant 0 : i32
    %c0_i32_0 = arith.constant 0 : i32
    %c0_i32_1 = arith.constant 0 : i32
    return %c0_i32, %c0_i32_0 : i32, i32
  }
  func.func @transform_1(%arg0: i32) -> (i32, i32, i32) {
    %c0_i32 = arith.constant 0 : i32
    %c0_i32_0 = arith.constant 0 : i32
    %c0_i32_1 = arith.constant 0 : i32
    return %arg0, %c0_i32, %c0_i32_0 : i32, i32, i32
  }
  func.func @transform_2(%arg0: i32) -> (i32, i32, i32) {
    %c0_i32 = arith.constant 0 : i32
    %c0_i32_0 = arith.constant 0 : i32
    %c0_i32_1 = arith.constant 0 : i32
    return %arg0, %c0_i32, %c0_i32_0 : i32, i32, i32
  }
  func.func @transform_3(%arg0: i32) -> (i32, i32, i32) {
    %c0_i32 = arith.constant 0 : i32
    %c0_i32_0 = arith.constant 0 : i32
    %c0_i32_1 = arith.constant 0 : i32
    return %arg0, %c0_i32, %c0_i32_0 : i32, i32, i32
  }
}

</mosaic_0001>

<llo_original>
// kernel: my_lstm_forward.4
$region0: #{my_lstm_forward.4}
  #allocation0 [shape = 'u32[]', space=smem, size = 0x4, offset = 0x4, fixed_abs, tag = 'smem constant byte address 0x4 - core index']
  #allocation1 [shape = 'u32[144,128]{1,0:T(1,128)}', space=vmem, size = 0x12000, scoped, tag = 'internal scratch']
  %s0 = inlined_call_operand.vmem [shape: bf16[16,16], index: 0, kind: input, shape index: {}]
  %s1 = inlined_call_operand.vmem [shape: bf16[2,16,128], index: 1, kind: input, shape index: {}]
  %s2 = inlined_call_operand.vmem [shape: f32[2,1,128], index: 2, kind: input, shape index: {}]
  %s3 = inlined_call_operand.vmem [shape: bf16[2,16,128], index: 3, kind: output, shape index: {}]
  %s4 = sld [smem:[#allocation0]]
  $region45: #{my_lstm_forward.4} parent=0
    _
  %s6 = ssub.s32 1, %s4
  %s7 = scalar_select 0, %s6, %s4
  loop: start=0, step=1, limit=4
  $region2: #{my_lstm_forward.4} parent=0 // loop_pre_header
    _
  $region3: #{my_lstm_forward.4} parent=0 // loop_header
    %s9 = sphi 0, %s13
    %p10 = scmp.ge.s32.totalorder %s9, 4
    %s17 = sphi 0, %s17
    %s19 = sphi 0, %s17
    %s20 = sphi 0, %s19
    %s34 = sphi 0, %s20
    %s40 = sphi 0, %s42
    %s43 = sphi 0, %s40
    %s44 = sphi 0, %s43
    %s60 = sphi 0, %s44
    %s66 = sphi 0, %s68
    %s69 = sphi 0, %s66
    %s70 = sphi 0, %s69
    %s86 = sphi 0, %s70
    %s92 = sphi 0, %s94
    %s95 = sphi 0, %s92
    %s96 = sphi 0, %s95
    %s112 = sphi 0, %s96
  $region4: #{my_lstm_forward.4} parent=0 // loop_header_branch
    %12 = sbr.rel (%p10) target = $region8
  $region5: #{my_lstm_forward.4} parent=0 // loop_body
    %s14 = ssub.s32 %s9, 1
    %s15 = ssub.s32 %s9, 2
    %s16 = sadd.s32 %s9, 1
    %s18 = sadd.s32 %s17, 1
    %p21 = scmp.eq.s32.totalorder %s9, 1
    %p22 = scmp.ne.s32.totalorder %s17, %s19
    %p23 = scmp.eq.s32.totalorder %s9, 0
    %p24 = por %p22, %p23
    %p25 = scmp.ne.s32.totalorder %s17, %s19
    %p26 = scmp.eq.s32.totalorder %s14, 1
    %p27 = por %p25, %p26
    %p28 = scmp.ne.s32.totalorder %s19, %s20
    %p29 = scmp.eq.s32.totalorder %s14, 0
    %p30 = por %p28, %p29
    %p31 = scmp.ne.s32.totalorder %s19, %s20
    %p32 = scmp.eq.s32.totalorder %s15, 1
    %p33 = por %p31, %p32
    %p35 = scmp.ne.s32.totalorder %s20, %s34
    %p36 = scmp.eq.s32.totalorder %s15, 0
    %p37 = por %p35, %p36
    %s38 = ssub.s32 %s9, %s16
    %p39 = scmp.eq.s32.totalorder %s38, 0
    %s41 = sadd.s32 %s40, 1
    %s42 = scalar_select %p39, %s40, %s41
    %p45 = pneg %p39
    %p46 = scmp.eq.s32.totalorder %s9, 1
    %p47 = por %p45, %p46
    %p48 = scmp.ne.s32.totalorder %s40, %s43
    %p49 = scmp.eq.s32.totalorder %s9, 0
    %p50 = por %p48, %p49
    %p51 = scmp.ne.s32.totalorder %s40, %s43
    %p52 = scmp.eq.s32.totalorder %s14, 1
    %p53 = por %p51, %p52
    %p54 = scmp.ne.s32.totalorder %s43, %s44
    %p55 = scmp.eq.s32.totalorder %s14, 0
    %p56 = por %p54, %p55
    %p57 = scmp.ne.s32.totalorder %s43, %s44
    %p58 = scmp.eq.s32.totalorder %s15, 1
    %p59 = por %p57, %p58
    %p61 = scmp.ne.s32.totalorder %s44, %s60
    %p62 = scmp.eq.s32.totalorder %s15, 0
    %p63 = por %p61, %p62
    %s64 = ssub.s32 %s9, %s16
    %p65 = scmp.eq.s32.totalorder %s64, 0
    %s67 = sadd.s32 %s66, 1
    %s68 = scalar_select %p65, %s66, %s67
    %p71 = pneg %p65
    %p72 = scmp.eq.s32.totalorder %s9, 1
    %p73 = por %p71, %p72
    %p74 = scmp.ne.s32.totalorder %s66, %s69
    %p75 = scmp.eq.s32.totalorder %s9, 0
    %p76 = por %p74, %p75
    %p77 = scmp.ne.s32.totalorder %s66, %s69
    %p78 = scmp.eq.s32.totalorder %s14, 1
    %p79 = por %p77, %p78
    %p80 = scmp.ne.s32.totalorder %s69, %s70
    %p81 = scmp.eq.s32.totalorder %s14, 0
    %p82 = por %p80, %p81
    %p83 = scmp.ne.s32.totalorder %s69, %s70
    %p84 = scmp.eq.s32.totalorder %s15, 1
    %p85 = por %p83, %p84
    %p87 = scmp.ne.s32.totalorder %s70, %s86
    %p88 = scmp.eq.s32.totalorder %s15, 0
    %p89 = por %p87, %p88
    %s90 = ssub.s32 %s9, %s16
    %p91 = scmp.eq.s32.totalorder %s90, 0
    %s93 = sadd.s32 %s92, 1
    %s94 = scalar_select %p91, %s92, %s93
    %p97 = pneg %p91
    %p98 = scmp.eq.s32.totalorder %s9, 1
    %p99 = por %p97, %p98
    %p100 = scmp.ne.s32.totalorder %s92, %s95
    %p101 = scmp.eq.s32.totalorder %s9, 0
    %p102 = por %p100, %p101
    %p103 = scmp.ne.s32.totalorder %s92, %s95
    %p104 = scmp.eq.s32.totalorder %s14, 1
    %p105 = por %p103, %p104
    %p106 = scmp.ne.s32.totalorder %s95, %s96
    %p107 = scmp.eq.s32.totalorder %s14, 0
    %p108 = por %p106, %p107
    %p109 = scmp.ne.s32.totalorder %s95, %s96
    %p110 = scmp.eq.s32.totalorder %s15, 1
    %p111 = por %p109, %p110
    %p113 = scmp.ne.s32.totalorder %s96, %s112
    %p114 = scmp.eq.s32.totalorder %s15, 0
    %p115 = por %p113, %p114
    %p116 = scmp.le.s32.totalorder 1, %s9
    %p117 = scmp.lt.s32.totalorder %s9, 3
    %p118 = pnand %p116, %p117
    %p119 = pneg %p118
    // Predicated region
    $region9: #{my_lstm_forward.4} parent=5 // pred_check
      _
    $region10: #{my_lstm_forward.4} parent=5 // pred_check_branch
      %121 = sbr.rel (%p118) target = $region12
    $region11: #{my_lstm_forward.4} parent=5 // pred_region
      %s122 = ssub.s32 %s9, 1
      // Predicated region
      $region13: #{my_lstm_forward.4} parent=11 // pred_check
        %p123 = pneg %p30
      $region14: #{my_lstm_forward.4} parent=11 // pred_check_branch
        %125 = sbr.rel (%p123) target = $region16
      $region15: #{my_lstm_forward.4} parent=11 // pred_region
        _
      $region16: #{my_lstm_forward.4} parent=11 // pred_fallthru
        _
    $region12: #{my_lstm_forward.4} parent=5 // pred_fallthru
      _
    %p126 = scmp.lt.s32.totalorder %s9, 2
    // Predicated region
    $region17: #{my_lstm_forward.4} parent=5 // pred_check
      %p127 = pneg %p126
    $region18: #{my_lstm_forward.4} parent=5 // pred_check_branch
      %129 = sbr.rel (%p127) target = $region20
    $region19: #{my_lstm_forward.4} parent=5 // pred_region
      // Predicated region
      $region21: #{my_lstm_forward.4} parent=19 // pred_check
        %p130 = pneg %p50
      $region22: #{my_lstm_forward.4} parent=19 // pred_check_branch
        %132 = sbr.rel (%p130) target = $region24
      $region23: #{my_lstm_forward.4} parent=19 // pred_region
        %p133 = scmp.lt.s32.totalorder %s9, 1
        %s134 = scalar_select %p133, %s9, 1
        %s135 = smul.addr %s134, 2
        %s136 = smul.addr %s135, 4
        %s137 = scalar_lea.vmem %s1, %s136
      $region24: #{my_lstm_forward.4} parent=19 // pred_fallthru
        _
      // Predicated region
      $region25: #{my_lstm_forward.4} parent=19 // pred_check
        %p138 = pneg %p76
      $region26: #{my_lstm_forward.4} parent=19 // pred_check_branch
        %140 = sbr.rel (%p138) target = $region28
      $region27: #{my_lstm_forward.4} parent=19 // pred_region
        %p141 = scmp.lt.s32.totalorder %s9, 1
        %s142 = scalar_select %p141, %s9, 1
        %s143 = scalar_lea.vmem %s2, %s142
      $region28: #{my_lstm_forward.4} parent=19 // pred_fallthru
        _
    $region20: #{my_lstm_forward.4} parent=5 // pred_fallthru
      _
    %p144 = scmp.le.s32.totalorder 1, %s9
    %p145 = scmp.lt.s32.totalorder %s9, 3
    %p146 = pnand %p144, %p145
    %p147 = pneg %p146
    // Predicated region
    $region29: #{my_lstm_forward.4} parent=5 // pred_check
      _
    $region30: #{my_lstm_forward.4} parent=5 // pred_check_branch
      %149 = sbr.rel (%p146) target = $region32
    $region31: #{my_lstm_forward.4} parent=5 // pred_region
      %s150 = ssub.s32 %s9, 1
      %p151 = pneg %p30
      %p152 = pneg %p27
      %p153 = scmp.lt.s32.totalorder %s14, 1
      %s154 = scalar_select %p153, %s14, 1
      %s155 = smul.addr %s154, 2
      %s156 = smul.addr %s155, 4
      %s157 = scalar_lea.vmem %s1, %s156
      %p158 = pneg %p56
      %p159 = pneg %p53
      %p160 = scmp.lt.s32.totalorder %s14, 1
      %s161 = scalar_select %p160, %s14, 1
      %s162 = scalar_lea.vmem %s2, %s161
      %p163 = pneg %p82
      %p164 = pneg %p79
      %p165 = pneg %p108
      %p166 = pneg %p105
      %p167 = scmp.lt.s32.totalorder %s14, 1
      %s168 = scalar_select %p167, %s14, 1
      %s169 = smul.addr %s168, 2
      %s170 = smul.addr %s169, 4
      %s171 = scalar_lea.vmem %s3, %s170
      %p172 = scmp.lt.s32.totalorder %s14, 1
      %s173 = scalar_select %p172, %s14, 1
      %s174 = smul.addr %s173, 2
      %s175 = smul.addr %s174, 4
      %s176 = scalar_lea.vmem %s1, %s175
      %p177 = scmp.lt.s32.totalorder %s14, 1
      %s178 = scalar_select %p177, %s14, 1
      %s179 = scalar_lea.vmem %s2, %s178
      %p180 = scmp.lt.s32.totalorder %s14, 1
      %s181 = scalar_select %p180, %s14, 1
      %s182 = smul.addr %s181, 2
      %s183 = smul.addr %s182, 4
      %s184 = scalar_lea.vmem %s3, %s183
      %v186 = vld [vmem:[%s0] sm:$0xf]
      %v187 = vld [vmem:[%s0 + $0x4] sm:$0xf]
      %v188 = vld [vmem:[%s176] sm:$0xf]
      %v189 = vld [vmem:[%s176 + $0x4] sm:$0xf]
      %v190 = vld [vmem:[%s179] sm:$0x1]
      %v192 = vlaneseq
      %v193 = vshrl.u32 %v192, 7
      %v194 = vsub.s32 0, %v193
      %v195 = vrot.slane %v190, %v194
      %v199 = vunpack.c.l.b16 %v186
      %v200 = vunpack.c.l.b16 %v187
      %v201 = vpack.c.b16 %v200, %v199
      %v204 = vunpack.c.l.b16 %v188
      %v205 = vunpack.c.l.b16 %v189
      %v206 = vpack.c.b16 %v205, %v204
      %vm208 = vcmask 130048
      %v210 = vsel %vm208, %v201, 0
      %212 = vmatprep.subr.bf16.mxu0 0
      %213 = vmatpush1.bf16.msra.mxu0 %v206
      %214 = vmatprep.subr.bf16.mxu0 0
      %215 = vmatpush1.bf16.msra.mxu0 0
      %216 = vmatprep.subr.bf16.mxu0 0
      %217 = vmatpush1.bf16.msra.mxu0 0
      %218 = vmatprep.subr.bf16.mxu0 0
      %219 = vmatpush1.bf16.msra.mxu0 0
      %220 = vmatprep.subr.bf16.mxu0 0
      %221 = vmatpush1.bf16.msra.mxu0 0
      %222 = vmatprep.subr.bf16.mxu0 0
      %223 = vmatpush1.bf16.msra.mxu0 0
      %224 = vmatprep.subr.bf16.mxu0 0
      %225 = vmatpush1.bf16.msra.mxu0 0
      %226 = vmatprep.subr.bf16.mxu0 0
      %227 = vmatpush1.bf16.msra.mxu0 0
      %228 = vmatprep.subr.bf16.mxu0 0
      %229 = vmatpush1.bf16.msra.mxu0 0
      %230 = vmatprep.subr.bf16.mxu0 0
      %231 = vmatpush1.bf16.msra.mxu0 0
      %232 = vmatprep.subr.bf16.mxu0 0
      %233 = vmatpush1.bf16.msra.mxu0 0
      %234 = vmatprep.subr.bf16.mxu0 0
      %235 = vmatpush1.bf16.msra.mxu0 0
      %236 = vmatprep.subr.bf16.mxu0 0
      %237 = vmatpush1.bf16.msra.mxu0 0
      %238 = vmatprep.subr.bf16.mxu0 0
      %239 = vmatpush1.bf16.msra.mxu0 0
      %240 = vmatprep.subr.bf16.mxu0 0
      %241 = vmatpush1.bf16.msra.mxu0 0
      %242 = vmatprep.subr.bf16.mxu0 0
      %243 = vmatpush1.bf16.msra.mxu0 0
      %244 = vmatprep.mubr.bf16.mxu0 0
      %245 = vmatmul.mubr.bf16.gmra.mrb[0].mxu0 %v210
      %v246 = vpop.f32.mrb[0].mxu0
      %v247 = vadd.f32 %v195, %v246
      %v248 = vpop.f32.mrb[0].mxu0
      %v249 = vpop.f32.mrb[0].mxu0
      %v250 = vadd.f32 %v195, %v249
      %v251 = vpop.f32.mrb[0].mxu0
      %252 = vdwg.mxu0
      %v253 = vpack.c.bf16 %v250, %v247
      %v255 = vunpack.c.l.b16 %v253
      %v256 = vunpack.c.h.b16 %v253
      %v257 = vpack.c.b16 %v255, %v255
      %v258 = vpack.c.b16 %v256, %v256
      %261 = vst [vmem:[%s184] sm:$0xf] %v257
      %262 = vst [vmem:[%s184 + $0x4] sm:$0xf] %v258
      %p263 = scmp.lt.s32.totalorder %s14, 1
      %s264 = scalar_select %p263, %s14, 1
      %s265 = smul.addr %s264, 2
      %s266 = smul.addr %s265, 4
      %s267 = scalar_lea.vmem %s3, %s266
      // Predicated region
      $region33: #{my_lstm_forward.4} parent=31 // pred_check
        %p268 = pneg %p105
      $region34: #{my_lstm_forward.4} parent=31 // pred_check_branch
        %270 = sbr.rel (%p268) target = $region36
      $region35: #{my_lstm_forward.4} parent=31 // pred_region
        _
      $region36: #{my_lstm_forward.4} parent=31 // pred_fallthru
        _
    $region32: #{my_lstm_forward.4} parent=5 // pred_fallthru
      _
    %p271 = scmp.le.s32.totalorder 2, %s9
    // Predicated region
    $region37: #{my_lstm_forward.4} parent=5 // pred_check
      %p272 = pneg %p271
    $region38: #{my_lstm_forward.4} parent=5 // pred_check_branch
      %274 = sbr.rel (%p272) target = $region40
    $region39: #{my_lstm_forward.4} parent=5 // pred_region
      %s275 = ssub.s32 %s9, 2
      // Predicated region
      $region41: #{my_lstm_forward.4} parent=39 // pred_check
        %p276 = pneg %p111
      $region42: #{my_lstm_forward.4} parent=39 // pred_check_branch
        %278 = sbr.rel (%p276) target = $region44
      $region43: #{my_lstm_forward.4} parent=39 // pred_region
        %p279 = scmp.lt.s32.totalorder %s15, 1
        %s280 = scalar_select %p279, %s15, 1
        %s281 = smul.addr %s280, 2
        %s282 = smul.addr %s281, 4
        %s283 = scalar_lea.vmem %s3, %s282
      $region44: #{my_lstm_forward.4} parent=39 // pred_fallthru
        _
    $region40: #{my_lstm_forward.4} parent=5 // pred_fallthru
      _
  $region6: #{my_lstm_forward.4} parent=0 // loop_footer
    %s13 = sadd.s32 1, %s9
  $region7: #{my_lstm_forward.4} parent=0 // loop_footer_branch
    %8 = sbr.rel target = $region3
  $region8: #{my_lstm_forward.4} parent=0 // loop_exit
    _

// kernel: my_lstm_forward.6
$region0: #{my_lstm_forward.6}
  #allocation0 [shape = 'u32[]', space=smem, size = 0x4, offset = 0x4, fixed_abs, tag = 'smem constant byte address 0x4 - core index']
  #allocation1 [shape = 'u32[144,128]{1,0:T(1,128)}', space=vmem, size = 0x12000, scoped, tag = 'internal scratch']
  %s0 = inlined_call_operand.vmem [shape: bf16[16,64], index: 0, kind: input, shape index: {}]
  %s1 = inlined_call_operand.vmem [shape: bf16[2,64,128], index: 1, kind: input, shape index: {}]
  %s2 = inlined_call_operand.vmem [shape: f32[2,1,128], index: 2, kind: input, shape index: {}]
  %s3 = inlined_call_operand.vmem [shape: bf16[2,16,128], index: 3, kind: output, shape index: {}]
  %s4 = sld [smem:[#allocation0]]
  $region45: #{my_lstm_forward.6} parent=0
    _
  %s6 = ssub.s32 1, %s4
  %s7 = scalar_select 0, %s6, %s4
  loop: start=0, step=1, limit=4
  $region2: #{my_lstm_forward.6} parent=0 // loop_pre_header
    _
  $region3: #{my_lstm_forward.6} parent=0 // loop_header
    %s9 = sphi 0, %s13
    %p10 = scmp.ge.s32.totalorder %s9, 4
    %s17 = sphi 0, %s17
    %s19 = sphi 0, %s17
    %s20 = sphi 0, %s19
    %s34 = sphi 0, %s20
    %s40 = sphi 0, %s42
    %s43 = sphi 0, %s40
    %s44 = sphi 0, %s43
    %s60 = sphi 0, %s44
    %s66 = sphi 0, %s68
    %s69 = sphi 0, %s66
    %s70 = sphi 0, %s69
    %s86 = sphi 0, %s70
    %s92 = sphi 0, %s94
    %s95 = sphi 0, %s92
    %s96 = sphi 0, %s95
    %s112 = sphi 0, %s96
  $region4: #{my_lstm_forward.6} parent=0 // loop_header_branch
    %12 = sbr.rel (%p10) target = $region8
  $region5: #{my_lstm_forward.6} parent=0 // loop_body
    %s14 = ssub.s32 %s9, 1
    %s15 = ssub.s32 %s9, 2
    %s16 = sadd.s32 %s9, 1
    %s18 = sadd.s32 %s17, 1
    %p21 = scmp.eq.s32.totalorder %s9, 1
    %p22 = scmp.ne.s32.totalorder %s17, %s19
    %p23 = scmp.eq.s32.totalorder %s9, 0
    %p24 = por %p22, %p23
    %p25 = scmp.ne.s32.totalorder %s17, %s19
    %p26 = scmp.eq.s32.totalorder %s14, 1
    %p27 = por %p25, %p26
    %p28 = scmp.ne.s32.totalorder %s19, %s20
    %p29 = scmp.eq.s32.totalorder %s14, 0
    %p30 = por %p28, %p29
    %p31 = scmp.ne.s32.totalorder %s19, %s20
    %p32 = scmp.eq.s32.totalorder %s15, 1
    %p33 = por %p31, %p32
    %p35 = scmp.ne.s32.totalorder %s20, %s34
    %p36 = scmp.eq.s32.totalorder %s15, 0
    %p37 = por %p35, %p36
    %s38 = ssub.s32 %s9, %s16
    %p39 = scmp.eq.s32.totalorder %s38, 0
    %s41 = sadd.s32 %s40, 1
    %s42 = scalar_select %p39, %s40, %s41
    %p45 = pneg %p39
    %p46 = scmp.eq.s32.totalorder %s9, 1
    %p47 = por %p45, %p46
    %p48 = scmp.ne.s32.totalorder %s40, %s43
    %p49 = scmp.eq.s32.totalorder %s9, 0
    %p50 = por %p48, %p49
    %p51 = scmp.ne.s32.totalorder %s40, %s43
    %p52 = scmp.eq.s32.totalorder %s14, 1
    %p53 = por %p51, %p52
    %p54 = scmp.ne.s32.totalorder %s43, %s44
    %p55 = scmp.eq.s32.totalorder %s14, 0
    %p56 = por %p54, %p55
    %p57 = scmp.ne.s32.totalorder %s43, %s44
    %p58 = scmp.eq.s32.totalorder %s15, 1
    %p59 = por %p57, %p58
    %p61 = scmp.ne.s32.totalorder %s44, %s60
    %p62 = scmp.eq.s32.totalorder %s15, 0
    %p63 = por %p61, %p62
    %s64 = ssub.s32 %s9, %s16
    %p65 = scmp.eq.s32.totalorder %s64, 0
    %s67 = sadd.s32 %s66, 1
    %s68 = scalar_select %p65, %s66, %s67
    %p71 = pneg %p65
    %p72 = scmp.eq.s32.totalorder %s9, 1
    %p73 = por %p71, %p72
    %p74 = scmp.ne.s32.totalorder %s66, %s69
    %p75 = scmp.eq.s32.totalorder %s9, 0
    %p76 = por %p74, %p75
    %p77 = scmp.ne.s32.totalorder %s66, %s69
    %p78 = scmp.eq.s32.totalorder %s14, 1
    %p79 = por %p77, %p78
    %p80 = scmp.ne.s32.totalorder %s69, %s70
    %p81 = scmp.eq.s32.totalorder %s14, 0
    %p82 = por %p80, %p81
    %p83 = scmp.ne.s32.totalorder %s69, %s70
    %p84 = scmp.eq.s32.totalorder %s15, 1
    %p85 = por %p83, %p84
    %p87 = scmp.ne.s32.totalorder %s70, %s86
    %p88 = scmp.eq.s32.totalorder %s15, 0
    %p89 = por %p87, %p88
    %s90 = ssub.s32 %s9, %s16
    %p91 = scmp.eq.s32.totalorder %s90, 0
    %s93 = sadd.s32 %s92, 1
    %s94 = scalar_select %p91, %s92, %s93
    %p97 = pneg %p91
    %p98 = scmp.eq.s32.totalorder %s9, 1
    %p99 = por %p97, %p98
    %p100 = scmp.ne.s32.totalorder %s92, %s95
    %p101 = scmp.eq.s32.totalorder %s9, 0
    %p102 = por %p100, %p101
    %p103 = scmp.ne.s32.totalorder %s92, %s95
    %p104 = scmp.eq.s32.totalorder %s14, 1
    %p105 = por %p103, %p104
    %p106 = scmp.ne.s32.totalorder %s95, %s96
    %p107 = scmp.eq.s32.totalorder %s14, 0
    %p108 = por %p106, %p107
    %p109 = scmp.ne.s32.totalorder %s95, %s96
    %p110 = scmp.eq.s32.totalorder %s15, 1
    %p111 = por %p109, %p110
    %p113 = scmp.ne.s32.totalorder %s96, %s112
    %p114 = scmp.eq.s32.totalorder %s15, 0
    %p115 = por %p113, %p114
    %p116 = scmp.le.s32.totalorder 1, %s9
    %p117 = scmp.lt.s32.totalorder %s9, 3
    %p118 = pnand %p116, %p117
    %p119 = pneg %p118
    // Predicated region
    $region9: #{my_lstm_forward.6} parent=5 // pred_check
      _
    $region10: #{my_lstm_forward.6} parent=5 // pred_check_branch
      %121 = sbr.rel (%p118) target = $region12
    $region11: #{my_lstm_forward.6} parent=5 // pred_region
      %s122 = ssub.s32 %s9, 1
      // Predicated region
      $region13: #{my_lstm_forward.6} parent=11 // pred_check
        %p123 = pneg %p30
      $region14: #{my_lstm_forward.6} parent=11 // pred_check_branch
        %125 = sbr.rel (%p123) target = $region16
      $region15: #{my_lstm_forward.6} parent=11 // pred_region
        _
      $region16: #{my_lstm_forward.6} parent=11 // pred_fallthru
        _
    $region12: #{my_lstm_forward.6} parent=5 // pred_fallthru
      _
    %p126 = scmp.lt.s32.totalorder %s9, 2
    // Predicated region
    $region17: #{my_lstm_forward.6} parent=5 // pred_check
      %p127 = pneg %p126
    $region18: #{my_lstm_forward.6} parent=5 // pred_check_branch
      %129 = sbr.rel (%p127) target = $region20
    $region19: #{my_lstm_forward.6} parent=5 // pred_region
      // Predicated region
      $region21: #{my_lstm_forward.6} parent=19 // pred_check
        %p130 = pneg %p50
      $region22: #{my_lstm_forward.6} parent=19 // pred_check_branch
        %132 = sbr.rel (%p130) target = $region24
      $region23: #{my_lstm_forward.6} parent=19 // pred_region
        %p133 = scmp.lt.s32.totalorder %s9, 1
        %s134 = scalar_select %p133, %s9, 1
        %s135 = smul.addr %s134, 8
        %s136 = smul.addr %s135, 4
        %s137 = scalar_lea.vmem %s1, %s136
      $region24: #{my_lstm_forward.6} parent=19 // pred_fallthru
        _
      // Predicated region
      $region25: #{my_lstm_forward.6} parent=19 // pred_check
        %p138 = pneg %p76
      $region26: #{my_lstm_forward.6} parent=19 // pred_check_branch
        %140 = sbr.rel (%p138) target = $region28
      $region27: #{my_lstm_forward.6} parent=19 // pred_region
        %p141 = scmp.lt.s32.totalorder %s9, 1
        %s142 = scalar_select %p141, %s9, 1
        %s143 = scalar_lea.vmem %s2, %s142
      $region28: #{my_lstm_forward.6} parent=19 // pred_fallthru
        _
    $region20: #{my_lstm_forward.6} parent=5 // pred_fallthru
      _
    %p144 = scmp.le.s32.totalorder 1, %s9
    %p145 = scmp.lt.s32.totalorder %s9, 3
    %p146 = pnand %p144, %p145
    %p147 = pneg %p146
    // Predicated region
    $region29: #{my_lstm_forward.6} parent=5 // pred_check
      _
    $region30: #{my_lstm_forward.6} parent=5 // pred_check_branch
      %149 = sbr.rel (%p146) target = $region32
    $region31: #{my_lstm_forward.6} parent=5 // pred_region
      %s150 = ssub.s32 %s9, 1
      %p151 = pneg %p30
      %p152 = pneg %p27
      %p153 = scmp.lt.s32.totalorder %s14, 1
      %s154 = scalar_select %p153, %s14, 1
      %s155 = smul.addr %s154, 8
      %s156 = smul.addr %s155, 4
      %s157 = scalar_lea.vmem %s1, %s156
      %p158 = pneg %p56
      %p159 = pneg %p53
      %p160 = scmp.lt.s32.totalorder %s14, 1
      %s161 = scalar_select %p160, %s14, 1
      %s162 = scalar_lea.vmem %s2, %s161
      %p163 = pneg %p82
      %p164 = pneg %p79
      %p165 = pneg %p108
      %p166 = pneg %p105
      %p167 = scmp.lt.s32.totalorder %s14, 1
      %s168 = scalar_select %p167, %s14, 1
      %s169 = smul.addr %s168, 2
      %s170 = smul.addr %s169, 4
      %s171 = scalar_lea.vmem %s3, %s170
      %p172 = scmp.lt.s32.totalorder %s14, 1
      %s173 = scalar_select %p172, %s14, 1
      %s174 = smul.addr %s173, 8
      %s175 = smul.addr %s174, 4
      %s176 = scalar_lea.vmem %s1, %s175
      %p177 = scmp.lt.s32.totalorder %s14, 1
      %s178 = scalar_select %p177, %s14, 1
      %s179 = scalar_lea.vmem %s2, %s178
      %p180 = scmp.lt.s32.totalorder %s14, 1
      %s181 = scalar_select %p180, %s14, 1
      %s182 = smul.addr %s181, 2
      %s183 = smul.addr %s182, 4
      %s184 = scalar_lea.vmem %s3, %s183
      %v186 = vld [vmem:[%s0] sm:$0xf]
      %v187 = vld [vmem:[%s0 + $0x4] sm:$0xf]
      %v188 = vld [vmem:[%s176] sm:$0xf]
      %v189 = vld [vmem:[%s176 + $0x4] sm:$0xf]
      %v190 = vld [vmem:[%s176 + $0x8] sm:$0xf]
      %v191 = vld [vmem:[%s176 + $0xc] sm:$0xf]
      %v192 = vld [vmem:[%s176 + $0x10] sm:$0xf]
      %v193 = vld [vmem:[%s176 + $0x14] sm:$0xf]
      %v194 = vld [vmem:[%s176 + $0x18] sm:$0xf]
      %v195 = vld [vmem:[%s176 + $0x1c] sm:$0xf]
      %v196 = vld [vmem:[%s179] sm:$0x1]
      %v198 = vlaneseq
      %v199 = vshrl.u32 %v198, 7
      %v200 = vsub.s32 0, %v199
      %v201 = vrot.slane %v196, %v200
      %v205 = vunpack.c.l.b16 %v186
      %v206 = vunpack.c.l.b16 %v187
      %v207 = vpack.c.b16 %v206, %v205
      %v216 = vunpack.c.l.b16 %v188
      %v217 = vunpack.c.l.b16 %v189
      %v218 = vunpack.c.l.b16 %v190
      %v219 = vunpack.c.l.b16 %v191
      %v220 = vunpack.c.l.b16 %v192
      %v221 = vunpack.c.l.b16 %v193
      %v222 = vunpack.c.l.b16 %v194
      %v223 = vunpack.c.l.b16 %v195
      %v224 = vpack.c.b16 %v217, %v216
      %v225 = vpack.c.b16 %v219, %v218
      %v226 = vpack.c.b16 %v221, %v220
      %v227 = vpack.c.b16 %v223, %v222
      %vm232 = vcmask 523264
      %v234 = vsel %vm232, %v207, 0
      %236 = vmatprep.subr.bf16.mxu0 0
      %237 = vmatpush1.bf16.msra.mxu0 %v224
      %238 = vmatprep.subr.bf16.mxu0 0
      %239 = vmatpush1.bf16.msra.mxu0 %v225
      %240 = vmatprep.subr.bf16.mxu0 0
      %241 = vmatpush1.bf16.msra.mxu0 %v226
      %242 = vmatprep.subr.bf16.mxu0 0
      %243 = vmatpush1.bf16.msra.mxu0 %v227
      %244 = vmatprep.subr.bf16.mxu0 0
      %245 = vmatpush1.bf16.msra.mxu0 0
      %246 = vmatprep.subr.bf16.mxu0 0
      %247 = vmatpush1.bf16.msra.mxu0 0
      %248 = vmatprep.subr.bf16.mxu0 0
      %249 = vmatpush1.bf16.msra.mxu0 0
      %250 = vmatprep.subr.bf16.mxu0 0
      %251 = vmatpush1.bf16.msra.mxu0 0
      %252 = vmatprep.subr.bf16.mxu0 0
      %253 = vmatpush1.bf16.msra.mxu0 0
      %254 = vmatprep.subr.bf16.mxu0 0
      %255 = vmatpush1.bf16.msra.mxu0 0
      %256 = vmatprep.subr.bf16.mxu0 0
      %257 = vmatpush1.bf16.msra.mxu0 0
      %258 = vmatprep.subr.bf16.mxu0 0
      %259 = vmatpush1.bf16.msra.mxu0 0
      %260 = vmatprep.subr.bf16.mxu0 0
      %261 = vmatpush1.bf16.msra.mxu0 0
      %262 = vmatprep.subr.bf16.mxu0 0
      %263 = vmatpush1.bf16.msra.mxu0 0
      %264 = vmatprep.subr.bf16.mxu0 0
      %265 = vmatpush1.bf16.msra.mxu0 0
      %266 = vmatprep.subr.bf16.mxu0 0
      %267 = vmatpush1.bf16.msra.mxu0 0
      %268 = vmatprep.mubr.bf16.mxu0 0
      %269 = vmatmul.mubr.bf16.gmra.mrb[0].mxu0 %v234
      %v270 = vpop.f32.mrb[0].mxu0
      %v271 = vadd.f32 %v201, %v270
      %v272 = vpop.f32.mrb[0].mxu0
      %v273 = vpop.f32.mrb[0].mxu0
      %v274 = vadd.f32 %v201, %v273
      %v275 = vpop.f32.mrb[0].mxu0
      %276 = vdwg.mxu0
      %v277 = vpack.c.bf16 %v274, %v271
      %v279 = vunpack.c.l.b16 %v277
      %v280 = vunpack.c.h.b16 %v277
      %v281 = vpack.c.b16 %v279, %v279
      %v282 = vpack.c.b16 %v280, %v280
      %285 = vst [vmem:[%s184] sm:$0xf] %v281
      %286 = vst [vmem:[%s184 + $0x4] sm:$0xf] %v282
      %p287 = scmp.lt.s32.totalorder %s14, 1
      %s288 = scalar_select %p287, %s14, 1
      %s289 = smul.addr %s288, 2
      %s290 = smul.addr %s289, 4
      %s291 = scalar_lea.vmem %s3, %s290
      // Predicated region
      $region33: #{my_lstm_forward.6} parent=31 // pred_check
        %p292 = pneg %p105
      $region34: #{my_lstm_forward.6} parent=31 // pred_check_branch
        %294 = sbr.rel (%p292) target = $region36
      $region35: #{my_lstm_forward.6} parent=31 // pred_region
        _
      $region36: #{my_lstm_forward.6} parent=31 // pred_fallthru
        _
    $region32: #{my_lstm_forward.6} parent=5 // pred_fallthru
      _
    %p295 = scmp.le.s32.totalorder 2, %s9
    // Predicated region
    $region37: #{my_lstm_forward.6} parent=5 // pred_check
      %p296 = pneg %p295
    $region38: #{my_lstm_forward.6} parent=5 // pred_check_branch
      %298 = sbr.rel (%p296) target = $region40
    $region39: #{my_lstm_forward.6} parent=5 // pred_region
      %s299 = ssub.s32 %s9, 2
      // Predicated region
      $region41: #{my_lstm_forward.6} parent=39 // pred_check
        %p300 = pneg %p111
      $region42: #{my_lstm_forward.6} parent=39 // pred_check_branch
        %302 = sbr.rel (%p300) target = $region44
      $region43: #{my_lstm_forward.6} parent=39 // pred_region
        %p303 = scmp.lt.s32.totalorder %s15, 1
        %s304 = scalar_select %p303, %s15, 1
        %s305 = smul.addr %s304, 2
        %s306 = smul.addr %s305, 4
        %s307 = scalar_lea.vmem %s3, %s306
      $region44: #{my_lstm_forward.6} parent=39 // pred_fallthru
        _
    $region40: #{my_lstm_forward.6} parent=5 // pred_fallthru
      _
  $region6: #{my_lstm_forward.6} parent=0 // loop_footer
    %s13 = sadd.s32 1, %s9
  $region7: #{my_lstm_forward.6} parent=0 // loop_footer_branch
    %8 = sbr.rel target = $region3
  $region8: #{my_lstm_forward.6} parent=0 // loop_exit
    _

// kernel: my_lstm_forward.5
$region0: #{my_lstm_forward.5}
  #allocation0 [shape = 'u32[]', space=smem, size = 0x4, offset = 0x4, fixed_abs, tag = 'smem constant byte address 0x4 - core index']
  #allocation1 [shape = 'u32[144,128]{1,0:T(1,128)}', space=vmem, size = 0x12000, scoped, tag = 'internal scratch']
  #allocation2 [shape = 'f32[2,32]{1,0:T(2,128)}', space=vmem, size = 0x400, scoped, tag = 'scratch operand']
  #allocation3 [shape = 'f32[2,32]{1,0:T(2,128)}', space=vmem, size = 0x400, scoped, tag = 'scratch operand']
  %s0 = inlined_call_operand.vmem [shape: bf16[2,8,2,128], index: 0, kind: input, shape index: {}]
  %s1 = inlined_call_operand.vmem [shape: f32[8,2,1], index: 1, kind: input, shape index: {}]
  %s2 = inlined_call_operand.vmem [shape: bf16[2,32,128], index: 2, kind: input, shape index: {}]
  %s3 = inlined_call_operand.vmem [shape: f32[2,8,2,32], index: 3, kind: output, shape index: {0}]
  %s4 = inlined_call_operand.vmem [shape: f32[2,2,32], index: 4, kind: output, shape index: {1}]
  %5 = xla_tuple %s3, %s4
  %s6 = sld [smem:[#allocation0]]
  $region61: #{my_lstm_forward.5} parent=0
    _
  %s8 = ssub.s32 1, %s6
  %s9 = scalar_select 0, %s8, %s6
  loop: start=0, step=1, limit=4
  $region2: #{my_lstm_forward.5} parent=0 // loop_pre_header
    _
  $region3: #{my_lstm_forward.5} parent=0 // loop_header
    %s11 = sphi 0, %s15
    %p12 = scmp.ge.s32.totalorder %s11, 4
    %s18 = sphi 0, %s30
    %s19 = sphi 0, %s26
    %s20 = sphi 0, %s18
    %s21 = sphi 0, %s19
    %s22 = sphi 0, %s20
    %s23 = sphi 0, %s21
    %s45 = sphi 0, %s47
    %s48 = sphi 0, %s45
    %s49 = sphi 0, %s48
    %s65 = sphi 0, %s49
    %s81 = sphi 0, %s83
    %s84 = sphi 0, %s81
    %s85 = sphi 0, %s84
    %s101 = sphi 0, %s85
    %s107 = sphi 0, %s109
    %s110 = sphi 0, %s107
    %s111 = sphi 0, %s110
    %s127 = sphi 0, %s111
    %s145 = sphi 0, %s147
    %s148 = sphi 0, %s145
    %s149 = sphi 0, %s148
    %s165 = sphi 0, %s149
    %s171 = sphi 0, %s173
    %s174 = sphi 0, %s171
    %s175 = sphi 0, %s174
    %s191 = sphi 0, %s175
  $region4: #{my_lstm_forward.5} parent=0 // loop_header_branch
    %14 = sbr.rel (%p12) target = $region8
  $region5: #{my_lstm_forward.5} parent=0 // loop_body
    %s16 = ssub.s32 %s11, 1
    %s17 = ssub.s32 %s11, 2
    %s24 = sadd.s32 1, %s19
    %p25 = scmp.ge.s32.totalorder %s24, 1
    %s26 = scalar_select %p25, 0, %s24
    %s27 = sadd.s32 1, %s18
    %s28 = scalar_select %p25, %s27, %s18
    %p29 = scmp.ge.s32.totalorder %s28, 2
    %s30 = scalar_select %p29, 0, %s28
    %s31 = ssub.s32 1, %s18
    %s32 = smul.u32 %s19, %s31
    %s33 = ssub.s32 0, %s19
    %s34 = smul.u32 %s33, %s18
    %s35 = sadd.s32 %s32, %s34
    %s36 = ssub.s32 1, %s30
    %s37 = smul.u32 %s26, %s36
    %s38 = ssub.s32 0, %s26
    %s39 = smul.u32 %s38, %s30
    %s40 = sadd.s32 %s37, %s39
    %s41 = ssub.s32 %s18, %s30
    %s42 = ssub.s32 %s35, %s40
    %s43 = sor.u32 %s41, %s42
    %p44 = scmp.eq.s32.totalorder %s43, 0
    %s46 = sadd.s32 %s45, 1
    %s47 = scalar_select %p44, %s45, %s46
    %p50 = pneg %p44
    %p51 = scmp.eq.s32.totalorder %s11, 1
    %p52 = por %p50, %p51
    %p53 = scmp.ne.s32.totalorder %s45, %s48
    %p54 = scmp.eq.s32.totalorder %s11, 0
    %p55 = por %p53, %p54
    %p56 = scmp.ne.s32.totalorder %s45, %s48
    %p57 = scmp.eq.s32.totalorder %s16, 1
    %p58 = por %p56, %p57
    %p59 = scmp.ne.s32.totalorder %s48, %s49
    %p60 = scmp.eq.s32.totalorder %s16, 0
    %p61 = por %p59, %p60
    %p62 = scmp.ne.s32.totalorder %s48, %s49
    %p63 = scmp.eq.s32.totalorder %s17, 1
    %p64 = por %p62, %p63
    %p66 = scmp.ne.s32.totalorder %s49, %s65
    %p67 = scmp.eq.s32.totalorder %s17, 0
    %p68 = por %p66, %p67
    %s69 = ssub.s32 1, %s18
    %s70 = smul.u32 %s19, %s69
    %s71 = ssub.s32 0, %s19
    %s72 = smul.u32 %s71, %s18
    %s73 = sadd.s32 %s70, %s72
    %s74 = ssub.s32 1, %s30
    %s75 = smul.u32 %s26, %s74
    %s76 = ssub.s32 0, %s26
    %s77 = smul.u32 %s76, %s30
    %s78 = sadd.s32 %s75, %s77
    %s79 = ssub.s32 %s73, %s78
    %p80 = scmp.eq.s32.totalorder %s79, 0
    %s82 = sadd.s32 %s81, 1
    %s83 = scalar_select %p80, %s81, %s82
    %p86 = pneg %p80
    %p87 = scmp.eq.s32.totalorder %s11, 1
    %p88 = por %p86, %p87
    %p89 = scmp.ne.s32.totalorder %s81, %s84
    %p90 = scmp.eq.s32.totalorder %s11, 0
    %p91 = por %p89, %p90
    %p92 = scmp.ne.s32.totalorder %s81, %s84
    %p93 = scmp.eq.s32.totalorder %s16, 1
    %p94 = por %p92, %p93
    %p95 = scmp.ne.s32.totalorder %s84, %s85
    %p96 = scmp.eq.s32.totalorder %s16, 0
    %p97 = por %p95, %p96
    %p98 = scmp.ne.s32.totalorder %s84, %s85
    %p99 = scmp.eq.s32.totalorder %s17, 1
    %p100 = por %p98, %p99
    %p102 = scmp.ne.s32.totalorder %s85, %s101
    %p103 = scmp.eq.s32.totalorder %s17, 0
    %p104 = por %p102, %p103
    %s105 = ssub.s32 %s18, %s30
    %p106 = scmp.eq.s32.totalorder %s105, 0
    %s108 = sadd.s32 %s107, 1
    %s109 = scalar_select %p106, %s107, %s108
    %p112 = pneg %p106
    %p113 = scmp.eq.s32.totalorder %s11, 1
    %p114 = por %p112, %p113
    %p115 = scmp.ne.s32.totalorder %s107, %s110
    %p116 = scmp.eq.s32.totalorder %s11, 0
    %p117 = por %p115, %p116
    %p118 = scmp.ne.s32.totalorder %s107, %s110
    %p119 = scmp.eq.s32.totalorder %s16, 1
    %p120 = por %p118, %p119
    %p121 = scmp.ne.s32.totalorder %s110, %s111
    %p122 = scmp.eq.s32.totalorder %s16, 0
    %p123 = por %p121, %p122
    %p124 = scmp.ne.s32.totalorder %s110, %s111
    %p125 = scmp.eq.s32.totalorder %s17, 1
    %p126 = por %p124, %p125
    %p128 = scmp.ne.s32.totalorder %s111, %s127
    %p129 = scmp.eq.s32.totalorder %s17, 0
    %p130 = por %p128, %p129
    %s131 = ssub.s32 1, %s18
    %s132 = smul.u32 %s19, %s131
    %s133 = ssub.s32 0, %s19
    %s134 = smul.u32 %s133, %s18
    %s135 = sadd.s32 %s132, %s134
    %s136 = ssub.s32 1, %s30
    %s137 = smul.u32 %s26, %s136
    %s138 = ssub.s32 0, %s26
    %s139 = smul.u32 %s138, %s30
    %s140 = sadd.s32 %s137, %s139
    %s141 = ssub.s32 %s18, %s30
    %s142 = ssub.s32 %s135, %s140
    %s143 = sor.u32 %s141, %s142
    %p144 = scmp.eq.s32.totalorder %s143, 0
    %s146 = sadd.s32 %s145, 1
    %s147 = scalar_select %p144, %s145, %s146
    %p150 = pneg %p144
    %p151 = scmp.eq.s32.totalorder %s11, 1
    %p152 = por %p150, %p151
    %p153 = scmp.ne.s32.totalorder %s145, %s148
    %p154 = scmp.eq.s32.totalorder %s11, 0
    %p155 = por %p153, %p154
    %p156 = scmp.ne.s32.totalorder %s145, %s148
    %p157 = scmp.eq.s32.totalorder %s16, 1
    %p158 = por %p156, %p157
    %p159 = scmp.ne.s32.totalorder %s148, %s149
    %p160 = scmp.eq.s32.totalorder %s16, 0
    %p161 = por %p159, %p160
    %p162 = scmp.ne.s32.totalorder %s148, %s149
    %p163 = scmp.eq.s32.totalorder %s17, 1
    %p164 = por %p162, %p163
    %p166 = scmp.ne.s32.totalorder %s149, %s165
    %p167 = scmp.eq.s32.totalorder %s17, 0
    %p168 = por %p166, %p167
    %s169 = ssub.s32 %s18, %s30
    %p170 = scmp.eq.s32.totalorder %s169, 0
    %s172 = sadd.s32 %s171, 1
    %s173 = scalar_select %p170, %s171, %s172
    %p176 = pneg %p170
    %p177 = scmp.eq.s32.totalorder %s11, 1
    %p178 = por %p176, %p177
    %p179 = scmp.ne.s32.totalorder %s171, %s174
    %p180 = scmp.eq.s32.totalorder %s11, 0
    %p181 = por %p179, %p180
    %p182 = scmp.ne.s32.totalorder %s171, %s174
    %p183 = scmp.eq.s32.totalorder %s16, 1
    %p184 = por %p182, %p183
    %p185 = scmp.ne.s32.totalorder %s174, %s175
    %p186 = scmp.eq.s32.totalorder %s16, 0
    %p187 = por %p185, %p186
    %p188 = scmp.ne.s32.totalorder %s174, %s175
    %p189 = scmp.eq.s32.totalorder %s17, 1
    %p190 = por %p188, %p189
    %p192 = scmp.ne.s32.totalorder %s175, %s191
    %p193 = scmp.eq.s32.totalorder %s17, 0
    %p194 = por %p192, %p193
    %p195 = scmp.le.s32.totalorder 1, %s11
    %p196 = scmp.lt.s32.totalorder %s11, 3
    %p197 = pnand %p195, %p196
    %p198 = pneg %p197
    // Predicated region
    $region9: #{my_lstm_forward.5} parent=5 // pred_check
      _
    $region10: #{my_lstm_forward.5} parent=5 // pred_check_branch
      %200 = sbr.rel (%p197) target = $region12
    $region11: #{my_lstm_forward.5} parent=5 // pred_region
      %s201 = ssub.s32 %s11, 1
    $region12: #{my_lstm_forward.5} parent=5 // pred_fallthru
      _
    %p202 = scmp.lt.s32.totalorder %s11, 2
    // Predicated region
    $region13: #{my_lstm_forward.5} parent=5 // pred_check
      %p203 = pneg %p202
    $region14: #{my_lstm_forward.5} parent=5 // pred_check_branch
      %205 = sbr.rel (%p203) target = $region16
    $region15: #{my_lstm_forward.5} parent=5 // pred_region
      // Predicated region
      $region17: #{my_lstm_forward.5} parent=15 // pred_check
        %p206 = pneg %p55
      $region18: #{my_lstm_forward.5} parent=15 // pred_check_branch
        %208 = sbr.rel (%p206) target = $region20
      $region19: #{my_lstm_forward.5} parent=15 // pred_region
        %s209 = ssub.s32 1, %s18
        %s210 = smul.u32 %s19, %s209
        %s211 = ssub.s32 0, %s19
        %s212 = smul.u32 %s211, %s18
        %s213 = sadd.s32 %s210, %s212
        %s214 = smul.u32 8, %s213
        %p215 = scmp.lt.s32.totalorder %s18, 1
        %s216 = scalar_select %p215, %s18, 1
        %p217 = scmp.lt.s32.totalorder %s214, 7
        %s218 = scalar_select %p217, %s214, 7
        %s219 = smul.addr %s216, 8
        %s220 = sadd.s32 %s218, %s219
        %s221 = scalar_lea.vmem %s0, %s220
        %s222 = ssub.s32 1, %s18
        %s223 = smul.u32 %s19, %s222
        %s224 = ssub.s32 0, %s19
        %s225 = smul.u32 %s224, %s18
        %s226 = sadd.s32 %s223, %s225
        %s227 = smul.u32 8, %s226
      $region20: #{my_lstm_forward.5} parent=15 // pred_fallthru
        _
      // Predicated region
      $region21: #{my_lstm_forward.5} parent=15 // pred_check
        %p228 = pneg %p91
      $region22: #{my_lstm_forward.5} parent=15 // pred_check_branch
        %230 = sbr.rel (%p228) target = $region24
      $region23: #{my_lstm_forward.5} parent=15 // pred_region
        %s231 = ssub.s32 1, %s18
        %s232 = smul.u32 %s19, %s231
        %s233 = ssub.s32 0, %s19
        %s234 = smul.u32 %s233, %s18
        %s235 = sadd.s32 %s232, %s234
        %s236 = smul.u32 8, %s235
        %p237 = scmp.lt.s32.totalorder %s236, 7
        %s238 = scalar_select %p237, %s236, 7
        %s239 = smul.addr %s238, 2
        %s240 = scalar_lea.vmem %s1, %s239
        %s241 = ssub.s32 1, %s18
        %s242 = smul.u32 %s19, %s241
        %s243 = ssub.s32 0, %s19
        %s244 = smul.u32 %s243, %s18
        %s245 = sadd.s32 %s242, %s244
        %s246 = smul.u32 8, %s245
      $region24: #{my_lstm_forward.5} parent=15 // pred_fallthru
        _
      // Predicated region
      $region25: #{my_lstm_forward.5} parent=15 // pred_check
        %p247 = pneg %p117
      $region26: #{my_lstm_forward.5} parent=15 // pred_check_branch
        %249 = sbr.rel (%p247) target = $region28
      $region27: #{my_lstm_forward.5} parent=15 // pred_region
        %p250 = scmp.lt.s32.totalorder %s18, 1
        %s251 = scalar_select %p250, %s18, 1
        %s252 = smul.addr %s251, 4
        %s253 = smul.addr %s252, 4
        %s254 = scalar_lea.vmem %s2, %s253
      $region28: #{my_lstm_forward.5} parent=15 // pred_fallthru
        _
    $region16: #{my_lstm_forward.5} parent=5 // pred_fallthru
      _
    %p255 = scmp.le.s32.totalorder 1, %s11
    %p256 = scmp.lt.s32.totalorder %s11, 3
    %p257 = pnand %p255, %p256
    %p258 = pneg %p257
    // Predicated region
    $region29: #{my_lstm_forward.5} parent=5 // pred_check
      _
    $region30: #{my_lstm_forward.5} parent=5 // pred_check_branch
      %260 = sbr.rel (%p257) target = $region32
    $region31: #{my_lstm_forward.5} parent=5 // pred_region
      %s261 = ssub.s32 %s11, 1
      %s262 = ssub.s32 1, %s20
      %s263 = smul.u32 %s21, %s262
      %s264 = ssub.s32 0, %s21
      %s265 = smul.u32 %s264, %s20
      %s266 = sadd.s32 %s263, %s265
      %s267 = smul.u32 8, %s266
      %p268 = scmp.lt.s32.totalorder %s20, 1
      %s269 = scalar_select %p268, %s20, 1
      %p270 = scmp.lt.s32.totalorder %s267, 7
      %s271 = scalar_select %p270, %s267, 7
      %s272 = smul.addr %s269, 8
      %s273 = sadd.s32 %s271, %s272
      %s274 = scalar_lea.vmem %s0, %s273
      %p275 = pneg %p61
      %p276 = pneg %p58
      %s277 = ssub.s32 1, %s20
      %s278 = smul.u32 %s21, %s277
      %s279 = ssub.s32 0, %s21
      %s280 = smul.u32 %s279, %s20
      %s281 = sadd.s32 %s278, %s280
      %s282 = smul.u32 8, %s281
      %p283 = scmp.lt.s32.totalorder %s282, 7
      %s284 = scalar_select %p283, %s282, 7
      %s285 = smul.addr %s284, 2
      %s286 = scalar_lea.vmem %s1, %s285
      %p287 = pneg %p97
      %p288 = pneg %p94
      %p289 = scmp.lt.s32.totalorder %s20, 1
      %s290 = scalar_select %p289, %s20, 1
      %s291 = smul.addr %s290, 4
      %s292 = smul.addr %s291, 4
      %s293 = scalar_lea.vmem %s2, %s292
      %p294 = pneg %p123
      %p295 = pneg %p120
      %p296 = pneg %p161
      %p297 = pneg %p158
      %s298 = ssub.s32 1, %s20
      %s299 = smul.u32 %s21, %s298
      %s300 = ssub.s32 0, %s21
      %s301 = smul.u32 %s300, %s20
      %s302 = sadd.s32 %s299, %s301
      %s303 = smul.u32 8, %s302
      %p304 = scmp.lt.s32.totalorder %s20, 1
      %s305 = scalar_select %p304, %s20, 1
      %p306 = scmp.lt.s32.totalorder %s303, 7
      %s307 = scalar_select %p306, %s303, 7
      %s308 = smul.addr %s305, 8
      %s309 = sadd.s32 %s307, %s308
      %s310 = smul.addr %s309, 2
      %s311 = scalar_lea.vmem %s3, %s310
      %p312 = pneg %p187
      %p313 = pneg %p184
      %p314 = scmp.lt.s32.totalorder %s20, 1
      %s315 = scalar_select %p314, %s20, 1
      %s316 = smul.addr %s315, 2
      %s317 = scalar_lea.vmem %s4, %s316
      %s318 = ssub.s32 1, %s20
      %s319 = smul.u32 %s21, %s318
      %s320 = ssub.s32 0, %s21
      %s321 = smul.u32 %s320, %s20
      %s322 = sadd.s32 %s319, %s321
      %s323 = smul.u32 8, %s322
      %p324 = scmp.lt.s32.totalorder %s20, 1
      %s325 = scalar_select %p324, %s20, 1
      %p326 = scmp.lt.s32.totalorder %s323, 7
      %s327 = scalar_select %p326, %s323, 7
      %s328 = smul.addr %s325, 8
      %s329 = sadd.s32 %s327, %s328
      %s330 = scalar_lea.vmem %s0, %s329
      %s331 = ssub.s32 1, %s20
      %s332 = smul.u32 %s21, %s331
      %s333 = ssub.s32 0, %s21
      %s334 = smul.u32 %s333, %s20
      %s335 = sadd.s32 %s332, %s334
      %s336 = smul.u32 8, %s335
      %s337 = ssub.s32 1, %s20
      %s338 = smul.u32 %s21, %s337
      %s339 = ssub.s32 0, %s21
      %s340 = smul.u32 %s339, %s20
      %s341 = sadd.s32 %s338, %s340
      %s342 = smul.u32 8, %s341
      %p343 = scmp.lt.s32.totalorder %s342, 7
      %s344 = scalar_select %p343, %s342, 7
      %s345 = smul.addr %s344, 2
      %s346 = scalar_lea.vmem %s1, %s345
      %s347 = ssub.s32 1, %s20
      %s348 = smul.u32 %s21, %s347
      %s349 = ssub.s32 0, %s21
      %s350 = smul.u32 %s349, %s20
      %s351 = sadd.s32 %s348, %s350
      %s352 = smul.u32 8, %s351
      %p353 = scmp.lt.s32.totalorder %s20, 1
      %s354 = scalar_select %p353, %s20, 1
      %s355 = smul.addr %s354, 4
      %s356 = smul.addr %s355, 4
      %s357 = scalar_lea.vmem %s2, %s356
      %s358 = ssub.s32 1, %s20
      %s359 = smul.u32 %s21, %s358
      %s360 = ssub.s32 0, %s21
      %s361 = smul.u32 %s360, %s20
      %s362 = sadd.s32 %s359, %s361
      %s363 = smul.u32 8, %s362
      %p364 = scmp.lt.s32.totalorder %s20, 1
      %s365 = scalar_select %p364, %s20, 1
      %p366 = scmp.lt.s32.totalorder %s363, 7
      %s367 = scalar_select %p366, %s363, 7
      %s368 = smul.addr %s365, 8
      %s369 = sadd.s32 %s367, %s368
      %s370 = smul.addr %s369, 2
      %s371 = scalar_lea.vmem %s3, %s370
      %s372 = ssub.s32 1, %s20
      %s373 = smul.u32 %s21, %s372
      %s374 = ssub.s32 0, %s21
      %s375 = smul.u32 %s374, %s20
      %s376 = sadd.s32 %s373, %s375
      %s377 = smul.u32 8, %s376
      %p378 = scmp.lt.s32.totalorder %s20, 1
      %s379 = scalar_select %p378, %s20, 1
      %s380 = smul.addr %s379, 2
      %s381 = scalar_lea.vmem %s4, %s380
      %p383 = scmp.eq.s32.totalorder %s21, 0
      // Predicated region
      $region33: #{my_lstm_forward.5} parent=31 // pred_check
        %p384 = pneg %p383
      $region34: #{my_lstm_forward.5} parent=31 // pred_check_branch
        %386 = sbr.rel (%p384) target = $region36
      $region35: #{my_lstm_forward.5} parent=31 // pred_region
        %vm387 = vcmask 254976
        %388 = vst.msk [vmem:[#allocation2] sm:$0x3] %vm387, 0.0
        %389 = vst.msk [vmem:[#allocation3] sm:$0x3] %vm387, 0.0
      $region36: #{my_lstm_forward.5} parent=31 // pred_fallthru
        _
      %v390 = vld [vmem:[%s357] sm:$0xf]
      %v391 = vld [vmem:[%s357 + $0x4] sm:$0xf]
      %v392 = vld [vmem:[%s357 + $0x8] sm:$0xf]
      %v393 = vld [vmem:[%s357 + $0xc] sm:$0xf]
      %s394 = smul.u32 %s20, 7
      %s395 = scalar_lea.vmem %s330, %s394
      %v396 = vld [vmem:[%s395] sm:$0x1]
      %v397 = vunpack.c.l.bf16 %v396
      %v398 = vld [vmem:[#allocation2] sm:$0x3]
      %v399 = vld [vmem:[#allocation3] sm:$0x3]
      %v400 = vpack.c.bf16 %v398, %v398
      %v405 = vunpack.c.l.b16 %v390
      %v406 = vunpack.c.l.b16 %v391
      %v407 = vunpack.c.l.b16 %v392
      %v408 = vunpack.c.l.b16 %v393
      %v409 = vpack.c.b16 %v406, %v405
      %v410 = vpack.c.b16 %v408, %v407
      %vm413 = vcmask 261120
      %v415 = vsel %vm413, %v400, 0
      %417 = vmatprep.subr.bf16.mxu0 0
      %418 = vmatpush1.bf16.msra.mxu0 %v409
      %419 = vmatprep.subr.bf16.mxu0 0
      %420 = vmatpush1.bf16.msra.mxu0 %v410
      %421 = vmatprep.subr.bf16.mxu0 0
      %422 = vmatpush1.bf16.msra.mxu0 0
      %423 = vmatprep.subr.bf16.mxu0 0
      %424 = vmatpush1.bf16.msra.mxu0 0
      %425 = vmatprep.subr.bf16.mxu0 0
      %426 = vmatpush1.bf16.msra.mxu0 0
      %427 = vmatprep.subr.bf16.mxu0 0
      %428 = vmatpush1.bf16.msra.mxu0 0
      %429 = vmatprep.subr.bf16.mxu0 0
      %430 = vmatpush1.bf16.msra.mxu0 0
      %431 = vmatprep.subr.bf16.mxu0 0
      %432 = vmatpush1.bf16.msra.mxu0 0
      %433 = vmatprep.subr.bf16.mxu0 0
      %434 = vmatpush1.bf16.msra.mxu0 0
      %435 = vmatprep.subr.bf16.mxu0 0
      %436 = vmatpush1.bf16.msra.mxu0 0
      %437 = vmatprep.subr.bf16.mxu0 0
      %438 = vmatpush1.bf16.msra.mxu0 0
      %439 = vmatprep.subr.bf16.mxu0 0
      %440 = vmatpush1.bf16.msra.mxu0 0
      %441 = vmatprep.subr.bf16.mxu0 0
      %442 = vmatpush1.bf16.msra.mxu0 0
      %443 = vmatprep.subr.bf16.mxu0 0
      %444 = vmatpush1.bf16.msra.mxu0 0
      %445 = vmatprep.subr.bf16.mxu0 0
      %446 = vmatpush1.bf16.msra.mxu0 0
      %447 = vmatprep.subr.bf16.mxu0 0
      %448 = vmatpush1.bf16.msra.mxu0 0
      %449 = vmatprep.mubr.bf16.mxu0 0
      %450 = vmatmul.mubr.bf16.gmra.mrb[0].mxu0 %v415
      %v451 = vpop.f32.mrb[0].mxu0
      %v452 = vadd.f32 0.0, %v451
      %v453 = vpop.f32.mrb[0].mxu0
      %v454 = vpop.f32.mrb[0].mxu0
      %v455 = vpop.f32.mrb[0].mxu0
      %456 = vdwg.mxu0
      %v457 = vadd.f32 %v397, %v452
      %v458 = vxor.u32 %v457, 2147483648
      %v459 = vmul.f32 %v458, 1.442695
      %v460 = vpow.pop %v459
      %v461 = vadd.f32 %v460, 1.0
      %v462 = vrcp.pop %v461
      %v463 = vmul.f32 1.0, %v462
      %v464 = vtanh.pop %v457
      %v467 = vunpack.c.l.s4 1983009808
      %v468 = vunpack.c.0.s8 %v467
      %v469 = vlaneseq
      %v470 = vshrl.u32 %v469, 7
      %v471 = vsub.s32 %v468, %v470
      %v472 = vrot.slane %v399, %v471
      %473 = vrot.lane.b32.xlu0 %v472, 32
      %v474 = vpop.permute.xlu0 %473
      %v476 = vmul.f32 %v463, %v474
      %478 = vrot.lane.b32.xlu0 %v464, 64
      %v479 = vpop.permute.xlu0 %478
      %v481 = vmul.f32 %v463, %v479
      %483 = vrot.lane.b32.xlu0 %v481, 32
      %v484 = vpop.permute.xlu0 %483
      %v486 = vadd.f32 %v476, %v484
      %v487 = vtanh.pop %v486
      %489 = vrot.lane.b32.xlu0 %v487, 64
      %v490 = vpop.permute.xlu0 %489
      %v492 = vmul.f32 %v463, %v490
      %s493 = smul.u32 %s394, 2
      %s494 = scalar_lea.vmem %s346, %s493
      %v495 = vld [vmem:[%s494] sm:$0x3]
      %vm496 = vcmp.gt.f32.partialorder %v495, 0.0
      %v497 = vsel %vm496, 1, 0
      %498 = vset.pattern.permute.xlu0 0
      %499 = vperm.xlu0 %498, %v497
      %v500 = vpop.permute.xlu0 %499
      %vm501 = vcmp.eq.s32.totalorder %v500, 1
      %v504 = vunpack.c.l.s4 1983009808
      %v505 = vunpack.c.0.s8 %v504
      %v506 = vlaneseq
      %v507 = vshrl.u32 %v506, 7
      %v508 = vsub.s32 %v505, %v507
      %v509 = vrot.slane %v492, %v508
      %510 = vrot.lane.b32.xlu0 %v509, 32
      %v511 = vpop.permute.xlu0 %510
      %v513 = vsel %vm501, %v511, %v398
      %vm514 = vcmask 254976
      %515 = vst.msk [vmem:[#allocation2] sm:$0x3] %vm514, %v513
      %v518 = vunpack.c.l.s4 1983009808
      %v519 = vunpack.c.0.s8 %v518
      %v520 = vlaneseq
      %v521 = vshrl.u32 %v520, 7
      %v522 = vsub.s32 %v519, %v521
      %v523 = vrot.slane %v486, %v522
      %524 = vrot.lane.b32.xlu0 %v523, 96
      %v525 = vpop.permute.xlu0 %524
      %v527 = vsel %vm501, %v525, %v399
      %528 = vst.msk [vmem:[#allocation3] sm:$0x3] %vm514, %v527
      %v529 = vsel %vm501, %v511, 0.0
      %s530 = scalar_lea.vmem %s371, %s493
      %531 = vst.msk [vmem:[%s530] sm:$0x3] %vm514, %v529
      %s532 = smul.u32 %s20, 5
      %s533 = sadd.s32 %s532, 1
      %s534 = scalar_lea.vmem %s330, %s533
      %v535 = vld [vmem:[%s534] sm:$0x1]
      %v536 = vunpack.c.l.bf16 %v535
      %v537 = vld [vmem:[#allocation2] sm:$0x3]
      %v538 = vld [vmem:[#allocation3] sm:$0x3]
      %v539 = vpack.c.bf16 %v537, %v537
      %v541 = vsel %vm413, %v539, 0
      %543 = vmatprep.subr.bf16.mxu0 0
      %544 = vmatpush1.bf16.msra.mxu0 %v409
      %545 = vmatprep.subr.bf16.mxu0 0
      %546 = vmatpush1.bf16.msra.mxu0 %v410
      %547 = vmatprep.subr.bf16.mxu0 0
      %548 = vmatpush1.bf16.msra.mxu0 0
      %549 = vmatprep.subr.bf16.mxu0 0
      %550 = vmatpush1.bf16.msra.mxu0 0
      %551 = vmatprep.subr.bf16.mxu0 0
      %552 = vmatpush1.bf16.msra.mxu0 0
      %553 = vmatprep.subr.bf16.mxu0 0
      %554 = vmatpush1.bf16.msra.mxu0 0
      %555 = vmatprep.subr.bf16.mxu0 0
      %556 = vmatpush1.bf16.msra.mxu0 0
      %557 = vmatprep.subr.bf16.mxu0 0
      %558 = vmatpush1.bf16.msra.mxu0 0
      %559 = vmatprep.subr.bf16.mxu0 0
      %560 = vmatpush1.bf16.msra.mxu0 0
      %561 = vmatprep.subr.bf16.mxu0 0
      %562 = vmatpush1.bf16.msra.mxu0 0
      %563 = vmatprep.subr.bf16.mxu0 0
      %564 = vmatpush1.bf16.msra.mxu0 0
      %565 = vmatprep.subr.bf16.mxu0 0
      %566 = vmatpush1.bf16.msra.mxu0 0
      %567 = vmatprep.subr.bf16.mxu0 0
      %568 = vmatpush1.bf16.msra.mxu0 0
      %569 = vmatprep.subr.bf16.mxu0 0
      %570 = vmatpush1.bf16.msra.mxu0 0
      %571 = vmatprep.subr.bf16.mxu0 0
      %572 = vmatpush1.bf16.msra.mxu0 0
      %573 = vmatprep.subr.bf16.mxu0 0
      %574 = vmatpush1.bf16.msra.mxu0 0
      %575 = vmatprep.mubr.bf16.mxu0 0
      %576 = vmatmul.mubr.bf16.gmra.mrb[0].mxu0 %v541
      %v577 = vpop.f32.mrb[0].mxu0
      %v578 = vadd.f32 0.0, %v577
      %v579 = vpop.f32.mrb[0].mxu0
      %v580 = vpop.f32.mrb[0].mxu0
      %v581 = vpop.f32.mrb[0].mxu0
      %582 = vdwg.mxu0
      %v583 = vadd.f32 %v536, %v578
      %v584 = vxor.u32 %v583, 2147483648
      %v585 = vmul.f32 %v584, 1.442695
      %v586 = vpow.pop %v585
      %v587 = vadd.f32 %v586, 1.0
      %v588 = vrcp.pop %v587
      %v589 = vmul.f32 1.0, %v588
      %v590 = vtanh.pop %v583
      %v593 = vunpack.c.l.s4 1983009808
      %v594 = vunpack.c.0.s8 %v593
      %v595 = vlaneseq
      %v596 = vshrl.u32 %v595, 7
      %v597 = vsub.s32 %v594, %v596
      %v598 = vrot.slane %v538, %v597
      %599 = vrot.lane.b32.xlu0 %v598, 32
      %v600 = vpop.permute.xlu0 %599
      %v602 = vmul.f32 %v589, %v600
      %604 = vrot.lane.b32.xlu0 %v590, 64
      %v605 = vpop.permute.xlu0 %604
      %v607 = vmul.f32 %v589, %v605
      %609 = vrot.lane.b32.xlu0 %v607, 32
      %v610 = vpop.permute.xlu0 %609
      %v612 = vadd.f32 %v602, %v610
      %v613 = vtanh.pop %v612
      %615 = vrot.lane.b32.xlu0 %v613, 64
      %v616 = vpop.permute.xlu0 %615
      %v618 = vmul.f32 %v589, %v616
      %s619 = smul.u32 %s533, 2
      %s620 = scalar_lea.vmem %s346, %s619
      %v621 = vld [vmem:[%s620] sm:$0x3]
      %vm622 = vcmp.gt.f32.partialorder %v621, 0.0
      %v623 = vsel %vm622, 1, 0
      %624 = vset.pattern.permute.xlu0 0
      %625 = vperm.xlu0 %624, %v623
      %v626 = vpop.permute.xlu0 %625
      %vm627 = vcmp.eq.s32.totalorder %v626, 1
      %v630 = vunpack.c.l.s4 1983009808
      %v631 = vunpack.c.0.s8 %v630
      %v632 = vlaneseq
      %v633 = vshrl.u32 %v632, 7
      %v634 = vsub.s32 %v631, %v633
      %v635 = vrot.slane %v618, %v634
      %636 = vrot.lane.b32.xlu0 %v635, 32
      %v637 = vpop.permute.xlu0 %636
      %v639 = vsel %vm627, %v637, %v537
      %640 = vst.msk [vmem:[#allocation2] sm:$0x3] %vm514, %v639
      %v643 = vunpack.c.l.s4 1983009808
      %v644 = vunpack.c.0.s8 %v643
      %v645 = vlaneseq
      %v646 = vshrl.u32 %v645, 7
      %v647 = vsub.s32 %v644, %v646
      %v648 = vrot.slane %v612, %v647
      %649 = vrot.lane.b32.xlu0 %v648, 96
      %v650 = vpop.permute.xlu0 %649
      %v652 = vsel %vm627, %v650, %v538
      %653 = vst.msk [vmem:[#allocation3] sm:$0x3] %vm514, %v652
      %v654 = vsel %vm627, %v637, 0.0
      %s655 = scalar_lea.vmem %s371, %s619
      %656 = vst.msk [vmem:[%s655] sm:$0x3] %vm514, %v654
      %s657 = smul.u32 %s20, 3
      %s658 = sadd.s32 %s657, 2
      %s659 = scalar_lea.vmem %s330, %s658
      %v660 = vld [vmem:[%s659] sm:$0x1]
      %v661 = vunpack.c.l.bf16 %v660
      %v662 = vld [vmem:[#allocation2] sm:$0x3]
      %v663 = vld [vmem:[#allocation3] sm:$0x3]
      %v664 = vpack.c.bf16 %v662, %v662
      %v666 = vsel %vm413, %v664, 0
      %668 = vmatprep.subr.bf16.mxu0 0
      %669 = vmatpush1.bf16.msra.mxu0 %v409
      %670 = vmatprep.subr.bf16.mxu0 0
      %671 = vmatpush1.bf16.msra.mxu0 %v410
      %672 = vmatprep.subr.bf16.mxu0 0
      %673 = vmatpush1.bf16.msra.mxu0 0
      %674 = vmatprep.subr.bf16.mxu0 0
      %675 = vmatpush1.bf16.msra.mxu0 0
      %676 = vmatprep.subr.bf16.mxu0 0
      %677 = vmatpush1.bf16.msra.mxu0 0
      %678 = vmatprep.subr.bf16.mxu0 0
      %679 = vmatpush1.bf16.msra.mxu0 0
      %680 = vmatprep.subr.bf16.mxu0 0
      %681 = vmatpush1.bf16.msra.mxu0 0
      %682 = vmatprep.subr.bf16.mxu0 0
      %683 = vmatpush1.bf16.msra.mxu0 0
      %684 = vmatprep.subr.bf16.mxu0 0
      %685 = vmatpush1.bf16.msra.mxu0 0
      %686 = vmatprep.subr.bf16.mxu0 0
      %687 = vmatpush1.bf16.msra.mxu0 0
      %688 = vmatprep.subr.bf16.mxu0 0
      %689 = vmatpush1.bf16.msra.mxu0 0
      %690 = vmatprep.subr.bf16.mxu0 0
      %691 = vmatpush1.bf16.msra.mxu0 0
      %692 = vmatprep.subr.bf16.mxu0 0
      %693 = vmatpush1.bf16.msra.mxu0 0
      %694 = vmatprep.subr.bf16.mxu0 0
      %695 = vmatpush1.bf16.msra.mxu0 0
      %696 = vmatprep.subr.bf16.mxu0 0
      %697 = vmatpush1.bf16.msra.mxu0 0
      %698 = vmatprep.subr.bf16.mxu0 0
      %699 = vmatpush1.bf16.msra.mxu0 0
      %700 = vmatprep.mubr.bf16.mxu0 0
      %701 = vmatmul.mubr.bf16.gmra.mrb[0].mxu0 %v666
      %v702 = vpop.f32.mrb[0].mxu0
      %v703 = vadd.f32 0.0, %v702
      %v704 = vpop.f32.mrb[0].mxu0
      %v705 = vpop.f32.mrb[0].mxu0
      %v706 = vpop.f32.mrb[0].mxu0
      %707 = vdwg.mxu0
      %v708 = vadd.f32 %v661, %v703
      %v709 = vxor.u32 %v708, 2147483648
      %v710 = vmul.f32 %v709, 1.442695
      %v711 = vpow.pop %v710
      %v712 = vadd.f32 %v711, 1.0
      %v713 = vrcp.pop %v712
      %v714 = vmul.f32 1.0, %v713
      %v715 = vtanh.pop %v708
      %v718 = vunpack.c.l.s4 1983009808
      %v719 = vunpack.c.0.s8 %v718
      %v720 = vlaneseq
      %v721 = vshrl.u32 %v720, 7
      %v722 = vsub.s32 %v719, %v721
      %v723 = vrot.slane %v663, %v722
      %724 = vrot.lane.b32.xlu0 %v723, 32
      %v725 = vpop.permute.xlu0 %724
      %v727 = vmul.f32 %v714, %v725
      %729 = vrot.lane.b32.xlu0 %v715, 64
      %v730 = vpop.permute.xlu0 %729
      %v732 = vmul.f32 %v714, %v730
      %734 = vrot.lane.b32.xlu0 %v732, 32
      %v735 = vpop.permute.xlu0 %734
      %v737 = vadd.f32 %v727, %v735
      %v738 = vtanh.pop %v737
      %740 = vrot.lane.b32.xlu0 %v738, 64
      %v741 = vpop.permute.xlu0 %740
      %v743 = vmul.f32 %v714, %v741
      %s744 = smul.u32 %s658, 2
      %s745 = scalar_lea.vmem %s346, %s744
      %v746 = vld [vmem:[%s745] sm:$0x3]
      %vm747 = vcmp.gt.f32.partialorder %v746, 0.0
      %v748 = vsel %vm747, 1, 0
      %749 = vset.pattern.permute.xlu0 0
      %750 = vperm.xlu0 %749, %v748
      %v751 = vpop.permute.xlu0 %750
      %vm752 = vcmp.eq.s32.totalorder %v751, 1
      %v755 = vunpack.c.l.s4 1983009808
      %v756 = vunpack.c.0.s8 %v755
      %v757 = vlaneseq
      %v758 = vshrl.u32 %v757, 7
      %v759 = vsub.s32 %v756, %v758
      %v760 = vrot.slane %v743, %v759
      %761 = vrot.lane.b32.xlu0 %v760, 32
      %v762 = vpop.permute.xlu0 %761
      %v764 = vsel %vm752, %v762, %v662
      %765 = vst.msk [vmem:[#allocation2] sm:$0x3] %vm514, %v764
      %v768 = vunpack.c.l.s4 1983009808
      %v769 = vunpack.c.0.s8 %v768
      %v770 = vlaneseq
      %v771 = vshrl.u32 %v770, 7
      %v772 = vsub.s32 %v769, %v771
      %v773 = vrot.slane %v737, %v772
      %774 = vrot.lane.b32.xlu0 %v773, 96
      %v775 = vpop.permute.xlu0 %774
      %v777 = vsel %vm752, %v775, %v663
      %778 = vst.msk [vmem:[#allocation3] sm:$0x3] %vm514, %v777
      %v779 = vsel %vm752, %v762, 0.0
      %s780 = scalar_lea.vmem %s371, %s744
      %781 = vst.msk [vmem:[%s780] sm:$0x3] %vm514, %v779
      %s782 = sadd.s32 %s20, 3
      %s783 = scalar_lea.vmem %s330, %s782
      %v784 = vld [vmem:[%s783] sm:$0x1]
      %v785 = vunpack.c.l.bf16 %v784
      %v786 = vld [vmem:[#allocation2] sm:$0x3]
      %v787 = vld [vmem:[#allocation3] sm:$0x3]
      %v788 = vpack.c.bf16 %v786, %v786
      %v790 = vsel %vm413, %v788, 0
      %792 = vmatprep.subr.bf16.mxu0 0
      %793 = vmatpush1.bf16.msra.mxu0 %v409
      %794 = vmatprep.subr.bf16.mxu0 0
      %795 = vmatpush1.bf16.msra.mxu0 %v410
      %796 = vmatprep.subr.bf16.mxu0 0
      %797 = vmatpush1.bf16.msra.mxu0 0
      %798 = vmatprep.subr.bf16.mxu0 0
      %799 = vmatpush1.bf16.msra.mxu0 0
      %800 = vmatprep.subr.bf16.mxu0 0
      %801 = vmatpush1.bf16.msra.mxu0 0
      %802 = vmatprep.subr.bf16.mxu0 0
      %803 = vmatpush1.bf16.msra.mxu0 0
      %804 = vmatprep.subr.bf16.mxu0 0
      %805 = vmatpush1.bf16.msra.mxu0 0
      %806 = vmatprep.subr.bf16.mxu0 0
      %807 = vmatpush1.bf16.msra.mxu0 0
      %808 = vmatprep.subr.bf16.mxu0 0
      %809 = vmatpush1.bf16.msra.mxu0 0
      %810 = vmatprep.subr.bf16.mxu0 0
      %811 = vmatpush1.bf16.msra.mxu0 0
      %812 = vmatprep.subr.bf16.mxu0 0
      %813 = vmatpush1.bf16.msra.mxu0 0
      %814 = vmatprep.subr.bf16.mxu0 0
      %815 = vmatpush1.bf16.msra.mxu0 0
      %816 = vmatprep.subr.bf16.mxu0 0
      %817 = vmatpush1.bf16.msra.mxu0 0
      %818 = vmatprep.subr.bf16.mxu0 0
      %819 = vmatpush1.bf16.msra.mxu0 0
      %820 = vmatprep.subr.bf16.mxu0 0
      %821 = vmatpush1.bf16.msra.mxu0 0
      %822 = vmatprep.subr.bf16.mxu0 0
      %823 = vmatpush1.bf16.msra.mxu0 0
      %824 = vmatprep.mubr.bf16.mxu0 0
      %825 = vmatmul.mubr.bf16.gmra.mrb[0].mxu0 %v790
      %v826 = vpop.f32.mrb[0].mxu0
      %v827 = vadd.f32 0.0, %v826
      %v828 = vpop.f32.mrb[0].mxu0
      %v829 = vpop.f32.mrb[0].mxu0
      %v830 = vpop.f32.mrb[0].mxu0
      %831 = vdwg.mxu0
      %v832 = vadd.f32 %v785, %v827
      %v833 = vxor.u32 %v832, 2147483648
      %v834 = vmul.f32 %v833, 1.442695
      %v835 = vpow.pop %v834
      %v836 = vadd.f32 %v835, 1.0
      %v837 = vrcp.pop %v836
      %v838 = vmul.f32 1.0, %v837
      %v839 = vtanh.pop %v832
      %v842 = vunpack.c.l.s4 1983009808
      %v843 = vunpack.c.0.s8 %v842
      %v844 = vlaneseq
      %v845 = vshrl.u32 %v844, 7
      %v846 = vsub.s32 %v843, %v845
      %v847 = vrot.slane %v787, %v846
      %848 = vrot.lane.b32.xlu0 %v847, 32
      %v849 = vpop.permute.xlu0 %848
      %v851 = vmul.f32 %v838, %v849
      %853 = vrot.lane.b32.xlu0 %v839, 64
      %v854 = vpop.permute.xlu0 %853
      %v856 = vmul.f32 %v838, %v854
      %858 = vrot.lane.b32.xlu0 %v856, 32
      %v859 = vpop.permute.xlu0 %858
      %v861 = vadd.f32 %v851, %v859
      %v862 = vtanh.pop %v861
      %864 = vrot.lane.b32.xlu0 %v862, 64
      %v865 = vpop.permute.xlu0 %864
      %v867 = vmul.f32 %v838, %v865
      %s868 = smul.u32 %s782, 2
      %s869 = scalar_lea.vmem %s346, %s868
      %v870 = vld [vmem:[%s869] sm:$0x3]
      %vm871 = vcmp.gt.f32.partialorder %v870, 0.0
      %v872 = vsel %vm871, 1, 0
      %873 = vset.pattern.permute.xlu0 0
      %874 = vperm.xlu0 %873, %v872
      %v875 = vpop.permute.xlu0 %874
      %vm876 = vcmp.eq.s32.totalorder %v875, 1
      %v879 = vunpack.c.l.s4 1983009808
      %v880 = vunpack.c.0.s8 %v879
      %v881 = vlaneseq
      %v882 = vshrl.u32 %v881, 7
      %v883 = vsub.s32 %v880, %v882
      %v884 = vrot.slane %v867, %v883
      %885 = vrot.lane.b32.xlu0 %v884, 32
      %v886 = vpop.permute.xlu0 %885
      %v888 = vsel %vm876, %v886, %v786
      %889 = vst.msk [vmem:[#allocation2] sm:$0x3] %vm514, %v888
      %v892 = vunpack.c.l.s4 1983009808
      %v893 = vunpack.c.0.s8 %v892
      %v894 = vlaneseq
      %v895 = vshrl.u32 %v894, 7
      %v896 = vsub.s32 %v893, %v895
      %v897 = vrot.slane %v861, %v896
      %898 = vrot.lane.b32.xlu0 %v897, 96
      %v899 = vpop.permute.xlu0 %898
      %v901 = vsel %vm876, %v899, %v787
      %902 = vst.msk [vmem:[#allocation3] sm:$0x3] %vm514, %v901
      %v903 = vsel %vm876, %v886, 0.0
      %s904 = scalar_lea.vmem %s371, %s868
      %905 = vst.msk [vmem:[%s904] sm:$0x3] %vm514, %v903
      %s906 = ssub.s32 4, %s20
      %s907 = scalar_lea.vmem %s330, %s906
      %v908 = vld [vmem:[%s907] sm:$0x1]
      %v909 = vunpack.c.l.bf16 %v908
      %v910 = vld [vmem:[#allocation2] sm:$0x3]
      %v911 = vld [vmem:[#allocation3] sm:$0x3]
      %v912 = vpack.c.bf16 %v910, %v910
      %v914 = vsel %vm413, %v912, 0
      %916 = vmatprep.subr.bf16.mxu0 0
      %917 = vmatpush1.bf16.msra.mxu0 %v409
      %918 = vmatprep.subr.bf16.mxu0 0
      %919 = vmatpush1.bf16.msra.mxu0 %v410
      %920 = vmatprep.subr.bf16.mxu0 0
      %921 = vmatpush1.bf16.msra.mxu0 0
      %922 = vmatprep.subr.bf16.mxu0 0
      %923 = vmatpush1.bf16.msra.mxu0 0
      %924 = vmatprep.subr.bf16.mxu0 0
      %925 = vmatpush1.bf16.msra.mxu0 0
      %926 = vmatprep.subr.bf16.mxu0 0
      %927 = vmatpush1.bf16.msra.mxu0 0
      %928 = vmatprep.subr.bf16.mxu0 0
      %929 = vmatpush1.bf16.msra.mxu0 0
      %930 = vmatprep.subr.bf16.mxu0 0
      %931 = vmatpush1.bf16.msra.mxu0 0
      %932 = vmatprep.subr.bf16.mxu0 0
      %933 = vmatpush1.bf16.msra.mxu0 0
      %934 = vmatprep.subr.bf16.mxu0 0
      %935 = vmatpush1.bf16.msra.mxu0 0
      %936 = vmatprep.subr.bf16.mxu0 0
      %937 = vmatpush1.bf16.msra.mxu0 0
      %938 = vmatprep.subr.bf16.mxu0 0
      %939 = vmatpush1.bf16.msra.mxu0 0
      %940 = vmatprep.subr.bf16.mxu0 0
      %941 = vmatpush1.bf16.msra.mxu0 0
      %942 = vmatprep.subr.bf16.mxu0 0
      %943 = vmatpush1.bf16.msra.mxu0 0
      %944 = vmatprep.subr.bf16.mxu0 0
      %945 = vmatpush1.bf16.msra.mxu0 0
      %946 = vmatprep.subr.bf16.mxu0 0
      %947 = vmatpush1.bf16.msra.mxu0 0
      %948 = vmatprep.mubr.bf16.mxu0 0
      %949 = vmatmul.mubr.bf16.gmra.mrb[0].mxu0 %v914
      %v950 = vpop.f32.mrb[0].mxu0
      %v951 = vadd.f32 0.0, %v950
      %v952 = vpop.f32.mrb[0].mxu0
      %v953 = vpop.f32.mrb[0].mxu0
      %v954 = vpop.f32.mrb[0].mxu0
      %955 = vdwg.mxu0
      %v956 = vadd.f32 %v909, %v951
      %v957 = vxor.u32 %v956, 2147483648
      %v958 = vmul.f32 %v957, 1.442695
      %v959 = vpow.pop %v958
      %v960 = vadd.f32 %v959, 1.0
      %v961 = vrcp.pop %v960
      %v962 = vmul.f32 1.0, %v961
      %v963 = vtanh.pop %v956
      %v966 = vunpack.c.l.s4 1983009808
      %v967 = vunpack.c.0.s8 %v966
      %v968 = vlaneseq
      %v969 = vshrl.u32 %v968, 7
      %v970 = vsub.s32 %v967, %v969
      %v971 = vrot.slane %v911, %v970
      %972 = vrot.lane.b32.xlu0 %v971, 32
      %v973 = vpop.permute.xlu0 %972
      %v975 = vmul.f32 %v962, %v973
      %977 = vrot.lane.b32.xlu0 %v963, 64
      %v978 = vpop.permute.xlu0 %977
      %v980 = vmul.f32 %v962, %v978
      %982 = vrot.lane.b32.xlu0 %v980, 32
      %v983 = vpop.permute.xlu0 %982
      %v985 = vadd.f32 %v975, %v983
      %v986 = vtanh.pop %v985
      %988 = vrot.lane.b32.xlu0 %v986, 64
      %v989 = vpop.permute.xlu0 %988
      %v991 = vmul.f32 %v962, %v989
      %s992 = smul.u32 %s906, 2
      %s993 = scalar_lea.vmem %s346, %s992
      %v994 = vld [vmem:[%s993] sm:$0x3]
      %vm995 = vcmp.gt.f32.partialorder %v994, 0.0
      %v996 = vsel %vm995, 1, 0
      %997 = vset.pattern.permute.xlu0 0
      %998 = vperm.xlu0 %997, %v996
      %v999 = vpop.permute.xlu0 %998
      %vm1000 = vcmp.eq.s32.totalorder %v999, 1
      %v1003 = vunpack.c.l.s4 1983009808
      %v1004 = vunpack.c.0.s8 %v1003
      %v1005 = vlaneseq
      %v1006 = vshrl.u32 %v1005, 7
      %v1007 = vsub.s32 %v1004, %v1006
      %v1008 = vrot.slane %v991, %v1007
      %1009 = vrot.lane.b32.xlu0 %v1008, 32
      %v1010 = vpop.permute.xlu0 %1009
      %v1012 = vsel %vm1000, %v1010, %v910
      %1013 = vst.msk [vmem:[#allocation2] sm:$0x3] %vm514, %v1012
      %v1016 = vunpack.c.l.s4 1983009808
      %v1017 = vunpack.c.0.s8 %v1016
      %v1018 = vlaneseq
      %v1019 = vshrl.u32 %v1018, 7
      %v1020 = vsub.s32 %v1017, %v1019
      %v1021 = vrot.slane %v985, %v1020
      %1022 = vrot.lane.b32.xlu0 %v1021, 96
      %v1023 = vpop.permute.xlu0 %1022
      %v1025 = vsel %vm1000, %v1023, %v911
      %1026 = vst.msk [vmem:[#allocation3] sm:$0x3] %vm514, %v1025
      %v1027 = vsel %vm1000, %v1010, 0.0
      %s1028 = scalar_lea.vmem %s371, %s992
      %1029 = vst.msk [vmem:[%s1028] sm:$0x3] %vm514, %v1027
      %s1030 = smul.u32 %s20, 4294967293
      %s1031 = sadd.s32 %s1030, 5
      %s1032 = scalar_lea.vmem %s330, %s1031
      %v1033 = vld [vmem:[%s1032] sm:$0x1]
      %v1034 = vunpack.c.l.bf16 %v1033
      %v1035 = vld [vmem:[#allocation2] sm:$0x3]
      %v1036 = vld [vmem:[#allocation3] sm:$0x3]
      %v1037 = vpack.c.bf16 %v1035, %v1035
      %v1039 = vsel %vm413, %v1037, 0
      %1041 = vmatprep.subr.bf16.mxu0 0
      %1042 = vmatpush1.bf16.msra.mxu0 %v409
      %1043 = vmatprep.subr.bf16.mxu0 0
      %1044 = vmatpush1.bf16.msra.mxu0 %v410
      %1045 = vmatprep.subr.bf16.mxu0 0
      %1046 = vmatpush1.bf16.msra.mxu0 0
      %1047 = vmatprep.subr.bf16.mxu0 0
      %1048 = vmatpush1.bf16.msra.mxu0 0
      %1049 = vmatprep.subr.bf16.mxu0 0
      %1050 = vmatpush1.bf16.msra.mxu0 0
      %1051 = vmatprep.subr.bf16.mxu0 0
      %1052 = vmatpush1.bf16.msra.mxu0 0
      %1053 = vmatprep.subr.bf16.mxu0 0
      %1054 = vmatpush1.bf16.msra.mxu0 0
      %1055 = vmatprep.subr.bf16.mxu0 0
      %1056 = vmatpush1.bf16.msra.mxu0 0
      %1057 = vmatprep.subr.bf16.mxu0 0
      %1058 = vmatpush1.bf16.msra.mxu0 0
      %1059 = vmatprep.subr.bf16.mxu0 0
      %1060 = vmatpush1.bf16.msra.mxu0 0
      %1061 = vmatprep.subr.bf16.mxu0 0
      %1062 = vmatpush1.bf16.msra.mxu0 0
      %1063 = vmatprep.subr.bf16.mxu0 0
      %1064 = vmatpush1.bf16.msra.mxu0 0
      %1065 = vmatprep.subr.bf16.mxu0 0
      %1066 = vmatpush1.bf16.msra.mxu0 0
      %1067 = vmatprep.subr.bf16.mxu0 0
      %1068 = vmatpush1.bf16.msra.mxu0 0
      %1069 = vmatprep.subr.bf16.mxu0 0
      %1070 = vmatpush1.bf16.msra.mxu0 0
      %1071 = vmatprep.subr.bf16.mxu0 0
      %1072 = vmatpush1.bf16.msra.mxu0 0
      %1073 = vmatprep.mubr.bf16.mxu0 0
      %1074 = vmatmul.mubr.bf16.gmra.mrb[0].mxu0 %v1039
      %v1075 = vpop.f32.mrb[0].mxu0
      %v1076 = vadd.f32 0.0, %v1075
      %v1077 = vpop.f32.mrb[0].mxu0
      %v1078 = vpop.f32.mrb[0].mxu0
      %v1079 = vpop.f32.mrb[0].mxu0
      %1080 = vdwg.mxu0
      %v1081 = vadd.f32 %v1034, %v1076
      %v1082 = vxor.u32 %v1081, 2147483648
      %v1083 = vmul.f32 %v1082, 1.442695
      %v1084 = vpow.pop %v1083
      %v1085 = vadd.f32 %v1084, 1.0
      %v1086 = vrcp.pop %v1085
      %v1087 = vmul.f32 1.0, %v1086
      %v1088 = vtanh.pop %v1081
      %v1091 = vunpack.c.l.s4 1983009808
      %v1092 = vunpack.c.0.s8 %v1091
      %v1093 = vlaneseq
      %v1094 = vshrl.u32 %v1093, 7
      %v1095 = vsub.s32 %v1092, %v1094
      %v1096 = vrot.slane %v1036, %v1095
      %1097 = vrot.lane.b32.xlu0 %v1096, 32
      %v1098 = vpop.permute.xlu0 %1097
      %v1100 = vmul.f32 %v1087, %v1098
      %1102 = vrot.lane.b32.xlu0 %v1088, 64
      %v1103 = vpop.permute.xlu0 %1102
      %v1105 = vmul.f32 %v1087, %v1103
      %1107 = vrot.lane.b32.xlu0 %v1105, 32
      %v1108 = vpop.permute.xlu0 %1107
      %v1110 = vadd.f32 %v1100, %v1108
      %v1111 = vtanh.pop %v1110
      %1113 = vrot.lane.b32.xlu0 %v1111, 64
      %v1114 = vpop.permute.xlu0 %1113
      %v1116 = vmul.f32 %v1087, %v1114
      %s1117 = smul.u32 %s1031, 2
      %s1118 = scalar_lea.vmem %s346, %s1117
      %v1119 = vld [vmem:[%s1118] sm:$0x3]
      %vm1120 = vcmp.gt.f32.partialorder %v1119, 0.0
      %v1121 = vsel %vm1120, 1, 0
      %1122 = vset.pattern.permute.xlu0 0
      %1123 = vperm.xlu0 %1122, %v1121
      %v1124 = vpop.permute.xlu0 %1123
      %vm1125 = vcmp.eq.s32.totalorder %v1124, 1
      %v1128 = vunpack.c.l.s4 1983009808
      %v1129 = vunpack.c.0.s8 %v1128
      %v1130 = vlaneseq
      %v1131 = vshrl.u32 %v1130, 7
      %v1132 = vsub.s32 %v1129, %v1131
      %v1133 = vrot.slane %v1116, %v1132
      %1134 = vrot.lane.b32.xlu0 %v1133, 32
      %v1135 = vpop.permute.xlu0 %1134
      %v1137 = vsel %vm1125, %v1135, %v1035
      %1138 = vst.msk [vmem:[#allocation2] sm:$0x3] %vm514, %v1137
      %v1141 = vunpack.c.l.s4 1983009808
      %v1142 = vunpack.c.0.s8 %v1141
      %v1143 = vlaneseq
      %v1144 = vshrl.u32 %v1143, 7
      %v1145 = vsub.s32 %v1142, %v1144
      %v1146 = vrot.slane %v1110, %v1145
      %1147 = vrot.lane.b32.xlu0 %v1146, 96
      %v1148 = vpop.permute.xlu0 %1147
      %v1150 = vsel %vm1125, %v1148, %v1036
      %1151 = vst.msk [vmem:[#allocation3] sm:$0x3] %vm514, %v1150
      %v1152 = vsel %vm1125, %v1135, 0.0
      %s1153 = scalar_lea.vmem %s371, %s1117
      %1154 = vst.msk [vmem:[%s1153] sm:$0x3] %vm514, %v1152
      %s1155 = smul.u32 %s20, 4294967291
      %s1156 = sadd.s32 %s1155, 6
      %s1157 = scalar_lea.vmem %s330, %s1156
      %v1158 = vld [vmem:[%s1157] sm:$0x1]
      %v1159 = vunpack.c.l.bf16 %v1158
      %v1160 = vld [vmem:[#allocation2] sm:$0x3]
      %v1161 = vld [vmem:[#allocation3] sm:$0x3]
      %v1162 = vpack.c.bf16 %v1160, %v1160
      %v1164 = vsel %vm413, %v1162, 0
      %1166 = vmatprep.subr.bf16.mxu0 0
      %1167 = vmatpush1.bf16.msra.mxu0 %v409
      %1168 = vmatprep.subr.bf16.mxu0 0
      %1169 = vmatpush1.bf16.msra.mxu0 %v410
      %1170 = vmatprep.subr.bf16.mxu0 0
      %1171 = vmatpush1.bf16.msra.mxu0 0
      %1172 = vmatprep.subr.bf16.mxu0 0
      %1173 = vmatpush1.bf16.msra.mxu0 0
      %1174 = vmatprep.subr.bf16.mxu0 0
      %1175 = vmatpush1.bf16.msra.mxu0 0
      %1176 = vmatprep.subr.bf16.mxu0 0
      %1177 = vmatpush1.bf16.msra.mxu0 0
      %1178 = vmatprep.subr.bf16.mxu0 0
      %1179 = vmatpush1.bf16.msra.mxu0 0
      %1180 = vmatprep.subr.bf16.mxu0 0
      %1181 = vmatpush1.bf16.msra.mxu0 0
      %1182 = vmatprep.subr.bf16.mxu0 0
      %1183 = vmatpush1.bf16.msra.mxu0 0
      %1184 = vmatprep.subr.bf16.mxu0 0
      %1185 = vmatpush1.bf16.msra.mxu0 0
      %1186 = vmatprep.subr.bf16.mxu0 0
      %1187 = vmatpush1.bf16.msra.mxu0 0
      %1188 = vmatprep.subr.bf16.mxu0 0
      %1189 = vmatpush1.bf16.msra.mxu0 0
      %1190 = vmatprep.subr.bf16.mxu0 0
      %1191 = vmatpush1.bf16.msra.mxu0 0
      %1192 = vmatprep.subr.bf16.mxu0 0
      %1193 = vmatpush1.bf16.msra.mxu0 0
      %1194 = vmatprep.subr.bf16.mxu0 0
      %1195 = vmatpush1.bf16.msra.mxu0 0
      %1196 = vmatprep.subr.bf16.mxu0 0
      %1197 = vmatpush1.bf16.msra.mxu0 0
      %1198 = vmatprep.mubr.bf16.mxu0 0
      %1199 = vmatmul.mubr.bf16.gmra.mrb[0].mxu0 %v1164
      %v1200 = vpop.f32.mrb[0].mxu0
      %v1201 = vadd.f32 0.0, %v1200
      %v1202 = vpop.f32.mrb[0].mxu0
      %v1203 = vpop.f32.mrb[0].mxu0
      %v1204 = vpop.f32.mrb[0].mxu0
      %1205 = vdwg.mxu0
      %v1206 = vadd.f32 %v1159, %v1201
      %v1207 = vxor.u32 %v1206, 2147483648
      %v1208 = vmul.f32 %v1207, 1.442695
      %v1209 = vpow.pop %v1208
      %v1210 = vadd.f32 %v1209, 1.0
      %v1211 = vrcp.pop %v1210
      %v1212 = vmul.f32 1.0, %v1211
      %v1213 = vtanh.pop %v1206
      %v1216 = vunpack.c.l.s4 1983009808
      %v1217 = vunpack.c.0.s8 %v1216
      %v1218 = vlaneseq
      %v1219 = vshrl.u32 %v1218, 7
      %v1220 = vsub.s32 %v1217, %v1219
      %v1221 = vrot.slane %v1161, %v1220
      %1222 = vrot.lane.b32.xlu0 %v1221, 32
      %v1223 = vpop.permute.xlu0 %1222
      %v1225 = vmul.f32 %v1212, %v1223
      %1227 = vrot.lane.b32.xlu0 %v1213, 64
      %v1228 = vpop.permute.xlu0 %1227
      %v1230 = vmul.f32 %v1212, %v1228
      %1232 = vrot.lane.b32.xlu0 %v1230, 32
      %v1233 = vpop.permute.xlu0 %1232
      %v1235 = vadd.f32 %v1225, %v1233
      %v1236 = vtanh.pop %v1235
      %1238 = vrot.lane.b32.xlu0 %v1236, 64
      %v1239 = vpop.permute.xlu0 %1238
      %v1241 = vmul.f32 %v1212, %v1239
      %s1242 = smul.u32 %s1156, 2
      %s1243 = scalar_lea.vmem %s346, %s1242
      %v1244 = vld [vmem:[%s1243] sm:$0x3]
      %vm1245 = vcmp.gt.f32.partialorder %v1244, 0.0
      %v1246 = vsel %vm1245, 1, 0
      %1247 = vset.pattern.permute.xlu0 0
      %1248 = vperm.xlu0 %1247, %v1246
      %v1249 = vpop.permute.xlu0 %1248
      %vm1250 = vcmp.eq.s32.totalorder %v1249, 1
      %v1253 = vunpack.c.l.s4 1983009808
      %v1254 = vunpack.c.0.s8 %v1253
      %v1255 = vlaneseq
      %v1256 = vshrl.u32 %v1255, 7
      %v1257 = vsub.s32 %v1254, %v1256
      %v1258 = vrot.slane %v1241, %v1257
      %1259 = vrot.lane.b32.xlu0 %v1258, 32
      %v1260 = vpop.permute.xlu0 %1259
      %v1262 = vsel %vm1250, %v1260, %v1160
      %1263 = vst.msk [vmem:[#allocation2] sm:$0x3] %vm514, %v1262
      %v1266 = vunpack.c.l.s4 1983009808
      %v1267 = vunpack.c.0.s8 %v1266
      %v1268 = vlaneseq
      %v1269 = vshrl.u32 %v1268, 7
      %v1270 = vsub.s32 %v1267, %v1269
      %v1271 = vrot.slane %v1235, %v1270
      %1272 = vrot.lane.b32.xlu0 %v1271, 96
      %v1273 = vpop.permute.xlu0 %1272
      %v1275 = vsel %vm1250, %v1273, %v1161
      %1276 = vst.msk [vmem:[#allocation3] sm:$0x3] %vm514, %v1275
      %v1277 = vsel %vm1250, %v1260, 0.0
      %s1278 = scalar_lea.vmem %s371, %s1242
      %1279 = vst.msk [vmem:[%s1278] sm:$0x3] %vm514, %v1277
      %s1280 = smul.u32 %s20, 4294967289
      %s1281 = sadd.s32 %s1280, 7
      %s1282 = scalar_lea.vmem %s330, %s1281
      %v1283 = vld [vmem:[%s1282] sm:$0x1]
      %v1284 = vunpack.c.l.bf16 %v1283
      %v1285 = vld [vmem:[#allocation2] sm:$0x3]
      %v1286 = vld [vmem:[#allocation3] sm:$0x3]
      %v1287 = vpack.c.bf16 %v1285, %v1285
      %v1289 = vsel %vm413, %v1287, 0
      %1291 = vmatprep.subr.bf16.mxu0 0
      %1292 = vmatpush1.bf16.msra.mxu0 %v409
      %1293 = vmatprep.subr.bf16.mxu0 0
      %1294 = vmatpush1.bf16.msra.mxu0 %v410
      %1295 = vmatprep.subr.bf16.mxu0 0
      %1296 = vmatpush1.bf16.msra.mxu0 0
      %1297 = vmatprep.subr.bf16.mxu0 0
      %1298 = vmatpush1.bf16.msra.mxu0 0
      %1299 = vmatprep.subr.bf16.mxu0 0
      %1300 = vmatpush1.bf16.msra.mxu0 0
      %1301 = vmatprep.subr.bf16.mxu0 0
      %1302 = vmatpush1.bf16.msra.mxu0 0
      %1303 = vmatprep.subr.bf16.mxu0 0
      %1304 = vmatpush1.bf16.msra.mxu0 0
      %1305 = vmatprep.subr.bf16.mxu0 0
      %1306 = vmatpush1.bf16.msra.mxu0 0
      %1307 = vmatprep.subr.bf16.mxu0 0
      %1308 = vmatpush1.bf16.msra.mxu0 0
      %1309 = vmatprep.subr.bf16.mxu0 0
      %1310 = vmatpush1.bf16.msra.mxu0 0
      %1311 = vmatprep.subr.bf16.mxu0 0
      %1312 = vmatpush1.bf16.msra.mxu0 0
      %1313 = vmatprep.subr.bf16.mxu0 0
      %1314 = vmatpush1.bf16.msra.mxu0 0
      %1315 = vmatprep.subr.bf16.mxu0 0
      %1316 = vmatpush1.bf16.msra.mxu0 0
      %1317 = vmatprep.subr.bf16.mxu0 0
      %1318 = vmatpush1.bf16.msra.mxu0 0
      %1319 = vmatprep.subr.bf16.mxu0 0
      %1320 = vmatpush1.bf16.msra.mxu0 0
      %1321 = vmatprep.subr.bf16.mxu0 0
      %1322 = vmatpush1.bf16.msra.mxu0 0
      %1323 = vmatprep.mubr.bf16.mxu0 0
      %1324 = vmatmul.mubr.bf16.gmra.mrb[0].mxu0 %v1289
      %v1325 = vpop.f32.mrb[0].mxu0
      %v1326 = vadd.f32 0.0, %v1325
      %v1327 = vpop.f32.mrb[0].mxu0
      %v1328 = vpop.f32.mrb[0].mxu0
      %v1329 = vpop.f32.mrb[0].mxu0
      %1330 = vdwg.mxu0
      %v1331 = vadd.f32 %v1284, %v1326
      %v1332 = vxor.u32 %v1331, 2147483648
      %v1333 = vmul.f32 %v1332, 1.442695
      %v1334 = vpow.pop %v1333
      %v1335 = vadd.f32 %v1334, 1.0
      %v1336 = vrcp.pop %v1335
      %v1337 = vmul.f32 1.0, %v1336
      %v1338 = vtanh.pop %v1331
      %v1341 = vunpack.c.l.s4 1983009808
      %v1342 = vunpack.c.0.s8 %v1341
      %v1343 = vlaneseq
      %v1344 = vshrl.u32 %v1343, 7
      %v1345 = vsub.s32 %v1342, %v1344
      %v1346 = vrot.slane %v1286, %v1345
      %1347 = vrot.lane.b32.xlu0 %v1346, 32
      %v1348 = vpop.permute.xlu0 %1347
      %v1350 = vmul.f32 %v1337, %v1348
      %1352 = vrot.lane.b32.xlu0 %v1338, 64
      %v1353 = vpop.permute.xlu0 %1352
      %v1355 = vmul.f32 %v1337, %v1353
      %1357 = vrot.lane.b32.xlu0 %v1355, 32
      %v1358 = vpop.permute.xlu0 %1357
      %v1360 = vadd.f32 %v1350, %v1358
      %v1361 = vtanh.pop %v1360
      %1363 = vrot.lane.b32.xlu0 %v1361, 64
      %v1364 = vpop.permute.xlu0 %1363
      %v1366 = vmul.f32 %v1337, %v1364
      %s1367 = smul.u32 %s1281, 2
      %s1368 = scalar_lea.vmem %s346, %s1367
      %v1369 = vld [vmem:[%s1368] sm:$0x3]
      %vm1370 = vcmp.gt.f32.partialorder %v1369, 0.0
      %v1371 = vsel %vm1370, 1, 0
      %1372 = vset.pattern.permute.xlu0 0
      %1373 = vperm.xlu0 %1372, %v1371
      %v1374 = vpop.permute.xlu0 %1373
      %vm1375 = vcmp.eq.s32.totalorder %v1374, 1
      %v1378 = vunpack.c.l.s4 1983009808
      %v1379 = vunpack.c.0.s8 %v1378
      %v1380 = vlaneseq
      %v1381 = vshrl.u32 %v1380, 7
      %v1382 = vsub.s32 %v1379, %v1381
      %v1383 = vrot.slane %v1366, %v1382
      %1384 = vrot.lane.b32.xlu0 %v1383, 32
      %v1385 = vpop.permute.xlu0 %1384
      %v1387 = vsel %vm1375, %v1385, %v1285
      %1388 = vst.msk [vmem:[#allocation2] sm:$0x3] %vm514, %v1387
      %v1391 = vunpack.c.l.s4 1983009808
      %v1392 = vunpack.c.0.s8 %v1391
      %v1393 = vlaneseq
      %v1394 = vshrl.u32 %v1393, 7
      %v1395 = vsub.s32 %v1392, %v1394
      %v1396 = vrot.slane %v1360, %v1395
      %1397 = vrot.lane.b32.xlu0 %v1396, 96
      %v1398 = vpop.permute.xlu0 %1397
      %v1400 = vsel %vm1375, %v1398, %v1286
      %1401 = vst.msk [vmem:[#allocation3] sm:$0x3] %vm514, %v1400
      %v1402 = vsel %vm1375, %v1385, 0.0
      %s1403 = scalar_lea.vmem %s371, %s1367
      %1404 = vst.msk [vmem:[%s1403] sm:$0x3] %vm514, %v1402
      // Predicated region
      $region37: #{my_lstm_forward.5} parent=31 // pred_check
        %p1405 = pneg %p383
      $region38: #{my_lstm_forward.5} parent=31 // pred_check_branch
        %1407 = sbr.rel (%p1405) target = $region40
      $region39: #{my_lstm_forward.5} parent=31 // pred_region
        %v1408 = vld [vmem:[#allocation2] sm:$0x3]
        %1409 = vst.msk [vmem:[%s381] sm:$0x3] %vm514, %v1408
      $region40: #{my_lstm_forward.5} parent=31 // pred_fallthru
        _
      %s1410 = ssub.s32 1, %s20
      %s1411 = smul.u32 %s21, %s1410
      %s1412 = ssub.s32 0, %s21
      %s1413 = smul.u32 %s1412, %s20
      %s1414 = sadd.s32 %s1411, %s1413
      %s1415 = smul.u32 8, %s1414
      %p1416 = scmp.lt.s32.totalorder %s20, 1
      %s1417 = scalar_select %p1416, %s20, 1
      %p1418 = scmp.lt.s32.totalorder %s1415, 7
      %s1419 = scalar_select %p1418, %s1415, 7
      %s1420 = smul.addr %s1417, 8
      %s1421 = sadd.s32 %s1419, %s1420
      %s1422 = smul.addr %s1421, 2
      %s1423 = scalar_lea.vmem %s3, %s1422
      %p1424 = scmp.lt.s32.totalorder %s20, 1
      %s1425 = scalar_select %p1424, %s20, 1
      %s1426 = smul.addr %s1425, 2
      %s1427 = scalar_lea.vmem %s4, %s1426
      // Predicated region
      $region41: #{my_lstm_forward.5} parent=31 // pred_check
        %p1428 = pneg %p158
      $region42: #{my_lstm_forward.5} parent=31 // pred_check_branch
        %1430 = sbr.rel (%p1428) target = $region44
      $region43: #{my_lstm_forward.5} parent=31 // pred_region
        %s1431 = ssub.s32 1, %s20
        %s1432 = smul.u32 %s21, %s1431
        %s1433 = ssub.s32 0, %s21
        %s1434 = smul.u32 %s1433, %s20
        %s1435 = sadd.s32 %s1432, %s1434
        %s1436 = smul.u32 8, %s1435
      $region44: #{my_lstm_forward.5} parent=31 // pred_fallthru
        _
      // Predicated region
      $region45: #{my_lstm_forward.5} parent=31 // pred_check
        %p1437 = pneg %p184
      $region46: #{my_lstm_forward.5} parent=31 // pred_check_branch
        %1439 = sbr.rel (%p1437) target = $region48
      $region47: #{my_lstm_forward.5} parent=31 // pred_region
        _
      $region48: #{my_lstm_forward.5} parent=31 // pred_fallthru
        _
    $region32: #{my_lstm_forward.5} parent=5 // pred_fallthru
      _
    %p1440 = scmp.le.s32.totalorder 2, %s11
    // Predicated region
    $region49: #{my_lstm_forward.5} parent=5 // pred_check
      %p1441 = pneg %p1440
    $region50: #{my_lstm_forward.5} parent=5 // pred_check_branch
      %1443 = sbr.rel (%p1441) target = $region52
    $region51: #{my_lstm_forward.5} parent=5 // pred_region
      %s1444 = ssub.s32 %s11, 2
      // Predicated region
      $region53: #{my_lstm_forward.5} parent=51 // pred_check
        %p1445 = pneg %p164
      $region54: #{my_lstm_forward.5} parent=51 // pred_check_branch
        %1447 = sbr.rel (%p1445) target = $region56
      $region55: #{my_lstm_forward.5} parent=51 // pred_region
        %s1448 = ssub.s32 1, %s22
        %s1449 = smul.u32 %s23, %s1448
        %s1450 = ssub.s32 0, %s23
        %s1451 = smul.u32 %s1450, %s22
        %s1452 = sadd.s32 %s1449, %s1451
        %s1453 = smul.u32 8, %s1452
        %p1454 = scmp.lt.s32.totalorder %s22, 1
        %s1455 = scalar_select %p1454, %s22, 1
        %p1456 = scmp.lt.s32.totalorder %s1453, 7
        %s1457 = scalar_select %p1456, %s1453, 7
        %s1458 = smul.addr %s1455, 8
        %s1459 = sadd.s32 %s1457, %s1458
        %s1460 = smul.addr %s1459, 2
        %s1461 = scalar_lea.vmem %s3, %s1460
      $region56: #{my_lstm_forward.5} parent=51 // pred_fallthru
        _
      // Predicated region
      $region57: #{my_lstm_forward.5} parent=51 // pred_check
        %p1462 = pneg %p190
      $region58: #{my_lstm_forward.5} parent=51 // pred_check_branch
        %1464 = sbr.rel (%p1462) target = $region60
      $region59: #{my_lstm_forward.5} parent=51 // pred_region
        %p1465 = scmp.lt.s32.totalorder %s22, 1
        %s1466 = scalar_select %p1465, %s22, 1
        %s1467 = smul.addr %s1466, 2
        %s1468 = scalar_lea.vmem %s4, %s1467
      $region60: #{my_lstm_forward.5} parent=51 // pred_fallthru
        _
    $region52: #{my_lstm_forward.5} parent=5 // pred_fallthru
      _
  $region6: #{my_lstm_forward.5} parent=0 // loop_footer
    %s15 = sadd.s32 1, %s11
  $region7: #{my_lstm_forward.5} parent=0 // loop_footer_branch
    %10 = sbr.rel target = $region3
  $region8: #{my_lstm_forward.5} parent=0 // loop_exit
    _

</llo_original>
